<compile_context>
chip_gen: v5e
topology: v5e:2x2
jax: 0.10.0
libtpu: 0.0.40
codegen_flags: <defaults>
</compile_context>

<pallas_src>
import functools

import jax
import jax.numpy as jnp
from jax.experimental import pallas as pl
from jax.experimental.pallas import tpu as pltpu


def _round_up(a, b):
    return (a + b - 1) // b * b


def _pick_tile_i(I, want):
    for cand in (want, 768, 512, 384, 256, 128):
        if 0 < cand <= I and I % cand == 0 and cand % 128 == 0:
            return cand
    return I  # fall back to the full intermediate dim


def _swiglu_mlp_kernel(x_ref, wgu_ref, wd_ref, o_ref):
    """Grid = (M tiles [parallel], I tiles [arbitrary reduction, innermost])."""
    k = pl.program_id(1)

    @pl.when(k == 0)
    def _():
        o_ref[...] = jnp.zeros_like(o_ref)

    # One fused (tile_m, H) @ (H, 2*tile_i) bf16 matmul for gate+up (f32 acc).
    xb = x_ref[...].astype(jnp.bfloat16)
    gu = jnp.dot(xb, wgu_ref[...], preferred_element_type=jnp.float32)
    ti = gu.shape[1] // 2
    g = gu[:, :ti]
    u = gu[:, ti:]
    h = (g * jax.nn.sigmoid(g)) * u                       # SiLU(gate) * up, f32

    # Accumulate the down-projection contribution directly into the resident
    # f32 output block (output block index is constant over the k axis).
    o_ref[...] += jnp.dot(h.astype(jnp.bfloat16), wd_ref[...],
                          preferred_element_type=jnp.float32)


def pack_mlp_weights(wg, wu, wd, *, tile_i=768, weight_dtype=jnp.bfloat16):
    """Pack gate/up weights tile-wise into one (H, 2*I) matrix; cast to bf16.

    Per intermediate tile k, columns [2k*ti : 2k*ti + ti] are gate weights and
    [2k*ti + ti : (2k+2)*ti] are up weights. Do this once outside the hot loop.
    """
    H, I = wg.shape
    tile_i = _pick_tile_i(I, tile_i)
    nt = I // tile_i
    wgu = jnp.concatenate(
        [wg.reshape(H, nt, tile_i), wu.reshape(H, nt, tile_i)], axis=2
    ).reshape(H, 2 * I).astype(weight_dtype)
    return wgu, wd.astype(weight_dtype), tile_i


@functools.partial(jax.jit, static_argnames=("tile_m", "tile_i"))
def smollm2_mlp_packed(x, wgu, wd, *, tile_m=256, tile_i=768):
    """x: (B, S, H); wgu: (H, 2*I) packed bf16; wd: (I, H) bf16. Returns (B, S, H)."""
    B, S, H = x.shape
    I = wd.shape[0]
    assert wgu.shape == (H, 2 * I)
    assert I % tile_i == 0 and (2 * tile_i) % 128 == 0

    M = B * S
    tile_m = min(tile_m, _round_up(M, 8))
    M_pad = _round_up(M, tile_m)

    x2d = x.reshape(M, H)
    if M_pad != M:
        x2d = jnp.pad(x2d, ((0, M_pad - M), (0, 0)))

    w_itemsize = jnp.dtype(wgu.dtype).itemsize
    x_itemsize = jnp.dtype(x.dtype).itemsize

    # VMEM budget: double-buffered x / weight tiles + resident f32 output tile.
    vmem_bytes = int(1.25 * (
        2 * tile_m * H * x_itemsize           # x tiles
        + 2 * H * (2 * tile_i) * w_itemsize   # fused gate+up weight tiles
        + 2 * tile_i * H * w_itemsize         # down weight tiles
        + 2 * tile_m * H * 4                  # f32 output tile
    )) + (4 << 20)

    cost = pl.CostEstimate(
        flops=6 * M_pad * H * I,
        transcendentals=M_pad * I,
        bytes_accessed=(3 * I * H * w_itemsize
                        + M_pad * H * x_itemsize
                        + M_pad * H * 4),
    )

    out2d = pl.pallas_call(
        _swiglu_mlp_kernel,
        out_shape=jax.ShapeDtypeStruct((M_pad, H), jnp.float32),
        grid_spec=pltpu.PrefetchScalarGridSpec(
            num_scalar_prefetch=0,
            grid=(M_pad // tile_m, I // tile_i),
            in_specs=[
                pl.BlockSpec((tile_m, H), lambda m, k: (m, 0)),      # x rows (resident over k)
                pl.BlockSpec((H, 2 * tile_i), lambda m, k: (0, k)),  # fused gate+up tile
                pl.BlockSpec((tile_i, H), lambda m, k: (k, 0)),      # down tile
            ],
            out_specs=pl.BlockSpec((tile_m, H), lambda m, k: (m, 0)),
        ),
        compiler_params=pltpu.CompilerParams(
            dimension_semantics=("parallel", "arbitrary"),
            vmem_limit_bytes=vmem_bytes,
        ),
        cost_estimate=cost,
    )(x2d, wgu, wd)

    return out2d[:M].astype(x.dtype).reshape(B, S, H)


def smollm2_mlp(x, wg, wu, wd, *, tile_m=256, tile_i=768,
                weight_dtype=jnp.bfloat16):
    """Convenience wrapper taking unpacked (H,I)/(H,I)/(I,H) weights."""
    wgu, wdp, tile_i = pack_mlp_weights(wg, wu, wd, tile_i=tile_i,
                                        weight_dtype=weight_dtype)
    return smollm2_mlp_packed(x, wgu, wdp, tile_m=tile_m, tile_i=tile_i)


def _reference_mlp_f32(x2d, wg, wu, wd):
    g = x2d @ wg
    u = x2d @ wu
    return (jax.nn.silu(g) * u) @ wd


def _reference_mlp_bf16(x2d, wg, wu, wd):
    # Mirrors the kernel's numerics: bf16 operands, f32 MXU accumulation.
    xb = x2d.astype(jnp.bfloat16)
    g = jnp.dot(xb, wg.astype(jnp.bfloat16), preferred_element_type=jnp.float32)
    u = jnp.dot(xb, wu.astype(jnp.bfloat16), preferred_element_type=jnp.float32)
    h = (g * jax.nn.sigmoid(g)) * u
    return jnp.dot(h.astype(jnp.bfloat16), wd.astype(jnp.bfloat16),
                   preferred_element_type=jnp.float32)


if __name__ == "__main__":
    # SmolLM2 config dims (hidden=576, intermediate=1536), small batch/seq.
    hidden_size = 576
    intermediate_size = 1536
    batch, seq = 2, 8

    key = jax.random.PRNGKey(0)
    kx, kg, ku, kd = jax.random.split(key, 4)

    x = jax.random.normal(kx, (batch, seq, hidden_size), dtype=jnp.float32)
    # Torch Linear weights are (out, in); we store the transposed matmul-ready form.
    wg = 0.02 * jax.random.normal(kg, (hidden_size, intermediate_size), jnp.float32)
    wu = 0.02 * jax.random.normal(ku, (hidden_size, intermediate_size), jnp.float32)
    wd = 0.02 * jax.random.normal(kd, (intermediate_size, hidden_size), jnp.float32)

    out = smollm2_mlp(x, wg, wu, wd)
    jax.block_until_ready(out)
    assert out.shape == (batch, seq, hidden_size)

    x2d = x.reshape(-1, hidden_size)
    ref_bf16 = _reference_mlp_bf16(x2d, wg, wu, wd).reshape(out.shape)
    ref_f32 = _reference_mlp_f32(x2d, wg, wu, wd).reshape(out.shape)

    # Tight check against the bf16-weight reference (same numerics as kernel).
    assert jnp.allclose(out, ref_bf16, atol=2e-3, rtol=2e-3), "mismatch vs bf16 reference"
    # Loose sanity check against the full-f32 reference (bf16 weight quantization).
    assert jnp.allclose(out, ref_f32, atol=1e-1, rtol=1e-1), "mismatch vs f32 reference"

    print("KERNEL_OK")
</pallas_src>

<mosaic_0001>
module attributes {stable_mosaic.version = 11 : i64} {
  func.func @_swiglu_mlp_kernel(%arg0: i32, %arg1: i32, %arg2: memref<16x576xf32, #tpu.memory_space<vmem>>, %arg3: memref<576x1536xbf16, #tpu.memory_space<vmem>>, %arg4: memref<768x576xbf16, #tpu.memory_space<vmem>>, %arg5: memref<16x576xf32, #tpu.memory_space<vmem>>) attributes {dimension_semantics = [#tpu.dimension_semantics<parallel>, #tpu.dimension_semantics<arbitrary>], iteration_bounds = array<i64: 1, 2>, scalar_prefetch = 0 : i64, scratch_operands = 0 : i64, tpu.core_type = #tpu.core_type<tc>, window_params = [{transform_indices = @transform_0, window_bounds = array<i64: 16, 576>}, {transform_indices = @transform_1, window_bounds = array<i64: 576, 1536>}, {transform_indices = @transform_2, window_bounds = array<i64: 768, 576>}, {transform_indices = @transform_3, window_bounds = array<i64: 16, 576>}]} {
    %c0_i32 = arith.constant 0 : i32
    %0 = arith.cmpi eq, %arg1, %c0_i32 : i32
    %1 = arith.extui %0 : i1 to i32
    %c0_i32_0 = arith.constant 0 : i32
    %2 = arith.cmpi ne, %1, %c0_i32_0 : i32
    scf.if %2 {
      %cst_12 = arith.constant 0.000000e+00 : f32
      %22 = vector.broadcast %cst_12 : f32 to vector<16x576xf32>
      %c0_13 = arith.constant 0 : index
      %c0_14 = arith.constant 0 : index
      %23 = vector.load %arg5[%c0_13, %c0_14] : memref<16x576xf32, #tpu.memory_space<vmem>>, vector<16x576xf32>
      tpu.vector_store %arg5[%c0_13, %c0_14], %22 {strides = array<i32>} : memref<16x576xf32, #tpu.memory_space<vmem>>, vector<16x576xf32>,
    } else {
    }
    %c0 = arith.constant 0 : index
    %c0_1 = arith.constant 0 : index
    %3 = vector.load %arg2[%c0, %c0_1] : memref<16x576xf32, #tpu.memory_space<vmem>>, vector<16x576xf32>
    %4 = arith.truncf %3 : vector<16x576xf32> to vector<16x576xbf16>
    %c0_2 = arith.constant 0 : index
    %c0_3 = arith.constant 0 : index
    %5 = vector.load %arg3[%c0_2, %c0_3] : memref<576x1536xbf16, #tpu.memory_space<vmem>>, vector<576x1536xbf16>
    %cst = arith.constant dense<0.000000e+00> : vector<16x1536xf32>
    %6 = tpu.matmul %4, %5, %cst {dimension_numbers = #tpu.dot_dimension_numbers<[1], [0], [0], [1], [0, 0, 1, 1], [], []>} : vector<16x576xbf16>, vector<576x1536xbf16>, vector<16x1536xf32> -> vector<16x1536xf32>
    %7 = vector.extract_strided_slice %6 {offsets = [0, 0], sizes = [16, 768], strides = [1, 1]} : vector<16x1536xf32> to vector<16x768xf32>
    %8 = vector.extract_strided_slice %6 {offsets = [0, 768], sizes = [16, 768], strides = [1, 1]} : vector<16x1536xf32> to vector<16x768xf32>
    %9 = arith.negf %7 : vector<16x768xf32>
    %10 = math.exp %9 : vector<16x768xf32>
    %cst_4 = arith.constant 1.000000e+00 : f32
    %11 = vector.broadcast %cst_4 : f32 to vector<16x768xf32>
    %12 = arith.addf %11, %10 : vector<16x768xf32>
    %13 = arith.divf %11, %12 : vector<16x768xf32>
    %14 = arith.mulf %7, %13 : vector<16x768xf32>
    %15 = arith.mulf %14, %8 : vector<16x768xf32>
    %c0_5 = arith.constant 0 : index
    %c0_6 = arith.constant 0 : index
    %16 = vector.load %arg5[%c0_5, %c0_6] : memref<16x576xf32, #tpu.memory_space<vmem>>, vector<16x576xf32>
    %17 = arith.truncf %15 : vector<16x768xf32> to vector<16x768xbf16>
    %c0_7 = arith.constant 0 : index
    %c0_8 = arith.constant 0 : index
    %18 = vector.load %arg4[%c0_7, %c0_8] : memref<768x576xbf16, #tpu.memory_space<vmem>>, vector<768x576xbf16>
    %cst_9 = arith.constant dense<0.000000e+00> : vector<16x576xf32>
    %19 = tpu.matmul %17, %18, %cst_9 {dimension_numbers = #tpu.dot_dimension_numbers<[1], [0], [0], [1], [0, 0, 1, 1], [], []>} : vector<16x768xbf16>, vector<768x576xbf16>, vector<16x576xf32> -> vector<16x576xf32>
    %20 = arith.addf %16, %19 : vector<16x576xf32>
    %c0_10 = arith.constant 0 : index
    %c0_11 = arith.constant 0 : index
    %21 = vector.load %arg5[%c0_10, %c0_11] : memref<16x576xf32, #tpu.memory_space<vmem>>, vector<16x576xf32>
    tpu.vector_store %arg5[%c0_10, %c0_11], %20 {strides = array<i32>} : memref<16x576xf32, #tpu.memory_space<vmem>>, vector<16x576xf32>,
    return
  }
  func.func @transform_0(%arg0: i32, %arg1: i32) -> (i32, i32) {
    %c0_i32 = arith.constant 0 : i32
    %c0_i32_0 = arith.constant 0 : i32
    return %arg0, %c0_i32 : i32, i32
  }
  func.func @transform_1(%arg0: i32, %arg1: i32) -> (i32, i32) {
    %c0_i32 = arith.constant 0 : i32
    %c0_i32_0 = arith.constant 0 : i32
    return %c0_i32, %arg1 : i32, i32
  }
  func.func @transform_2(%arg0: i32, %arg1: i32) -> (i32, i32) {
    %c0_i32 = arith.constant 0 : i32
    %c0_i32_0 = arith.constant 0 : i32
    return %arg1, %c0_i32 : i32, i32
  }
  func.func @transform_3(%arg0: i32, %arg1: i32) -> (i32, i32) {
    %c0_i32 = arith.constant 0 : i32
    %c0_i32_0 = arith.constant 0 : i32
    return %arg0, %c0_i32 : i32, i32
  }
}

</mosaic_0001>

<llo_original>
// kernel: smollm2_mlp_packed.1
$region0: #{smollm2_mlp_packed.1}
  #allocation0 [shape = 'u32[]', space=smem, size = 0x4, offset = 0x4, fixed_abs, tag = 'smem constant byte address 0x4 - core index']
  #allocation1 [shape = 'u32[72,128]{1,0:T(1,128)}', space=vmem, size = 0x9000, scoped, tag = 'internal scratch']
  %s0 = inlined_call_operand.vmem [shape: f32[16,576], index: 0, kind: input, shape index: {}]
  %s1 = inlined_call_operand.vmem [shape: bf16[576,3072], index: 1, kind: input, shape index: {}]
  %s2 = inlined_call_operand.vmem [shape: bf16[1536,576], index: 2, kind: input, shape index: {}]
  %s3 = inlined_call_operand.hbm [shape: f32[16,576], index: 3, kind: output, shape index: {}]
  %s4 = sld [smem:[#allocation0]]
  $region72: #{smollm2_mlp_packed.1} parent=0
    _
  %s6 = ssub.s32 1, %s4
  %s7 = scalar_select 0, %s6, %s4
  $region1: #{smollm2_mlp_packed.1} parent=0
    #allocation2 [shape = 'u8[3538944]{0}', space=vmem, size = 0x360000, scoped, tag = 'input window, operand 1']
    #allocation3 [shape = 'u8[40960]{0}', space=vmem, size = 0xa000, scoped, tag = 'output window, operand 0, single buffered']
    #allocation4 [shape = 's32[2]{0}', space=sflag, size = 0x8, scoped, tag = 'scoped memory for smollm2_mlp_packed.1']
    %8 = vsyncpa [#allocation4], 0
    loop: start=0, step=1, limit=4
    $region2: #{smollm2_mlp_packed.1} parent=1 // loop_pre_header
      _
    $region3: #{smollm2_mlp_packed.1} parent=1 // loop_header
      %s10 = sphi 0, %s14
      %p11 = scmp.ge.s32.totalorder %s10, 4
      %s17 = sphi 0, %s29
      %s18 = sphi 0, %s25
      %s19 = sphi 0, %s17
      %s20 = sphi 0, %s18
      %s21 = sphi 0, %s19
      %s22 = sphi 0, %s20
      %s32 = sphi 0, %s34
      %s35 = sphi 0, %s32
      %s36 = sphi 0, %s35
      %s52 = sphi 0, %s36
      %s58 = sphi 0, %s60
      %s61 = sphi 0, %s58
      %s62 = sphi 0, %s61
      %s78 = sphi 0, %s62
      %s84 = sphi 0, %s86
      %s87 = sphi 0, %s84
      %s88 = sphi 0, %s87
      %s104 = sphi 0, %s88
      %s110 = sphi 0, %s112
      %s113 = sphi 0, %s110
      %s114 = sphi 0, %s113
      %s130 = sphi 0, %s114
    $region4: #{smollm2_mlp_packed.1} parent=1 // loop_header_branch
      %13 = sbr.rel (%p11) target = $region8
    $region5: #{smollm2_mlp_packed.1} parent=1 // loop_body
      %s15 = ssub.s32 %s10, 1
      %s16 = ssub.s32 %s10, 2
      %s23 = sadd.s32 1, %s18
      %p24 = scmp.ge.s32.totalorder %s23, 2
      %s25 = scalar_select %p24, 0, %s23
      %s26 = sadd.s32 1, %s17
      %s27 = scalar_select %p24, %s26, %s17
      %p28 = scmp.ge.s32.totalorder %s27, 1
      %s29 = scalar_select %p28, 0, %s27
      %s30 = ssub.s32 %s17, %s29
      %p31 = scmp.eq.s32.totalorder %s30, 0
      %s33 = sadd.s32 %s32, 1
      %s34 = scalar_select %p31, %s32, %s33
      %p37 = pneg %p31
      %p38 = scmp.eq.s32.totalorder %s10, 1
      %p39 = por %p37, %p38
      %p40 = scmp.ne.s32.totalorder %s32, %s35
      %p41 = scmp.eq.s32.totalorder %s10, 0
      %p42 = por %p40, %p41
      %p43 = scmp.ne.s32.totalorder %s32, %s35
      %p44 = scmp.eq.s32.totalorder %s15, 1
      %p45 = por %p43, %p44
      %p46 = scmp.ne.s32.totalorder %s35, %s36
      %p47 = scmp.eq.s32.totalorder %s15, 0
      %p48 = por %p46, %p47
      %p49 = scmp.ne.s32.totalorder %s35, %s36
      %p50 = scmp.eq.s32.totalorder %s16, 1
      %p51 = por %p49, %p50
      %p53 = scmp.ne.s32.totalorder %s36, %s52
      %p54 = scmp.eq.s32.totalorder %s16, 0
      %p55 = por %p53, %p54
      %s56 = ssub.s32 %s18, %s25
      %p57 = scmp.eq.s32.totalorder %s56, 0
      %s59 = sadd.s32 %s58, 1
      %s60 = scalar_select %p57, %s58, %s59
      %p63 = pneg %p57
      %p64 = scmp.eq.s32.totalorder %s10, 1
      %p65 = por %p63, %p64
      %p66 = scmp.ne.s32.totalorder %s58, %s61
      %p67 = scmp.eq.s32.totalorder %s10, 0
      %p68 = por %p66, %p67
      %p69 = scmp.ne.s32.totalorder %s58, %s61
      %p70 = scmp.eq.s32.totalorder %s15, 1
      %p71 = por %p69, %p70
      %p72 = scmp.ne.s32.totalorder %s61, %s62
      %p73 = scmp.eq.s32.totalorder %s15, 0
      %p74 = por %p72, %p73
      %p75 = scmp.ne.s32.totalorder %s61, %s62
      %p76 = scmp.eq.s32.totalorder %s16, 1
      %p77 = por %p75, %p76
      %p79 = scmp.ne.s32.totalorder %s62, %s78
      %p80 = scmp.eq.s32.totalorder %s16, 0
      %p81 = por %p79, %p80
      %s82 = ssub.s32 %s18, %s25
      %p83 = scmp.eq.s32.totalorder %s82, 0
      %s85 = sadd.s32 %s84, 1
      %s86 = scalar_select %p83, %s84, %s85
      %p89 = pneg %p83
      %p90 = scmp.eq.s32.totalorder %s10, 1
      %p91 = por %p89, %p90
      %p92 = scmp.ne.s32.totalorder %s84, %s87
      %p93 = scmp.eq.s32.totalorder %s10, 0
      %p94 = por %p92, %p93
      %p95 = scmp.ne.s32.totalorder %s84, %s87
      %p96 = scmp.eq.s32.totalorder %s15, 1
      %p97 = por %p95, %p96
      %p98 = scmp.ne.s32.totalorder %s87, %s88
      %p99 = scmp.eq.s32.totalorder %s15, 0
      %p100 = por %p98, %p99
      %p101 = scmp.ne.s32.totalorder %s87, %s88
      %p102 = scmp.eq.s32.totalorder %s16, 1
      %p103 = por %p101, %p102
      %p105 = scmp.ne.s32.totalorder %s88, %s104
      %p106 = scmp.eq.s32.totalorder %s16, 0
      %p107 = por %p105, %p106
      %s108 = ssub.s32 %s17, %s29
      %p109 = scmp.eq.s32.totalorder %s108, 0
      %s111 = sadd.s32 %s110, 1
      %s112 = scalar_select %p109, %s110, %s111
      %p115 = pneg %p109
      %p116 = scmp.eq.s32.totalorder %s10, 1
      %p117 = por %p115, %p116
      %p118 = scmp.ne.s32.totalorder %s110, %s113
      %p119 = scmp.eq.s32.totalorder %s10, 0
      %p120 = por %p118, %p119
      %p121 = scmp.ne.s32.totalorder %s110, %s113
      %p122 = scmp.eq.s32.totalorder %s15, 1
      %p123 = por %p121, %p122
      %p124 = scmp.ne.s32.totalorder %s113, %s114
      %p125 = scmp.eq.s32.totalorder %s15, 0
      %p126 = por %p124, %p125
      %p127 = scmp.ne.s32.totalorder %s113, %s114
      %p128 = scmp.eq.s32.totalorder %s16, 1
      %p129 = por %p127, %p128
      %p131 = scmp.ne.s32.totalorder %s114, %s130
      %p132 = scmp.eq.s32.totalorder %s16, 0
      %p133 = por %p131, %p132
      %p134 = scmp.le.s32.totalorder 1, %s10
      %p135 = scmp.lt.s32.totalorder %s10, 3
      %p136 = pnand %p134, %p135
      %p137 = pneg %p136
      // Predicated region
      $region9: #{smollm2_mlp_packed.1} parent=5 // pred_check
        _
      $region10: #{smollm2_mlp_packed.1} parent=5 // pred_check_branch
        %139 = sbr.rel (%p136) target = $region12
      $region11: #{smollm2_mlp_packed.1} parent=5 // pred_region
        %s140 = ssub.s32 %s10, 1
        // Predicated region
        $region13: #{smollm2_mlp_packed.1} parent=11 // pred_check
          %p141 = pneg %p48
        $region14: #{smollm2_mlp_packed.1} parent=11 // pred_check_branch
          %143 = sbr.rel (%p141) target = $region16
        $region15: #{smollm2_mlp_packed.1} parent=11 // pred_region
          %s144 = smul.u32 2, %s19
          %p145 = scmp.lt.s32.totalorder %s144, 1
          %s146 = scalar_select %p145, %s144, 1
          %s147 = smul.addr %s146, 5
          %s148 = smul.addr %s147, 8
          %s149 = scalar_lea.vmem %s0, %s148
          %s150 = smul.u32 2, %s19
        $region16: #{smollm2_mlp_packed.1} parent=11 // pred_fallthru
          _
      $region12: #{smollm2_mlp_packed.1} parent=5 // pred_fallthru
        _
      %p151 = scmp.lt.s32.totalorder %s10, 2
      // Predicated region
      $region17: #{smollm2_mlp_packed.1} parent=5 // pred_check
        %p152 = pneg %p151
      $region18: #{smollm2_mlp_packed.1} parent=5 // pred_check_branch
        %154 = sbr.rel (%p152) target = $region20
      $region19: #{smollm2_mlp_packed.1} parent=5 // pred_region
        // Predicated region
        $region21: #{smollm2_mlp_packed.1} parent=19 // pred_check
          %p155 = pneg %p68
        $region22: #{smollm2_mlp_packed.1} parent=19 // pred_check_branch
          %157 = sbr.rel (%p155) target = $region24
        $region23: #{smollm2_mlp_packed.1} parent=19 // pred_region
          %s158 = sand.u32 %s58, 1
          %s159 = sand.u32 %s58, 1
          %s160 = smul.addr %s159, 3456
          %s161 = scalar_lea.vmem [#allocation2], %s160
          %s162 = smul.u32 12, %s18
          %s163 = smul.addr %s162, 4
          %s164 = scalar_lea.vmem %s1, %s163
          // Predicated region
          $region25: #{smollm2_mlp_packed.1} parent=23 // pred_check
            _
          $region26: #{smollm2_mlp_packed.1} parent=23 // pred_check_branch
            %166 = sbr.rel (0) target = $region28
          $region27: #{smollm2_mlp_packed.1} parent=23 // pred_region
            // Predicated region
            $region29: #{smollm2_mlp_packed.1} parent=27 // pred_check
              _
            $region30: #{smollm2_mlp_packed.1} parent=27 // pred_check_branch
              %168 = sbr.rel (0) target = $region32
            $region31: #{smollm2_mlp_packed.1} parent=27 // pred_region
              loop: start=0, step=1, limit=1
              $region33: #{smollm2_mlp_packed.1} parent=31 // loop_pre_header
                _
              $region34: #{smollm2_mlp_packed.1} parent=31 // loop_header
                %s170 = sphi 0, %s174
                %p171 = scmp.ge.s32.totalorder %s170, 1
                %s175 = sphi %s164, %s164
                %s176 = sphi %s161, %s161
              $region35: #{smollm2_mlp_packed.1} parent=31 // loop_header_branch
                %173 = sbr.rel (%p171) target = $region39
              $region36: #{smollm2_mlp_packed.1} parent=31 // loop_body
                %v177 = vld [vmem:[%s175] sm:$0xff]
                %178 = vst [vmem:[%s176] sm:$0xff] %v177
                %v179 = vld [vmem:[%s175 + $0x8] sm:$0xff]
                %180 = vst [vmem:[%s176 + $0x8] sm:$0xff] %v179
                %v181 = vld [vmem:[%s175 + $0x10] sm:$0xff]
                %182 = vst [vmem:[%s176 + $0x10] sm:$0xff] %v181
                %v183 = vld [vmem:[%s175 + $0x18] sm:$0xff]
                %184 = vst [vmem:[%s176 + $0x18] sm:$0xff] %v183
                %v185 = vld [vmem:[%s175 + $0x20] sm:$0xff]
                %186 = vst [vmem:[%s176 + $0x20] sm:$0xff] %v185
                %v187 = vld [vmem:[%s175 + $0x28] sm:$0xff]
                %188 = vst [vmem:[%s176 + $0x28] sm:$0xff] %v187
                %v189 = vld [vmem:[%s175 + $0x60] sm:$0xff]
                %190 = vst [vmem:[%s176 + $0x30] sm:$0xff] %v189
                %v191 = vld [vmem:[%s175 + $0x68] sm:$0xff]
                %192 = vst [vmem:[%s176 + $0x38] sm:$0xff] %v191
                %v193 = vld [vmem:[%s175 + $0x70] sm:$0xff]
                %194 = vst [vmem:[%s176 + $0x40] sm:$0xff] %v193
                %v195 = vld [vmem:[%s175 + $0x78] sm:$0xff]
                %196 = vst [vmem:[%s176 + $0x48] sm:$0xff] %v195
                %v197 = vld [vmem:[%s175 + $0x80] sm:$0xff]
                %198 = vst [vmem:[%s176 + $0x50] sm:$0xff] %v197
                %v199 = vld [vmem:[%s175 + $0x88] sm:$0xff]
                %200 = vst [vmem:[%s176 + $0x58] sm:$0xff] %v199
                %v201 = vld [vmem:[%s175 + $0xc0] sm:$0xff]
                %202 = vst [vmem:[%s176 + $0x60] sm:$0xff] %v201
                %v203 = vld [vmem:[%s175 + $0xc8] sm:$0xff]
                %204 = vst [vmem:[%s176 + $0x68] sm:$0xff] %v203
                %v205 = vld [vmem:[%s175 + $0xd0] sm:$0xff]
                %206 = vst [vmem:[%s176 + $0x70] sm:$0xff] %v205
                %v207 = vld [vmem:[%s175 + $0xd8] sm:$0xff]
                %208 = vst [vmem:[%s176 + $0x78] sm:$0xff] %v207
                %v209 = vld [vmem:[%s175 + $0xe0] sm:$0xff]
                %210 = vst [vmem:[%s176 + $0x80] sm:$0xff] %v209
                %v211 = vld [vmem:[%s175 + $0xe8] sm:$0xff]
                %212 = vst [vmem:[%s176 + $0x88] sm:$0xff] %v211
                %v213 = vld [vmem:[%s175 + $0x120] sm:$0xff]
                %214 = vst [vmem:[%s176 + $0x90] sm:$0xff] %v213
                %v215 = vld [vmem:[%s175 + $0x128] sm:$0xff]
                %216 = vst [vmem:[%s176 + $0x98] sm:$0xff] %v215
                %v217 = vld [vmem:[%s175 + $0x130] sm:$0xff]
                %218 = vst [vmem:[%s176 + $0xa0] sm:$0xff] %v217
                %v219 = vld [vmem:[%s175 + $0x138] sm:$0xff]
                %220 = vst [vmem:[%s176 + $0xa8] sm:$0xff] %v219
                %v221 = vld [vmem:[%s175 + $0x140] sm:$0xff]
                %222 = vst [vmem:[%s176 + $0xb0] sm:$0xff] %v221
                %v223 = vld [vmem:[%s175 + $0x148] sm:$0xff]
                %224 = vst [vmem:[%s176 + $0xb8] sm:$0xff] %v223
                %v225 = vld [vmem:[%s175 + $0x180] sm:$0xff]
                %226 = vst [vmem:[%s176 + $0xc0] sm:$0xff] %v225
                %v227 = vld [vmem:[%s175 + $0x188] sm:$0xff]
                %228 = vst [vmem:[%s176 + $0xc8] sm:$0xff] %v227
                %v229 = vld [vmem:[%s175 + $0x190] sm:$0xff]
                %230 = vst [vmem:[%s176 + $0xd0] sm:$0xff] %v229
                %v231 = vld [vmem:[%s175 + $0x198] sm:$0xff]
                %232 = vst [vmem:[%s176 + $0xd8] sm:$0xff] %v231
                %v233 = vld [vmem:[%s175 + $0x1a0] sm:$0xff]
                %234 = vst [vmem:[%s176 + $0xe0] sm:$0xff] %v233
                %v235 = vld [vmem:[%s175 + $0x1a8] sm:$0xff]
                %236 = vst [vmem:[%s176 + $0xe8] sm:$0xff] %v235
                %v237 = vld [vmem:[%s175 + $0x1e0] sm:$0xff]
                %238 = vst [vmem:[%s176 + $0xf0] sm:$0xff] %v237
                %v239 = vld [vmem:[%s175 + $0x1e8] sm:$0xff]
                %240 = vst [vmem:[%s176 + $0xf8] sm:$0xff] %v239
                %v241 = vld [vmem:[%s175 + $0x1f0] sm:$0xff]
                %242 = vst [vmem:[%s176 + $0x100] sm:$0xff] %v241
                %v243 = vld [vmem:[%s175 + $0x1f8] sm:$0xff]
                %244 = vst [vmem:[%s176 + $0x108] sm:$0xff] %v243
                %v245 = vld [vmem:[%s175 + $0x200] sm:$0xff]
                %246 = vst [vmem:[%s176 + $0x110] sm:$0xff] %v245
                %v247 = vld [vmem:[%s175 + $0x208] sm:$0xff]
                %248 = vst [vmem:[%s176 + $0x118] sm:$0xff] %v247
                %v249 = vld [vmem:[%s175 + $0x240] sm:$0xff]
                %250 = vst [vmem:[%s176 + $0x120] sm:$0xff] %v249
                %v251 = vld [vmem:[%s175 + $0x248] sm:$0xff]
                %252 = vst [vmem:[%s176 + $0x128] sm:$0xff] %v251
                %v253 = vld [vmem:[%s175 + $0x250] sm:$0xff]
                %254 = vst [vmem:[%s176 + $0x130] sm:$0xff] %v253
                %v255 = vld [vmem:[%s175 + $0x258] sm:$0xff]
                %256 = vst [vmem:[%s176 + $0x138] sm:$0xff] %v255
                %v257 = vld [vmem:[%s175 + $0x260] sm:$0xff]
                %258 = vst [vmem:[%s176 + $0x140] sm:$0xff] %v257
                %v259 = vld [vmem:[%s175 + $0x268] sm:$0xff]
                %260 = vst [vmem:[%s176 + $0x148] sm:$0xff] %v259
                %v261 = vld [vmem:[%s175 + $0x2a0] sm:$0xff]
                %262 = vst [vmem:[%s176 + $0x150] sm:$0xff] %v261
                %v263 = vld [vmem:[%s175 + $0x2a8] sm:$0xff]
                %264 = vst [vmem:[%s176 + $0x158] sm:$0xff] %v263
                %v265 = vld [vmem:[%s175 + $0x2b0] sm:$0xff]
                %266 = vst [vmem:[%s176 + $0x160] sm:$0xff] %v265
                %v267 = vld [vmem:[%s175 + $0x2b8] sm:$0xff]
                %268 = vst [vmem:[%s176 + $0x168] sm:$0xff] %v267
                %v269 = vld [vmem:[%s175 + $0x2c0] sm:$0xff]
                %270 = vst [vmem:[%s176 + $0x170] sm:$0xff] %v269
                %v271 = vld [vmem:[%s175 + $0x2c8] sm:$0xff]
                %272 = vst [vmem:[%s176 + $0x178] sm:$0xff] %v271
                %v273 = vld [vmem:[%s175 + $0x300] sm:$0xff]
                %274 = vst [vmem:[%s176 + $0x180] sm:$0xff] %v273
                %v275 = vld [vmem:[%s175 + $0x308] sm:$0xff]
                %276 = vst [vmem:[%s176 + $0x188] sm:$0xff] %v275
                %v277 = vld [vmem:[%s175 + $0x310] sm:$0xff]
                %278 = vst [vmem:[%s176 + $0x190] sm:$0xff] %v277
                %v279 = vld [vmem:[%s175 + $0x318] sm:$0xff]
                %280 = vst [vmem:[%s176 + $0x198] sm:$0xff] %v279
                %v281 = vld [vmem:[%s175 + $0x320] sm:$0xff]
                %282 = vst [vmem:[%s176 + $0x1a0] sm:$0xff] %v281
                %v283 = vld [vmem:[%s175 + $0x328] sm:$0xff]
                %284 = vst [vmem:[%s176 + $0x1a8] sm:$0xff] %v283
                %v285 = vld [vmem:[%s175 + $0x360] sm:$0xff]
                %286 = vst [vmem:[%s176 + $0x1b0] sm:$0xff] %v285
                %v287 = vld [vmem:[%s175 + $0x368] sm:$0xff]
                %288 = vst [vmem:[%s176 + $0x1b8] sm:$0xff] %v287
                %v289 = vld [vmem:[%s175 + $0x370] sm:$0xff]
                %290 = vst [vmem:[%s176 + $0x1c0] sm:$0xff] %v289
                %v291 = vld [vmem:[%s175 + $0x378] sm:$0xff]
                %292 = vst [vmem:[%s176 + $0x1c8] sm:$0xff] %v291
                %v293 = vld [vmem:[%s175 + $0x380] sm:$0xff]
                %294 = vst [vmem:[%s176 + $0x1d0] sm:$0xff] %v293
                %v295 = vld [vmem:[%s175 + $0x388] sm:$0xff]
                %296 = vst [vmem:[%s176 + $0x1d8] sm:$0xff] %v295
                %v297 = vld [vmem:[%s175 + $0x3c0] sm:$0xff]
                %298 = vst [vmem:[%s176 + $0x1e0] sm:$0xff] %v297
                %v299 = vld [vmem:[%s175 + $0x3c8] sm:$0xff]
                %300 = vst [vmem:[%s176 + $0x1e8] sm:$0xff] %v299
                %v301 = vld [vmem:[%s175 + $0x3d0] sm:$0xff]
                %302 = vst [vmem:[%s176 + $0x1f0] sm:$0xff] %v301
                %v303 = vld [vmem:[%s175 + $0x3d8] sm:$0xff]
                %304 = vst [vmem:[%s176 + $0x1f8] sm:$0xff] %v303
                %v305 = vld [vmem:[%s175 + $0x3e0] sm:$0xff]
                %306 = vst [vmem:[%s176 + $0x200] sm:$0xff] %v305
                %v307 = vld [vmem:[%s175 + $0x3e8] sm:$0xff]
                %308 = vst [vmem:[%s176 + $0x208] sm:$0xff] %v307
                %v309 = vld [vmem:[%s175 + $0x420] sm:$0xff]
                %310 = vst [vmem:[%s176 + $0x210] sm:$0xff] %v309
                %v311 = vld [vmem:[%s175 + $0x428] sm:$0xff]
                %312 = vst [vmem:[%s176 + $0x218] sm:$0xff] %v311
                %v313 = vld [vmem:[%s175 + $0x430] sm:$0xff]
                %314 = vst [vmem:[%s176 + $0x220] sm:$0xff] %v313
                %v315 = vld [vmem:[%s175 + $0x438] sm:$0xff]
                %316 = vst [vmem:[%s176 + $0x228] sm:$0xff] %v315
                %v317 = vld [vmem:[%s175 + $0x440] sm:$0xff]
                %318 = vst [vmem:[%s176 + $0x230] sm:$0xff] %v317
                %v319 = vld [vmem:[%s175 + $0x448] sm:$0xff]
                %320 = vst [vmem:[%s176 + $0x238] sm:$0xff] %v319
                %v321 = vld [vmem:[%s175 + $0x480] sm:$0xff]
                %322 = vst [vmem:[%s176 + $0x240] sm:$0xff] %v321
                %v323 = vld [vmem:[%s175 + $0x488] sm:$0xff]
                %324 = vst [vmem:[%s176 + $0x248] sm:$0xff] %v323
                %v325 = vld [vmem:[%s175 + $0x490] sm:$0xff]
                %326 = vst [vmem:[%s176 + $0x250] sm:$0xff] %v325
                %v327 = vld [vmem:[%s175 + $0x498] sm:$0xff]
                %328 = vst [vmem:[%s176 + $0x258] sm:$0xff] %v327
                %v329 = vld [vmem:[%s175 + $0x4a0] sm:$0xff]
                %330 = vst [vmem:[%s176 + $0x260] sm:$0xff] %v329
                %v331 = vld [vmem:[%s175 + $0x4a8] sm:$0xff]
                %332 = vst [vmem:[%s176 + $0x268] sm:$0xff] %v331
                %v333 = vld [vmem:[%s175 + $0x4e0] sm:$0xff]
                %334 = vst [vmem:[%s176 + $0x270] sm:$0xff] %v333
                %v335 = vld [vmem:[%s175 + $0x4e8] sm:$0xff]
                %336 = vst [vmem:[%s176 + $0x278] sm:$0xff] %v335
                %v337 = vld [vmem:[%s175 + $0x4f0] sm:$0xff]
                %338 = vst [vmem:[%s176 + $0x280] sm:$0xff] %v337
                %v339 = vld [vmem:[%s175 + $0x4f8] sm:$0xff]
                %340 = vst [vmem:[%s176 + $0x288] sm:$0xff] %v339
                %v341 = vld [vmem:[%s175 + $0x500] sm:$0xff]
                %342 = vst [vmem:[%s176 + $0x290] sm:$0xff] %v341
                %v343 = vld [vmem:[%s175 + $0x508] sm:$0xff]
                %344 = vst [vmem:[%s176 + $0x298] sm:$0xff] %v343
                %v345 = vld [vmem:[%s175 + $0x540] sm:$0xff]
                %346 = vst [vmem:[%s176 + $0x2a0] sm:$0xff] %v345
                %v347 = vld [vmem:[%s175 + $0x548] sm:$0xff]
                %348 = vst [vmem:[%s176 + $0x2a8] sm:$0xff] %v347
                %v349 = vld [vmem:[%s175 + $0x550] sm:$0xff]
                %350 = vst [vmem:[%s176 + $0x2b0] sm:$0xff] %v349
                %v351 = vld [vmem:[%s175 + $0x558] sm:$0xff]
                %352 = vst [vmem:[%s176 + $0x2b8] sm:$0xff] %v351
                %v353 = vld [vmem:[%s175 + $0x560] sm:$0xff]
                %354 = vst [vmem:[%s176 + $0x2c0] sm:$0xff] %v353
                %v355 = vld [vmem:[%s175 + $0x568] sm:$0xff]
                %356 = vst [vmem:[%s176 + $0x2c8] sm:$0xff] %v355
                %v357 = vld [vmem:[%s175 + $0x5a0] sm:$0xff]
                %358 = vst [vmem:[%s176 + $0x2d0] sm:$0xff] %v357
                %v359 = vld [vmem:[%s175 + $0x5a8] sm:$0xff]
                %360 = vst [vmem:[%s176 + $0x2d8] sm:$0xff] %v359
                %v361 = vld [vmem:[%s175 + $0x5b0] sm:$0xff]
                %362 = vst [vmem:[%s176 + $0x2e0] sm:$0xff] %v361
                %v363 = vld [vmem:[%s175 + $0x5b8] sm:$0xff]
                %364 = vst [vmem:[%s176 + $0x2e8] sm:$0xff] %v363
                %v365 = vld [vmem:[%s175 + $0x5c0] sm:$0xff]
                %366 = vst [vmem:[%s176 + $0x2f0] sm:$0xff] %v365
                %v367 = vld [vmem:[%s175 + $0x5c8] sm:$0xff]
                %368 = vst [vmem:[%s176 + $0x2f8] sm:$0xff] %v367
                %v369 = vld [vmem:[%s175 + $0x600] sm:$0xff]
                %370 = vst [vmem:[%s176 + $0x300] sm:$0xff] %v369
                %v371 = vld [vmem:[%s175 + $0x608] sm:$0xff]
                %372 = vst [vmem:[%s176 + $0x308] sm:$0xff] %v371
                %v373 = vld [vmem:[%s175 + $0x610] sm:$0xff]
                %374 = vst [vmem:[%s176 + $0x310] sm:$0xff] %v373
                %v375 = vld [vmem:[%s175 + $0x618] sm:$0xff]
                %376 = vst [vmem:[%s176 + $0x318] sm:$0xff] %v375
                %v377 = vld [vmem:[%s175 + $0x620] sm:$0xff]
                %378 = vst [vmem:[%s176 + $0x320] sm:$0xff] %v377
                %v379 = vld [vmem:[%s175 + $0x628] sm:$0xff]
                %380 = vst [vmem:[%s176 + $0x328] sm:$0xff] %v379
                %v381 = vld [vmem:[%s175 + $0x660] sm:$0xff]
                %382 = vst [vmem:[%s176 + $0x330] sm:$0xff] %v381
                %v383 = vld [vmem:[%s175 + $0x668] sm:$0xff]
                %384 = vst [vmem:[%s176 + $0x338] sm:$0xff] %v383
                %v385 = vld [vmem:[%s175 + $0x670] sm:$0xff]
                %386 = vst [vmem:[%s176 + $0x340] sm:$0xff] %v385
                %v387 = vld [vmem:[%s175 + $0x678] sm:$0xff]
                %388 = vst [vmem:[%s176 + $0x348] sm:$0xff] %v387
                %v389 = vld [vmem:[%s175 + $0x680] sm:$0xff]
                %390 = vst [vmem:[%s176 + $0x350] sm:$0xff] %v389
                %v391 = vld [vmem:[%s175 + $0x688] sm:$0xff]
                %392 = vst [vmem:[%s176 + $0x358] sm:$0xff] %v391
                %v393 = vld [vmem:[%s175 + $0x6c0] sm:$0xff]
                %394 = vst [vmem:[%s176 + $0x360] sm:$0xff] %v393
                %v395 = vld [vmem:[%s175 + $0x6c8] sm:$0xff]
                %396 = vst [vmem:[%s176 + $0x368] sm:$0xff] %v395
                %v397 = vld [vmem:[%s175 + $0x6d0] sm:$0xff]
                %398 = vst [vmem:[%s176 + $0x370] sm:$0xff] %v397
                %v399 = vld [vmem:[%s175 + $0x6d8] sm:$0xff]
                %400 = vst [vmem:[%s176 + $0x378] sm:$0xff] %v399
                %v401 = vld [vmem:[%s175 + $0x6e0] sm:$0xff]
                %402 = vst [vmem:[%s176 + $0x380] sm:$0xff] %v401
                %v403 = vld [vmem:[%s175 + $0x6e8] sm:$0xff]
                %404 = vst [vmem:[%s176 + $0x388] sm:$0xff] %v403
                %v405 = vld [vmem:[%s175 + $0x720] sm:$0xff]
                %406 = vst [vmem:[%s176 + $0x390] sm:$0xff] %v405
                %v407 = vld [vmem:[%s175 + $0x728] sm:$0xff]
                %408 = vst [vmem:[%s176 + $0x398] sm:$0xff] %v407
                %v409 = vld [vmem:[%s175 + $0x730] sm:$0xff]
                %410 = vst [vmem:[%s176 + $0x3a0] sm:$0xff] %v409
                %v411 = vld [vmem:[%s175 + $0x738] sm:$0xff]
                %412 = vst [vmem:[%s176 + $0x3a8] sm:$0xff] %v411
                %v413 = vld [vmem:[%s175 + $0x740] sm:$0xff]
                %414 = vst [vmem:[%s176 + $0x3b0] sm:$0xff] %v413
                %v415 = vld [vmem:[%s175 + $0x748] sm:$0xff]
                %416 = vst [vmem:[%s176 + $0x3b8] sm:$0xff] %v415
                %v417 = vld [vmem:[%s175 + $0x780] sm:$0xff]
                %418 = vst [vmem:[%s176 + $0x3c0] sm:$0xff] %v417
                %v419 = vld [vmem:[%s175 + $0x788] sm:$0xff]
                %420 = vst [vmem:[%s176 + $0x3c8] sm:$0xff] %v419
                %v421 = vld [vmem:[%s175 + $0x790] sm:$0xff]
                %422 = vst [vmem:[%s176 + $0x3d0] sm:$0xff] %v421
                %v423 = vld [vmem:[%s175 + $0x798] sm:$0xff]
                %424 = vst [vmem:[%s176 + $0x3d8] sm:$0xff] %v423
                %v425 = vld [vmem:[%s175 + $0x7a0] sm:$0xff]
                %426 = vst [vmem:[%s176 + $0x3e0] sm:$0xff] %v425
                %v427 = vld [vmem:[%s175 + $0x7a8] sm:$0xff]
                %428 = vst [vmem:[%s176 + $0x3e8] sm:$0xff] %v427
                %v429 = vld [vmem:[%s175 + $0x7e0] sm:$0xff]
                %430 = vst [vmem:[%s176 + $0x3f0] sm:$0xff] %v429
                %v431 = vld [vmem:[%s175 + $0x7e8] sm:$0xff]
                %432 = vst [vmem:[%s176 + $0x3f8] sm:$0xff] %v431
                %v433 = vld [vmem:[%s175 + $0x7f0] sm:$0xff]
                %434 = vst [vmem:[%s176 + $0x400] sm:$0xff] %v433
                %v435 = vld [vmem:[%s175 + $0x7f8] sm:$0xff]
                %436 = vst [vmem:[%s176 + $0x408] sm:$0xff] %v435
                %v437 = vld [vmem:[%s175 + $0x800] sm:$0xff]
                %438 = vst [vmem:[%s176 + $0x410] sm:$0xff] %v437
                %v439 = vld [vmem:[%s175 + $0x808] sm:$0xff]
                %440 = vst [vmem:[%s176 + $0x418] sm:$0xff] %v439
                %v441 = vld [vmem:[%s175 + $0x840] sm:$0xff]
                %442 = vst [vmem:[%s176 + $0x420] sm:$0xff] %v441
                %v443 = vld [vmem:[%s175 + $0x848] sm:$0xff]
                %444 = vst [vmem:[%s176 + $0x428] sm:$0xff] %v443
                %v445 = vld [vmem:[%s175 + $0x850] sm:$0xff]
                %446 = vst [vmem:[%s176 + $0x430] sm:$0xff] %v445
                %v447 = vld [vmem:[%s175 + $0x858] sm:$0xff]
                %448 = vst [vmem:[%s176 + $0x438] sm:$0xff] %v447
                %v449 = vld [vmem:[%s175 + $0x860] sm:$0xff]
                %450 = vst [vmem:[%s176 + $0x440] sm:$0xff] %v449
                %v451 = vld [vmem:[%s175 + $0x868] sm:$0xff]
                %452 = vst [vmem:[%s176 + $0x448] sm:$0xff] %v451
                %v453 = vld [vmem:[%s175 + $0x8a0] sm:$0xff]
                %454 = vst [vmem:[%s176 + $0x450] sm:$0xff] %v453
                %v455 = vld [vmem:[%s175 + $0x8a8] sm:$0xff]
                %456 = vst [vmem:[%s176 + $0x458] sm:$0xff] %v455
                %v457 = vld [vmem:[%s175 + $0x8b0] sm:$0xff]
                %458 = vst [vmem:[%s176 + $0x460] sm:$0xff] %v457
                %v459 = vld [vmem:[%s175 + $0x8b8] sm:$0xff]
                %460 = vst [vmem:[%s176 + $0x468] sm:$0xff] %v459
                %v461 = vld [vmem:[%s175 + $0x8c0] sm:$0xff]
                %462 = vst [vmem:[%s176 + $0x470] sm:$0xff] %v461
                %v463 = vld [vmem:[%s175 + $0x8c8] sm:$0xff]
                %464 = vst [vmem:[%s176 + $0x478] sm:$0xff] %v463
                %v465 = vld [vmem:[%s175 + $0x900] sm:$0xff]
                %466 = vst [vmem:[%s176 + $0x480] sm:$0xff] %v465
                %v467 = vld [vmem:[%s175 + $0x908] sm:$0xff]
                %468 = vst [vmem:[%s176 + $0x488] sm:$0xff] %v467
                %v469 = vld [vmem:[%s175 + $0x910] sm:$0xff]
                %470 = vst [vmem:[%s176 + $0x490] sm:$0xff] %v469
                %v471 = vld [vmem:[%s175 + $0x918] sm:$0xff]
                %472 = vst [vmem:[%s176 + $0x498] sm:$0xff] %v471
                %v473 = vld [vmem:[%s175 + $0x920] sm:$0xff]
                %474 = vst [vmem:[%s176 + $0x4a0] sm:$0xff] %v473
                %v475 = vld [vmem:[%s175 + $0x928] sm:$0xff]
                %476 = vst [vmem:[%s176 + $0x4a8] sm:$0xff] %v475
                %v477 = vld [vmem:[%s175 + $0x960] sm:$0xff]
                %478 = vst [vmem:[%s176 + $0x4b0] sm:$0xff] %v477
                %v479 = vld [vmem:[%s175 + $0x968] sm:$0xff]
                %480 = vst [vmem:[%s176 + $0x4b8] sm:$0xff] %v479
                %v481 = vld [vmem:[%s175 + $0x970] sm:$0xff]
                %482 = vst [vmem:[%s176 + $0x4c0] sm:$0xff] %v481
                %v483 = vld [vmem:[%s175 + $0x978] sm:$0xff]
                %484 = vst [vmem:[%s176 + $0x4c8] sm:$0xff] %v483
                %v485 = vld [vmem:[%s175 + $0x980] sm:$0xff]
                %486 = vst [vmem:[%s176 + $0x4d0] sm:$0xff] %v485
                %v487 = vld [vmem:[%s175 + $0x988] sm:$0xff]
                %488 = vst [vmem:[%s176 + $0x4d8] sm:$0xff] %v487
                %v489 = vld [vmem:[%s175 + $0x9c0] sm:$0xff]
                %490 = vst [vmem:[%s176 + $0x4e0] sm:$0xff] %v489
                %v491 = vld [vmem:[%s175 + $0x9c8] sm:$0xff]
                %492 = vst [vmem:[%s176 + $0x4e8] sm:$0xff] %v491
                %v493 = vld [vmem:[%s175 + $0x9d0] sm:$0xff]
                %494 = vst [vmem:[%s176 + $0x4f0] sm:$0xff] %v493
                %v495 = vld [vmem:[%s175 + $0x9d8] sm:$0xff]
                %496 = vst [vmem:[%s176 + $0x4f8] sm:$0xff] %v495
                %v497 = vld [vmem:[%s175 + $0x9e0] sm:$0xff]
                %498 = vst [vmem:[%s176 + $0x500] sm:$0xff] %v497
                %v499 = vld [vmem:[%s175 + $0x9e8] sm:$0xff]
                %500 = vst [vmem:[%s176 + $0x508] sm:$0xff] %v499
                %v501 = vld [vmem:[%s175 + $0xa20] sm:$0xff]
                %502 = vst [vmem:[%s176 + $0x510] sm:$0xff] %v501
                %v503 = vld [vmem:[%s175 + $0xa28] sm:$0xff]
                %504 = vst [vmem:[%s176 + $0x518] sm:$0xff] %v503
                %v505 = vld [vmem:[%s175 + $0xa30] sm:$0xff]
                %506 = vst [vmem:[%s176 + $0x520] sm:$0xff] %v505
                %v507 = vld [vmem:[%s175 + $0xa38] sm:$0xff]
                %508 = vst [vmem:[%s176 + $0x528] sm:$0xff] %v507
                %v509 = vld [vmem:[%s175 + $0xa40] sm:$0xff]
                %510 = vst [vmem:[%s176 + $0x530] sm:$0xff] %v509
                %v511 = vld [vmem:[%s175 + $0xa48] sm:$0xff]
                %512 = vst [vmem:[%s176 + $0x538] sm:$0xff] %v511
                %v513 = vld [vmem:[%s175 + $0xa80] sm:$0xff]
                %514 = vst [vmem:[%s176 + $0x540] sm:$0xff] %v513
                %v515 = vld [vmem:[%s175 + $0xa88] sm:$0xff]
                %516 = vst [vmem:[%s176 + $0x548] sm:$0xff] %v515
                %v517 = vld [vmem:[%s175 + $0xa90] sm:$0xff]
                %518 = vst [vmem:[%s176 + $0x550] sm:$0xff] %v517
                %v519 = vld [vmem:[%s175 + $0xa98] sm:$0xff]
                %520 = vst [vmem:[%s176 + $0x558] sm:$0xff] %v519
                %v521 = vld [vmem:[%s175 + $0xaa0] sm:$0xff]
                %522 = vst [vmem:[%s176 + $0x560] sm:$0xff] %v521
                %v523 = vld [vmem:[%s175 + $0xaa8] sm:$0xff]
                %524 = vst [vmem:[%s176 + $0x568] sm:$0xff] %v523
                %v525 = vld [vmem:[%s175 + $0xae0] sm:$0xff]
                %526 = vst [vmem:[%s176 + $0x570] sm:$0xff] %v525
                %v527 = vld [vmem:[%s175 + $0xae8] sm:$0xff]
                %528 = vst [vmem:[%s176 + $0x578] sm:$0xff] %v527
                %v529 = vld [vmem:[%s175 + $0xaf0] sm:$0xff]
                %530 = vst [vmem:[%s176 + $0x580] sm:$0xff] %v529
                %v531 = vld [vmem:[%s175 + $0xaf8] sm:$0xff]
                %532 = vst [vmem:[%s176 + $0x588] sm:$0xff] %v531
                %v533 = vld [vmem:[%s175 + $0xb00] sm:$0xff]
                %534 = vst [vmem:[%s176 + $0x590] sm:$0xff] %v533
                %v535 = vld [vmem:[%s175 + $0xb08] sm:$0xff]
                %536 = vst [vmem:[%s176 + $0x598] sm:$0xff] %v535
                %v537 = vld [vmem:[%s175 + $0xb40] sm:$0xff]
                %538 = vst [vmem:[%s176 + $0x5a0] sm:$0xff] %v537
                %v539 = vld [vmem:[%s175 + $0xb48] sm:$0xff]
                %540 = vst [vmem:[%s176 + $0x5a8] sm:$0xff] %v539
                %v541 = vld [vmem:[%s175 + $0xb50] sm:$0xff]
                %542 = vst [vmem:[%s176 + $0x5b0] sm:$0xff] %v541
                %v543 = vld [vmem:[%s175 + $0xb58] sm:$0xff]
                %544 = vst [vmem:[%s176 + $0x5b8] sm:$0xff] %v543
                %v545 = vld [vmem:[%s175 + $0xb60] sm:$0xff]
                %546 = vst [vmem:[%s176 + $0x5c0] sm:$0xff] %v545
                %v547 = vld [vmem:[%s175 + $0xb68] sm:$0xff]
                %548 = vst [vmem:[%s176 + $0x5c8] sm:$0xff] %v547
                %v549 = vld [vmem:[%s175 + $0xba0] sm:$0xff]
                %550 = vst [vmem:[%s176 + $0x5d0] sm:$0xff] %v549
                %v551 = vld [vmem:[%s175 + $0xba8] sm:$0xff]
                %552 = vst [vmem:[%s176 + $0x5d8] sm:$0xff] %v551
                %v553 = vld [vmem:[%s175 + $0xbb0] sm:$0xff]
                %554 = vst [vmem:[%s176 + $0x5e0] sm:$0xff] %v553
                %v555 = vld [vmem:[%s175 + $0xbb8] sm:$0xff]
                %556 = vst [vmem:[%s176 + $0x5e8] sm:$0xff] %v555
                %v557 = vld [vmem:[%s175 + $0xbc0] sm:$0xff]
                %558 = vst [vmem:[%s176 + $0x5f0] sm:$0xff] %v557
                %v559 = vld [vmem:[%s175 + $0xbc8] sm:$0xff]
                %560 = vst [vmem:[%s176 + $0x5f8] sm:$0xff] %v559
                %v561 = vld [vmem:[%s175 + $0xc00] sm:$0xff]
                %562 = vst [vmem:[%s176 + $0x600] sm:$0xff] %v561
                %v563 = vld [vmem:[%s175 + $0xc08] sm:$0xff]
                %564 = vst [vmem:[%s176 + $0x608] sm:$0xff] %v563
                %v565 = vld [vmem:[%s175 + $0xc10] sm:$0xff]
                %566 = vst [vmem:[%s176 + $0x610] sm:$0xff] %v565
                %v567 = vld [vmem:[%s175 + $0xc18] sm:$0xff]
                %568 = vst [vmem:[%s176 + $0x618] sm:$0xff] %v567
                %v569 = vld [vmem:[%s175 + $0xc20] sm:$0xff]
                %570 = vst [vmem:[%s176 + $0x620] sm:$0xff] %v569
                %v571 = vld [vmem:[%s175 + $0xc28] sm:$0xff]
                %572 = vst [vmem:[%s176 + $0x628] sm:$0xff] %v571
                %v573 = vld [vmem:[%s175 + $0xc60] sm:$0xff]
                %574 = vst [vmem:[%s176 + $0x630] sm:$0xff] %v573
                %v575 = vld [vmem:[%s175 + $0xc68] sm:$0xff]
                %576 = vst [vmem:[%s176 + $0x638] sm:$0xff] %v575
                %v577 = vld [vmem:[%s175 + $0xc70] sm:$0xff]
                %578 = vst [vmem:[%s176 + $0x640] sm:$0xff] %v577
                %v579 = vld [vmem:[%s175 + $0xc78] sm:$0xff]
                %580 = vst [vmem:[%s176 + $0x648] sm:$0xff] %v579
                %v581 = vld [vmem:[%s175 + $0xc80] sm:$0xff]
                %582 = vst [vmem:[%s176 + $0x650] sm:$0xff] %v581
                %v583 = vld [vmem:[%s175 + $0xc88] sm:$0xff]
                %584 = vst [vmem:[%s176 + $0x658] sm:$0xff] %v583
                %v585 = vld [vmem:[%s175 + $0xcc0] sm:$0xff]
                %586 = vst [vmem:[%s176 + $0x660] sm:$0xff] %v585
                %v587 = vld [vmem:[%s175 + $0xcc8] sm:$0xff]
                %588 = vst [vmem:[%s176 + $0x668] sm:$0xff] %v587
                %v589 = vld [vmem:[%s175 + $0xcd0] sm:$0xff]
                %590 = vst [vmem:[%s176 + $0x670] sm:$0xff] %v589
                %v591 = vld [vmem:[%s175 + $0xcd8] sm:$0xff]
                %592 = vst [vmem:[%s176 + $0x678] sm:$0xff] %v591
                %v593 = vld [vmem:[%s175 + $0xce0] sm:$0xff]
                %594 = vst [vmem:[%s176 + $0x680] sm:$0xff] %v593
                %v595 = vld [vmem:[%s175 + $0xce8] sm:$0xff]
                %596 = vst [vmem:[%s176 + $0x688] sm:$0xff] %v595
                %v597 = vld [vmem:[%s175 + $0xd20] sm:$0xff]
                %598 = vst [vmem:[%s176 + $0x690] sm:$0xff] %v597
                %v599 = vld [vmem:[%s175 + $0xd28] sm:$0xff]
                %600 = vst [vmem:[%s176 + $0x698] sm:$0xff] %v599
                %v601 = vld [vmem:[%s175 + $0xd30] sm:$0xff]
                %602 = vst [vmem:[%s176 + $0x6a0] sm:$0xff] %v601
                %v603 = vld [vmem:[%s175 + $0xd38] sm:$0xff]
                %604 = vst [vmem:[%s176 + $0x6a8] sm:$0xff] %v603
                %v605 = vld [vmem:[%s175 + $0xd40] sm:$0xff]
                %606 = vst [vmem:[%s176 + $0x6b0] sm:$0xff] %v605
                %v607 = vld [vmem:[%s175 + $0xd48] sm:$0xff]
                %608 = vst [vmem:[%s176 + $0x6b8] sm:$0xff] %v607
                %v609 = vld [vmem:[%s175 + $0xd80] sm:$0xff]
                %610 = vst [vmem:[%s176 + $0x6c0] sm:$0xff] %v609
                %v611 = vld [vmem:[%s175 + $0xd88] sm:$0xff]
                %612 = vst [vmem:[%s176 + $0x6c8] sm:$0xff] %v611
                %v613 = vld [vmem:[%s175 + $0xd90] sm:$0xff]
                %614 = vst [vmem:[%s176 + $0x6d0] sm:$0xff] %v613
                %v615 = vld [vmem:[%s175 + $0xd98] sm:$0xff]
                %616 = vst [vmem:[%s176 + $0x6d8] sm:$0xff] %v615
                %v617 = vld [vmem:[%s175 + $0xda0] sm:$0xff]
                %618 = vst [vmem:[%s176 + $0x6e0] sm:$0xff] %v617
                %v619 = vld [vmem:[%s175 + $0xda8] sm:$0xff]
                %620 = vst [vmem:[%s176 + $0x6e8] sm:$0xff] %v619
                %v621 = vld [vmem:[%s175 + $0xde0] sm:$0xff]
                %622 = vst [vmem:[%s176 + $0x6f0] sm:$0xff] %v621
                %v623 = vld [vmem:[%s175 + $0xde8] sm:$0xff]
                %624 = vst [vmem:[%s176 + $0x6f8] sm:$0xff] %v623
                %v625 = vld [vmem:[%s175 + $0xdf0] sm:$0xff]
                %626 = vst [vmem:[%s176 + $0x700] sm:$0xff] %v625
                %v627 = vld [vmem:[%s175 + $0xdf8] sm:$0xff]
                %628 = vst [vmem:[%s176 + $0x708] sm:$0xff] %v627
                %v629 = vld [vmem:[%s175 + $0xe00] sm:$0xff]
                %630 = vst [vmem:[%s176 + $0x710] sm:$0xff] %v629
                %v631 = vld [vmem:[%s175 + $0xe08] sm:$0xff]
                %632 = vst [vmem:[%s176 + $0x718] sm:$0xff] %v631
                %v633 = vld [vmem:[%s175 + $0xe40] sm:$0xff]
                %634 = vst [vmem:[%s176 + $0x720] sm:$0xff] %v633
                %v635 = vld [vmem:[%s175 + $0xe48] sm:$0xff]
                %636 = vst [vmem:[%s176 + $0x728] sm:$0xff] %v635
                %v637 = vld [vmem:[%s175 + $0xe50] sm:$0xff]
                %638 = vst [vmem:[%s176 + $0x730] sm:$0xff] %v637
                %v639 = vld [vmem:[%s175 + $0xe58] sm:$0xff]
                %640 = vst [vmem:[%s176 + $0x738] sm:$0xff] %v639
                %v641 = vld [vmem:[%s175 + $0xe60] sm:$0xff]
                %642 = vst [vmem:[%s176 + $0x740] sm:$0xff] %v641
                %v643 = vld [vmem:[%s175 + $0xe68] sm:$0xff]
                %644 = vst [vmem:[%s176 + $0x748] sm:$0xff] %v643
                %v645 = vld [vmem:[%s175 + $0xea0] sm:$0xff]
                %646 = vst [vmem:[%s176 + $0x750] sm:$0xff] %v645
                %v647 = vld [vmem:[%s175 + $0xea8] sm:$0xff]
                %648 = vst [vmem:[%s176 + $0x758] sm:$0xff] %v647
                %v649 = vld [vmem:[%s175 + $0xeb0] sm:$0xff]
                %650 = vst [vmem:[%s176 + $0x760] sm:$0xff] %v649
                %v651 = vld [vmem:[%s175 + $0xeb8] sm:$0xff]
                %652 = vst [vmem:[%s176 + $0x768] sm:$0xff] %v651
                %v653 = vld [vmem:[%s175 + $0xec0] sm:$0xff]
                %654 = vst [vmem:[%s176 + $0x770] sm:$0xff] %v653
                %v655 = vld [vmem:[%s175 + $0xec8] sm:$0xff]
                %656 = vst [vmem:[%s176 + $0x778] sm:$0xff] %v655
                %v657 = vld [vmem:[%s175 + $0xf00] sm:$0xff]
                %658 = vst [vmem:[%s176 + $0x780] sm:$0xff] %v657
                %v659 = vld [vmem:[%s175 + $0xf08] sm:$0xff]
                %660 = vst [vmem:[%s176 + $0x788] sm:$0xff] %v659
                %v661 = vld [vmem:[%s175 + $0xf10] sm:$0xff]
                %662 = vst [vmem:[%s176 + $0x790] sm:$0xff] %v661
                %v663 = vld [vmem:[%s175 + $0xf18] sm:$0xff]
                %664 = vst [vmem:[%s176 + $0x798] sm:$0xff] %v663
                %v665 = vld [vmem:[%s175 + $0xf20] sm:$0xff]
                %666 = vst [vmem:[%s176 + $0x7a0] sm:$0xff] %v665
                %v667 = vld [vmem:[%s175 + $0xf28] sm:$0xff]
                %668 = vst [vmem:[%s176 + $0x7a8] sm:$0xff] %v667
                %v669 = vld [vmem:[%s175 + $0xf60] sm:$0xff]
                %670 = vst [vmem:[%s176 + $0x7b0] sm:$0xff] %v669
                %v671 = vld [vmem:[%s175 + $0xf68] sm:$0xff]
                %672 = vst [vmem:[%s176 + $0x7b8] sm:$0xff] %v671
                %v673 = vld [vmem:[%s175 + $0xf70] sm:$0xff]
                %674 = vst [vmem:[%s176 + $0x7c0] sm:$0xff] %v673
                %v675 = vld [vmem:[%s175 + $0xf78] sm:$0xff]
                %676 = vst [vmem:[%s176 + $0x7c8] sm:$0xff] %v675
                %v677 = vld [vmem:[%s175 + $0xf80] sm:$0xff]
                %678 = vst [vmem:[%s176 + $0x7d0] sm:$0xff] %v677
                %v679 = vld [vmem:[%s175 + $0xf88] sm:$0xff]
                %680 = vst [vmem:[%s176 + $0x7d8] sm:$0xff] %v679
                %v681 = vld [vmem:[%s175 + $0xfc0] sm:$0xff]
                %682 = vst [vmem:[%s176 + $0x7e0] sm:$0xff] %v681
                %v683 = vld [vmem:[%s175 + $0xfc8] sm:$0xff]
                %684 = vst [vmem:[%s176 + $0x7e8] sm:$0xff] %v683
                %v685 = vld [vmem:[%s175 + $0xfd0] sm:$0xff]
                %686 = vst [vmem:[%s176 + $0x7f0] sm:$0xff] %v685
                %v687 = vld [vmem:[%s175 + $0xfd8] sm:$0xff]
                %688 = vst [vmem:[%s176 + $0x7f8] sm:$0xff] %v687
                %v689 = vld [vmem:[%s175 + $0xfe0] sm:$0xff]
                %690 = vst [vmem:[%s176 + $0x800] sm:$0xff] %v689
                %v691 = vld [vmem:[%s175 + $0xfe8] sm:$0xff]
                %692 = vst [vmem:[%s176 + $0x808] sm:$0xff] %v691
                %v693 = vld [vmem:[%s175 + $0x1020] sm:$0xff]
                %694 = vst [vmem:[%s176 + $0x810] sm:$0xff] %v693
                %v695 = vld [vmem:[%s175 + $0x1028] sm:$0xff]
                %696 = vst [vmem:[%s176 + $0x818] sm:$0xff] %v695
                %v697 = vld [vmem:[%s175 + $0x1030] sm:$0xff]
                %698 = vst [vmem:[%s176 + $0x820] sm:$0xff] %v697
                %v699 = vld [vmem:[%s175 + $0x1038] sm:$0xff]
                %700 = vst [vmem:[%s176 + $0x828] sm:$0xff] %v699
                %v701 = vld [vmem:[%s175 + $0x1040] sm:$0xff]
                %702 = vst [vmem:[%s176 + $0x830] sm:$0xff] %v701
                %v703 = vld [vmem:[%s175 + $0x1048] sm:$0xff]
                %704 = vst [vmem:[%s176 + $0x838] sm:$0xff] %v703
                %v705 = vld [vmem:[%s175 + $0x1080] sm:$0xff]
                %706 = vst [vmem:[%s176 + $0x840] sm:$0xff] %v705
                %v707 = vld [vmem:[%s175 + $0x1088] sm:$0xff]
                %708 = vst [vmem:[%s176 + $0x848] sm:$0xff] %v707
                %v709 = vld [vmem:[%s175 + $0x1090] sm:$0xff]
                %710 = vst [vmem:[%s176 + $0x850] sm:$0xff] %v709
                %v711 = vld [vmem:[%s175 + $0x1098] sm:$0xff]
                %712 = vst [vmem:[%s176 + $0x858] sm:$0xff] %v711
                %v713 = vld [vmem:[%s175 + $0x10a0] sm:$0xff]
                %714 = vst [vmem:[%s176 + $0x860] sm:$0xff] %v713
                %v715 = vld [vmem:[%s175 + $0x10a8] sm:$0xff]
                %716 = vst [vmem:[%s176 + $0x868] sm:$0xff] %v715
                %v717 = vld [vmem:[%s175 + $0x10e0] sm:$0xff]
                %718 = vst [vmem:[%s176 + $0x870] sm:$0xff] %v717
                %v719 = vld [vmem:[%s175 + $0x10e8] sm:$0xff]
                %720 = vst [vmem:[%s176 + $0x878] sm:$0xff] %v719
                %v721 = vld [vmem:[%s175 + $0x10f0] sm:$0xff]
                %722 = vst [vmem:[%s176 + $0x880] sm:$0xff] %v721
                %v723 = vld [vmem:[%s175 + $0x10f8] sm:$0xff]
                %724 = vst [vmem:[%s176 + $0x888] sm:$0xff] %v723
                %v725 = vld [vmem:[%s175 + $0x1100] sm:$0xff]
                %726 = vst [vmem:[%s176 + $0x890] sm:$0xff] %v725
                %v727 = vld [vmem:[%s175 + $0x1108] sm:$0xff]
                %728 = vst [vmem:[%s176 + $0x898] sm:$0xff] %v727
                %v729 = vld [vmem:[%s175 + $0x1140] sm:$0xff]
                %730 = vst [vmem:[%s176 + $0x8a0] sm:$0xff] %v729
                %v731 = vld [vmem:[%s175 + $0x1148] sm:$0xff]
                %732 = vst [vmem:[%s176 + $0x8a8] sm:$0xff] %v731
                %v733 = vld [vmem:[%s175 + $0x1150] sm:$0xff]
                %734 = vst [vmem:[%s176 + $0x8b0] sm:$0xff] %v733
                %v735 = vld [vmem:[%s175 + $0x1158] sm:$0xff]
                %736 = vst [vmem:[%s176 + $0x8b8] sm:$0xff] %v735
                %v737 = vld [vmem:[%s175 + $0x1160] sm:$0xff]
                %738 = vst [vmem:[%s176 + $0x8c0] sm:$0xff] %v737
                %v739 = vld [vmem:[%s175 + $0x1168] sm:$0xff]
                %740 = vst [vmem:[%s176 + $0x8c8] sm:$0xff] %v739
                %v741 = vld [vmem:[%s175 + $0x11a0] sm:$0xff]
                %742 = vst [vmem:[%s176 + $0x8d0] sm:$0xff] %v741
                %v743 = vld [vmem:[%s175 + $0x11a8] sm:$0xff]
                %744 = vst [vmem:[%s176 + $0x8d8] sm:$0xff] %v743
                %v745 = vld [vmem:[%s175 + $0x11b0] sm:$0xff]
                %746 = vst [vmem:[%s176 + $0x8e0] sm:$0xff] %v745
                %v747 = vld [vmem:[%s175 + $0x11b8] sm:$0xff]
                %748 = vst [vmem:[%s176 + $0x8e8] sm:$0xff] %v747
                %v749 = vld [vmem:[%s175 + $0x11c0] sm:$0xff]
                %750 = vst [vmem:[%s176 + $0x8f0] sm:$0xff] %v749
                %v751 = vld [vmem:[%s175 + $0x11c8] sm:$0xff]
                %752 = vst [vmem:[%s176 + $0x8f8] sm:$0xff] %v751
                %v753 = vld [vmem:[%s175 + $0x1200] sm:$0xff]
                %754 = vst [vmem:[%s176 + $0x900] sm:$0xff] %v753
                %v755 = vld [vmem:[%s175 + $0x1208] sm:$0xff]
                %756 = vst [vmem:[%s176 + $0x908] sm:$0xff] %v755
                %v757 = vld [vmem:[%s175 + $0x1210] sm:$0xff]
                %758 = vst [vmem:[%s176 + $0x910] sm:$0xff] %v757
                %v759 = vld [vmem:[%s175 + $0x1218] sm:$0xff]
                %760 = vst [vmem:[%s176 + $0x918] sm:$0xff] %v759
                %v761 = vld [vmem:[%s175 + $0x1220] sm:$0xff]
                %762 = vst [vmem:[%s176 + $0x920] sm:$0xff] %v761
                %v763 = vld [vmem:[%s175 + $0x1228] sm:$0xff]
                %764 = vst [vmem:[%s176 + $0x928] sm:$0xff] %v763
                %v765 = vld [vmem:[%s175 + $0x1260] sm:$0xff]
                %766 = vst [vmem:[%s176 + $0x930] sm:$0xff] %v765
                %v767 = vld [vmem:[%s175 + $0x1268] sm:$0xff]
                %768 = vst [vmem:[%s176 + $0x938] sm:$0xff] %v767
                %v769 = vld [vmem:[%s175 + $0x1270] sm:$0xff]
                %770 = vst [vmem:[%s176 + $0x940] sm:$0xff] %v769
                %v771 = vld [vmem:[%s175 + $0x1278] sm:$0xff]
                %772 = vst [vmem:[%s176 + $0x948] sm:$0xff] %v771
                %v773 = vld [vmem:[%s175 + $0x1280] sm:$0xff]
                %774 = vst [vmem:[%s176 + $0x950] sm:$0xff] %v773
                %v775 = vld [vmem:[%s175 + $0x1288] sm:$0xff]
                %776 = vst [vmem:[%s176 + $0x958] sm:$0xff] %v775
                %v777 = vld [vmem:[%s175 + $0x12c0] sm:$0xff]
                %778 = vst [vmem:[%s176 + $0x960] sm:$0xff] %v777
                %v779 = vld [vmem:[%s175 + $0x12c8] sm:$0xff]
                %780 = vst [vmem:[%s176 + $0x968] sm:$0xff] %v779
                %v781 = vld [vmem:[%s175 + $0x12d0] sm:$0xff]
                %782 = vst [vmem:[%s176 + $0x970] sm:$0xff] %v781
                %v783 = vld [vmem:[%s175 + $0x12d8] sm:$0xff]
                %784 = vst [vmem:[%s176 + $0x978] sm:$0xff] %v783
                %v785 = vld [vmem:[%s175 + $0x12e0] sm:$0xff]
                %786 = vst [vmem:[%s176 + $0x980] sm:$0xff] %v785
                %v787 = vld [vmem:[%s175 + $0x12e8] sm:$0xff]
                %788 = vst [vmem:[%s176 + $0x988] sm:$0xff] %v787
                %v789 = vld [vmem:[%s175 + $0x1320] sm:$0xff]
                %790 = vst [vmem:[%s176 + $0x990] sm:$0xff] %v789
                %v791 = vld [vmem:[%s175 + $0x1328] sm:$0xff]
                %792 = vst [vmem:[%s176 + $0x998] sm:$0xff] %v791
                %v793 = vld [vmem:[%s175 + $0x1330] sm:$0xff]
                %794 = vst [vmem:[%s176 + $0x9a0] sm:$0xff] %v793
                %v795 = vld [vmem:[%s175 + $0x1338] sm:$0xff]
                %796 = vst [vmem:[%s176 + $0x9a8] sm:$0xff] %v795
                %v797 = vld [vmem:[%s175 + $0x1340] sm:$0xff]
                %798 = vst [vmem:[%s176 + $0x9b0] sm:$0xff] %v797
                %v799 = vld [vmem:[%s175 + $0x1348] sm:$0xff]
                %800 = vst [vmem:[%s176 + $0x9b8] sm:$0xff] %v799
                %v801 = vld [vmem:[%s175 + $0x1380] sm:$0xff]
                %802 = vst [vmem:[%s176 + $0x9c0] sm:$0xff] %v801
                %v803 = vld [vmem:[%s175 + $0x1388] sm:$0xff]
                %804 = vst [vmem:[%s176 + $0x9c8] sm:$0xff] %v803
                %v805 = vld [vmem:[%s175 + $0x1390] sm:$0xff]
                %806 = vst [vmem:[%s176 + $0x9d0] sm:$0xff] %v805
                %v807 = vld [vmem:[%s175 + $0x1398] sm:$0xff]
                %808 = vst [vmem:[%s176 + $0x9d8] sm:$0xff] %v807
                %v809 = vld [vmem:[%s175 + $0x13a0] sm:$0xff]
                %810 = vst [vmem:[%s176 + $0x9e0] sm:$0xff] %v809
                %v811 = vld [vmem:[%s175 + $0x13a8] sm:$0xff]
                %812 = vst [vmem:[%s176 + $0x9e8] sm:$0xff] %v811
                %v813 = vld [vmem:[%s175 + $0x13e0] sm:$0xff]
                %814 = vst [vmem:[%s176 + $0x9f0] sm:$0xff] %v813
                %v815 = vld [vmem:[%s175 + $0x13e8] sm:$0xff]
                %816 = vst [vmem:[%s176 + $0x9f8] sm:$0xff] %v815
                %v817 = vld [vmem:[%s175 + $0x13f0] sm:$0xff]
                %818 = vst [vmem:[%s176 + $0xa00] sm:$0xff] %v817
                %v819 = vld [vmem:[%s175 + $0x13f8] sm:$0xff]
                %820 = vst [vmem:[%s176 + $0xa08] sm:$0xff] %v819
                %v821 = vld [vmem:[%s175 + $0x1400] sm:$0xff]
                %822 = vst [vmem:[%s176 + $0xa10] sm:$0xff] %v821
                %v823 = vld [vmem:[%s175 + $0x1408] sm:$0xff]
                %824 = vst [vmem:[%s176 + $0xa18] sm:$0xff] %v823
                %v825 = vld [vmem:[%s175 + $0x1440] sm:$0xff]
                %826 = vst [vmem:[%s176 + $0xa20] sm:$0xff] %v825
                %v827 = vld [vmem:[%s175 + $0x1448] sm:$0xff]
                %828 = vst [vmem:[%s176 + $0xa28] sm:$0xff] %v827
                %v829 = vld [vmem:[%s175 + $0x1450] sm:$0xff]
                %830 = vst [vmem:[%s176 + $0xa30] sm:$0xff] %v829
                %v831 = vld [vmem:[%s175 + $0x1458] sm:$0xff]
                %832 = vst [vmem:[%s176 + $0xa38] sm:$0xff] %v831
                %v833 = vld [vmem:[%s175 + $0x1460] sm:$0xff]
                %834 = vst [vmem:[%s176 + $0xa40] sm:$0xff] %v833
                %v835 = vld [vmem:[%s175 + $0x1468] sm:$0xff]
                %836 = vst [vmem:[%s176 + $0xa48] sm:$0xff] %v835
                %v837 = vld [vmem:[%s175 + $0x14a0] sm:$0xff]
                %838 = vst [vmem:[%s176 + $0xa50] sm:$0xff] %v837
                %v839 = vld [vmem:[%s175 + $0x14a8] sm:$0xff]
                %840 = vst [vmem:[%s176 + $0xa58] sm:$0xff] %v839
                %v841 = vld [vmem:[%s175 + $0x14b0] sm:$0xff]
                %842 = vst [vmem:[%s176 + $0xa60] sm:$0xff] %v841
                %v843 = vld [vmem:[%s175 + $0x14b8] sm:$0xff]
                %844 = vst [vmem:[%s176 + $0xa68] sm:$0xff] %v843
                %v845 = vld [vmem:[%s175 + $0x14c0] sm:$0xff]
                %846 = vst [vmem:[%s176 + $0xa70] sm:$0xff] %v845
                %v847 = vld [vmem:[%s175 + $0x14c8] sm:$0xff]
                %848 = vst [vmem:[%s176 + $0xa78] sm:$0xff] %v847
                %v849 = vld [vmem:[%s175 + $0x1500] sm:$0xff]
                %850 = vst [vmem:[%s176 + $0xa80] sm:$0xff] %v849
                %v851 = vld [vmem:[%s175 + $0x1508] sm:$0xff]
                %852 = vst [vmem:[%s176 + $0xa88] sm:$0xff] %v851
                %v853 = vld [vmem:[%s175 + $0x1510] sm:$0xff]
                %854 = vst [vmem:[%s176 + $0xa90] sm:$0xff] %v853
                %v855 = vld [vmem:[%s175 + $0x1518] sm:$0xff]
                %856 = vst [vmem:[%s176 + $0xa98] sm:$0xff] %v855
                %v857 = vld [vmem:[%s175 + $0x1520] sm:$0xff]
                %858 = vst [vmem:[%s176 + $0xaa0] sm:$0xff] %v857
                %v859 = vld [vmem:[%s175 + $0x1528] sm:$0xff]
                %860 = vst [vmem:[%s176 + $0xaa8] sm:$0xff] %v859
                %v861 = vld [vmem:[%s175 + $0x1560] sm:$0xff]
                %862 = vst [vmem:[%s176 + $0xab0] sm:$0xff] %v861
                %v863 = vld [vmem:[%s175 + $0x1568] sm:$0xff]
                %864 = vst [vmem:[%s176 + $0xab8] sm:$0xff] %v863
                %v865 = vld [vmem:[%s175 + $0x1570] sm:$0xff]
                %866 = vst [vmem:[%s176 + $0xac0] sm:$0xff] %v865
                %v867 = vld [vmem:[%s175 + $0x1578] sm:$0xff]
                %868 = vst [vmem:[%s176 + $0xac8] sm:$0xff] %v867
                %v869 = vld [vmem:[%s175 + $0x1580] sm:$0xff]
                %870 = vst [vmem:[%s176 + $0xad0] sm:$0xff] %v869
                %v871 = vld [vmem:[%s175 + $0x1588] sm:$0xff]
                %872 = vst [vmem:[%s176 + $0xad8] sm:$0xff] %v871
                %v873 = vld [vmem:[%s175 + $0x15c0] sm:$0xff]
                %874 = vst [vmem:[%s176 + $0xae0] sm:$0xff] %v873
                %v875 = vld [vmem:[%s175 + $0x15c8] sm:$0xff]
                %876 = vst [vmem:[%s176 + $0xae8] sm:$0xff] %v875
                %v877 = vld [vmem:[%s175 + $0x15d0] sm:$0xff]
                %878 = vst [vmem:[%s176 + $0xaf0] sm:$0xff] %v877
                %v879 = vld [vmem:[%s175 + $0x15d8] sm:$0xff]
                %880 = vst [vmem:[%s176 + $0xaf8] sm:$0xff] %v879
                %v881 = vld [vmem:[%s175 + $0x15e0] sm:$0xff]
                %882 = vst [vmem:[%s176 + $0xb00] sm:$0xff] %v881
                %v883 = vld [vmem:[%s175 + $0x15e8] sm:$0xff]
                %884 = vst [vmem:[%s176 + $0xb08] sm:$0xff] %v883
                %v885 = vld [vmem:[%s175 + $0x1620] sm:$0xff]
                %886 = vst [vmem:[%s176 + $0xb10] sm:$0xff] %v885
                %v887 = vld [vmem:[%s175 + $0x1628] sm:$0xff]
                %888 = vst [vmem:[%s176 + $0xb18] sm:$0xff] %v887
                %v889 = vld [vmem:[%s175 + $0x1630] sm:$0xff]
                %890 = vst [vmem:[%s176 + $0xb20] sm:$0xff] %v889
                %v891 = vld [vmem:[%s175 + $0x1638] sm:$0xff]
                %892 = vst [vmem:[%s176 + $0xb28] sm:$0xff] %v891
                %v893 = vld [vmem:[%s175 + $0x1640] sm:$0xff]
                %894 = vst [vmem:[%s176 + $0xb30] sm:$0xff] %v893
                %v895 = vld [vmem:[%s175 + $0x1648] sm:$0xff]
                %896 = vst [vmem:[%s176 + $0xb38] sm:$0xff] %v895
                %v897 = vld [vmem:[%s175 + $0x1680] sm:$0xff]
                %898 = vst [vmem:[%s176 + $0xb40] sm:$0xff] %v897
                %v899 = vld [vmem:[%s175 + $0x1688] sm:$0xff]
                %900 = vst [vmem:[%s176 + $0xb48] sm:$0xff] %v899
                %v901 = vld [vmem:[%s175 + $0x1690] sm:$0xff]
                %902 = vst [vmem:[%s176 + $0xb50] sm:$0xff] %v901
                %v903 = vld [vmem:[%s175 + $0x1698] sm:$0xff]
                %904 = vst [vmem:[%s176 + $0xb58] sm:$0xff] %v903
                %v905 = vld [vmem:[%s175 + $0x16a0] sm:$0xff]
                %906 = vst [vmem:[%s176 + $0xb60] sm:$0xff] %v905
                %v907 = vld [vmem:[%s175 + $0x16a8] sm:$0xff]
                %908 = vst [vmem:[%s176 + $0xb68] sm:$0xff] %v907
                %v909 = vld [vmem:[%s175 + $0x16e0] sm:$0xff]
                %910 = vst [vmem:[%s176 + $0xb70] sm:$0xff] %v909
                %v911 = vld [vmem:[%s175 + $0x16e8] sm:$0xff]
                %912 = vst [vmem:[%s176 + $0xb78] sm:$0xff] %v911
                %v913 = vld [vmem:[%s175 + $0x16f0] sm:$0xff]
                %914 = vst [vmem:[%s176 + $0xb80] sm:$0xff] %v913
                %v915 = vld [vmem:[%s175 + $0x16f8] sm:$0xff]
                %916 = vst [vmem:[%s176 + $0xb88] sm:$0xff] %v915
                %v917 = vld [vmem:[%s175 + $0x1700] sm:$0xff]
                %918 = vst [vmem:[%s176 + $0xb90] sm:$0xff] %v917
                %v919 = vld [vmem:[%s175 + $0x1708] sm:$0xff]
                %920 = vst [vmem:[%s176 + $0xb98] sm:$0xff] %v919
                %v921 = vld [vmem:[%s175 + $0x1740] sm:$0xff]
                %922 = vst [vmem:[%s176 + $0xba0] sm:$0xff] %v921
                %v923 = vld [vmem:[%s175 + $0x1748] sm:$0xff]
                %924 = vst [vmem:[%s176 + $0xba8] sm:$0xff] %v923
                %v925 = vld [vmem:[%s175 + $0x1750] sm:$0xff]
                %926 = vst [vmem:[%s176 + $0xbb0] sm:$0xff] %v925
                %v927 = vld [vmem:[%s175 + $0x1758] sm:$0xff]
                %928 = vst [vmem:[%s176 + $0xbb8] sm:$0xff] %v927
                %v929 = vld [vmem:[%s175 + $0x1760] sm:$0xff]
                %930 = vst [vmem:[%s176 + $0xbc0] sm:$0xff] %v929
                %v931 = vld [vmem:[%s175 + $0x1768] sm:$0xff]
                %932 = vst [vmem:[%s176 + $0xbc8] sm:$0xff] %v931
                %v933 = vld [vmem:[%s175 + $0x17a0] sm:$0xff]
                %934 = vst [vmem:[%s176 + $0xbd0] sm:$0xff] %v933
                %v935 = vld [vmem:[%s175 + $0x17a8] sm:$0xff]
                %936 = vst [vmem:[%s176 + $0xbd8] sm:$0xff] %v935
                %v937 = vld [vmem:[%s175 + $0x17b0] sm:$0xff]
                %938 = vst [vmem:[%s176 + $0xbe0] sm:$0xff] %v937
                %v939 = vld [vmem:[%s175 + $0x17b8] sm:$0xff]
                %940 = vst [vmem:[%s176 + $0xbe8] sm:$0xff] %v939
                %v941 = vld [vmem:[%s175 + $0x17c0] sm:$0xff]
                %942 = vst [vmem:[%s176 + $0xbf0] sm:$0xff] %v941
                %v943 = vld [vmem:[%s175 + $0x17c8] sm:$0xff]
                %944 = vst [vmem:[%s176 + $0xbf8] sm:$0xff] %v943
                %v945 = vld [vmem:[%s175 + $0x1800] sm:$0xff]
                %946 = vst [vmem:[%s176 + $0xc00] sm:$0xff] %v945
                %v947 = vld [vmem:[%s175 + $0x1808] sm:$0xff]
                %948 = vst [vmem:[%s176 + $0xc08] sm:$0xff] %v947
                %v949 = vld [vmem:[%s175 + $0x1810] sm:$0xff]
                %950 = vst [vmem:[%s176 + $0xc10] sm:$0xff] %v949
                %v951 = vld [vmem:[%s175 + $0x1818] sm:$0xff]
                %952 = vst [vmem:[%s176 + $0xc18] sm:$0xff] %v951
                %v953 = vld [vmem:[%s175 + $0x1820] sm:$0xff]
                %954 = vst [vmem:[%s176 + $0xc20] sm:$0xff] %v953
                %v955 = vld [vmem:[%s175 + $0x1828] sm:$0xff]
                %956 = vst [vmem:[%s176 + $0xc28] sm:$0xff] %v955
                %v957 = vld [vmem:[%s175 + $0x1860] sm:$0xff]
                %958 = vst [vmem:[%s176 + $0xc30] sm:$0xff] %v957
                %v959 = vld [vmem:[%s175 + $0x1868] sm:$0xff]
                %960 = vst [vmem:[%s176 + $0xc38] sm:$0xff] %v959
                %v961 = vld [vmem:[%s175 + $0x1870] sm:$0xff]
                %962 = vst [vmem:[%s176 + $0xc40] sm:$0xff] %v961
                %v963 = vld [vmem:[%s175 + $0x1878] sm:$0xff]
                %964 = vst [vmem:[%s176 + $0xc48] sm:$0xff] %v963
                %v965 = vld [vmem:[%s175 + $0x1880] sm:$0xff]
                %966 = vst [vmem:[%s176 + $0xc50] sm:$0xff] %v965
                %v967 = vld [vmem:[%s175 + $0x1888] sm:$0xff]
                %968 = vst [vmem:[%s176 + $0xc58] sm:$0xff] %v967
                %v969 = vld [vmem:[%s175 + $0x18c0] sm:$0xff]
                %970 = vst [vmem:[%s176 + $0xc60] sm:$0xff] %v969
                %v971 = vld [vmem:[%s175 + $0x18c8] sm:$0xff]
                %972 = vst [vmem:[%s176 + $0xc68] sm:$0xff] %v971
                %v973 = vld [vmem:[%s175 + $0x18d0] sm:$0xff]
                %974 = vst [vmem:[%s176 + $0xc70] sm:$0xff] %v973
                %v975 = vld [vmem:[%s175 + $0x18d8] sm:$0xff]
                %976 = vst [vmem:[%s176 + $0xc78] sm:$0xff] %v975
                %v977 = vld [vmem:[%s175 + $0x18e0] sm:$0xff]
                %978 = vst [vmem:[%s176 + $0xc80] sm:$0xff] %v977
                %v979 = vld [vmem:[%s175 + $0x18e8] sm:$0xff]
                %980 = vst [vmem:[%s176 + $0xc88] sm:$0xff] %v979
                %v981 = vld [vmem:[%s175 + $0x1920] sm:$0xff]
                %982 = vst [vmem:[%s176 + $0xc90] sm:$0xff] %v981
                %v983 = vld [vmem:[%s175 + $0x1928] sm:$0xff]
                %984 = vst [vmem:[%s176 + $0xc98] sm:$0xff] %v983
                %v985 = vld [vmem:[%s175 + $0x1930] sm:$0xff]
                %986 = vst [vmem:[%s176 + $0xca0] sm:$0xff] %v985
                %v987 = vld [vmem:[%s175 + $0x1938] sm:$0xff]
                %988 = vst [vmem:[%s176 + $0xca8] sm:$0xff] %v987
                %v989 = vld [vmem:[%s175 + $0x1940] sm:$0xff]
                %990 = vst [vmem:[%s176 + $0xcb0] sm:$0xff] %v989
                %v991 = vld [vmem:[%s175 + $0x1948] sm:$0xff]
                %992 = vst [vmem:[%s176 + $0xcb8] sm:$0xff] %v991
                %v993 = vld [vmem:[%s175 + $0x1980] sm:$0xff]
                %994 = vst [vmem:[%s176 + $0xcc0] sm:$0xff] %v993
                %v995 = vld [vmem:[%s175 + $0x1988] sm:$0xff]
                %996 = vst [vmem:[%s176 + $0xcc8] sm:$0xff] %v995
                %v997 = vld [vmem:[%s175 + $0x1990] sm:$0xff]
                %998 = vst [vmem:[%s176 + $0xcd0] sm:$0xff] %v997
                %v999 = vld [vmem:[%s175 + $0x1998] sm:$0xff]
                %1000 = vst [vmem:[%s176 + $0xcd8] sm:$0xff] %v999
                %v1001 = vld [vmem:[%s175 + $0x19a0] sm:$0xff]
                %1002 = vst [vmem:[%s176 + $0xce0] sm:$0xff] %v1001
                %v1003 = vld [vmem:[%s175 + $0x19a8] sm:$0xff]
                %1004 = vst [vmem:[%s176 + $0xce8] sm:$0xff] %v1003
                %v1005 = vld [vmem:[%s175 + $0x19e0] sm:$0xff]
                %1006 = vst [vmem:[%s176 + $0xcf0] sm:$0xff] %v1005
                %v1007 = vld [vmem:[%s175 + $0x19e8] sm:$0xff]
                %1008 = vst [vmem:[%s176 + $0xcf8] sm:$0xff] %v1007
                %v1009 = vld [vmem:[%s175 + $0x19f0] sm:$0xff]
                %1010 = vst [vmem:[%s176 + $0xd00] sm:$0xff] %v1009
                %v1011 = vld [vmem:[%s175 + $0x19f8] sm:$0xff]
                %1012 = vst [vmem:[%s176 + $0xd08] sm:$0xff] %v1011
                %v1013 = vld [vmem:[%s175 + $0x1a00] sm:$0xff]
                %1014 = vst [vmem:[%s176 + $0xd10] sm:$0xff] %v1013
                %v1015 = vld [vmem:[%s175 + $0x1a08] sm:$0xff]
                %1016 = vst [vmem:[%s176 + $0xd18] sm:$0xff] %v1015
                %v1017 = vld [vmem:[%s175 + $0x1a40] sm:$0xff]
                %1018 = vst [vmem:[%s176 + $0xd20] sm:$0xff] %v1017
                %v1019 = vld [vmem:[%s175 + $0x1a48] sm:$0xff]
                %1020 = vst [vmem:[%s176 + $0xd28] sm:$0xff] %v1019
                %v1021 = vld [vmem:[%s175 + $0x1a50] sm:$0xff]
                %1022 = vst [vmem:[%s176 + $0xd30] sm:$0xff] %v1021
                %v1023 = vld [vmem:[%s175 + $0x1a58] sm:$0xff]
                %1024 = vst [vmem:[%s176 + $0xd38] sm:$0xff] %v1023
                %v1025 = vld [vmem:[%s175 + $0x1a60] sm:$0xff]
                %1026 = vst [vmem:[%s176 + $0xd40] sm:$0xff] %v1025
                %v1027 = vld [vmem:[%s175 + $0x1a68] sm:$0xff]
                %1028 = vst [vmem:[%s176 + $0xd48] sm:$0xff] %v1027
                %v1029 = vld [vmem:[%s175 + $0x1aa0] sm:$0xff]
                %1030 = vst [vmem:[%s176 + $0xd50] sm:$0xff] %v1029
                %v1031 = vld [vmem:[%s175 + $0x1aa8] sm:$0xff]
                %1032 = vst [vmem:[%s176 + $0xd58] sm:$0xff] %v1031
                %v1033 = vld [vmem:[%s175 + $0x1ab0] sm:$0xff]
                %1034 = vst [vmem:[%s176 + $0xd60] sm:$0xff] %v1033
                %v1035 = vld [vmem:[%s175 + $0x1ab8] sm:$0xff]
                %1036 = vst [vmem:[%s176 + $0xd68] sm:$0xff] %v1035
                %v1037 = vld [vmem:[%s175 + $0x1ac0] sm:$0xff]
                %1038 = vst [vmem:[%s176 + $0xd70] sm:$0xff] %v1037
                %v1039 = vld [vmem:[%s175 + $0x1ac8] sm:$0xff]
                %1040 = vst [vmem:[%s176 + $0xd78] sm:$0xff] %v1039
              $region37: #{smollm2_mlp_packed.1} parent=31 // loop_footer
                %s174 = sadd.s32 1, %s170
              $region38: #{smollm2_mlp_packed.1} parent=31 // loop_footer_branch
                %169 = sbr.rel target = $region34
              $region39: #{smollm2_mlp_packed.1} parent=31 // loop_exit
                _
            $region32: #{smollm2_mlp_packed.1} parent=27 // pred_fallthru
              _
            // Predicated region
            $region40: #{smollm2_mlp_packed.1} parent=27 // pred_check
              _
            $region41: #{smollm2_mlp_packed.1} parent=27 // pred_check_branch
              %1042 = sbr.rel target = $region43
            $region42: #{smollm2_mlp_packed.1} parent=27 // pred_region
              _
            $region43: #{smollm2_mlp_packed.1} parent=27 // pred_fallthru
              _
          $region28: #{smollm2_mlp_packed.1} parent=23 // pred_fallthru
            _
          %1043 = vnop
        $region24: #{smollm2_mlp_packed.1} parent=19 // pred_fallthru
          _
        // Predicated region
        $region44: #{smollm2_mlp_packed.1} parent=19 // pred_check
          %p1044 = pneg %p94
        $region45: #{smollm2_mlp_packed.1} parent=19 // pred_check_branch
          %1046 = sbr.rel (%p1044) target = $region47
        $region46: #{smollm2_mlp_packed.1} parent=19 // pred_region
          %s1047 = smul.u32 96, %s18
          %p1048 = scmp.lt.s32.totalorder %s1047, 191
          %s1049 = scalar_select %p1048, %s1047, 191
          %s1050 = smul.addr %s1049, 5
          %s1051 = smul.addr %s1050, 4
          %s1052 = scalar_lea.vmem %s2, %s1051
          %s1053 = smul.u32 96, %s18
        $region47: #{smollm2_mlp_packed.1} parent=19 // pred_fallthru
          _
      $region20: #{smollm2_mlp_packed.1} parent=5 // pred_fallthru
        _
      %p1054 = scmp.le.s32.totalorder 1, %s10
      %p1055 = scmp.lt.s32.totalorder %s10, 3
      %p1056 = pnand %p1054, %p1055
      %p1057 = pneg %p1056
      // Predicated region
      $region48: #{smollm2_mlp_packed.1} parent=5 // pred_check
        _
      $region49: #{smollm2_mlp_packed.1} parent=5 // pred_check_branch
        %1059 = sbr.rel (%p1056) target = $region51
      $region50: #{smollm2_mlp_packed.1} parent=5 // pred_region
        %s1060 = ssub.s32 %s10, 1
        %s1061 = sand.u32 %s61, 1
        %s1062 = sand.u32 %s61, 1
        %s1063 = smul.addr %s1062, 3456
        %s1064 = scalar_lea.vmem [#allocation2], %s1063
        // Predicated region
        $region52: #{smollm2_mlp_packed.1} parent=50 // pred_check
          %p1065 = pneg %p74
        $region53: #{smollm2_mlp_packed.1} parent=50 // pred_check_branch
          %1067 = sbr.rel (%p1065) target = $region55
        $region54: #{smollm2_mlp_packed.1} parent=50 // pred_region
          _
        $region55: #{smollm2_mlp_packed.1} parent=50 // pred_fallthru
          _
        %s1068 = smul.u32 2, %s19
        %p1069 = scmp.lt.s32.totalorder %s1068, 1
        %s1070 = scalar_select %p1069, %s1068, 1
        %s1071 = smul.addr %s1070, 5
        %s1072 = smul.addr %s1071, 8
        %s1073 = scalar_lea.vmem %s0, %s1072
        %p1074 = pneg %p48
        %p1075 = pneg %p45
        %s1076 = sand.u32 %s61, 1
        %s1077 = sand.u32 %s61, 1
        %s1078 = smul.addr %s1077, 3456
        %s1079 = scalar_lea.vmem [#allocation2], %s1078
        %p1080 = pneg %p74
        %p1081 = pneg %p71
        %s1082 = smul.u32 96, %s20
        %p1083 = scmp.lt.s32.totalorder %s1082, 191
        %s1084 = scalar_select %p1083, %s1082, 191
        %s1085 = smul.addr %s1084, 5
        %s1086 = smul.addr %s1085, 4
        %s1087 = scalar_lea.vmem %s2, %s1086
        %p1088 = pneg %p100
        %p1089 = pneg %p97
        %p1090 = pneg %p126
        %p1091 = pneg %p123
        %s1092 = smul.u32 2, %s19
        %p1093 = scmp.lt.s32.totalorder %s1092, 1
        %s1094 = scalar_select %p1093, %s1092, 1
        %s1095 = smul.addr %s1094, 5
        %s1096 = smul.addr %s1095, 8
        %s1097 = scalar_lea.vmem %s0, %s1096
        %s1098 = smul.u32 2, %s19
        %s1099 = smul.u32 12, %s20
        %s1100 = smul.u32 96, %s20
        %p1101 = scmp.lt.s32.totalorder %s1100, 191
        %s1102 = scalar_select %p1101, %s1100, 191
        %s1103 = smul.addr %s1102, 5
        %s1104 = smul.addr %s1103, 4
        %s1105 = scalar_lea.vmem %s2, %s1104
        %s1106 = smul.u32 96, %s20
        %s1107 = smul.u32 2, %s19
        %p1109 = scmp.eq.s32.totalorder %s20, 0
        // Predicated region
        $region56: #{smollm2_mlp_packed.1} parent=50 // pred_check
          %p1110 = pneg %p1109
        $region57: #{smollm2_mlp_packed.1} parent=50 // pred_check_branch
          %1112 = sbr.rel (%p1110) target = $region59
        $region58: #{smollm2_mlp_packed.1} parent=50 // pred_region
          %1113 = vst [vmem:[#allocation3] sm:$0xff] 0.0
          %1114 = vst [vmem:[#allocation3 + $0x8] sm:$0xff] 0.0
          %1115 = vst [vmem:[#allocation3 + $0x10] sm:$0xff] 0.0
          %1116 = vst [vmem:[#allocation3 + $0x18] sm:$0xff] 0.0
          %vm1117 = vcmask 523264
          %1118 = vst.msk [vmem:[#allocation3 + $0x20] sm:$0xff] %vm1117, 0.0
          %1119 = vst [vmem:[#allocation3 + $0x28] sm:$0xff] 0.0
          %1120 = vst [vmem:[#allocation3 + $0x30] sm:$0xff] 0.0
          %1121 = vst [vmem:[#allocation3 + $0x38] sm:$0xff] 0.0
          %1122 = vst [vmem:[#allocation3 + $0x40] sm:$0xff] 0.0
          %1123 = vst.msk [vmem:[#allocation3 + $0x48] sm:$0xff] %vm1117, 0.0
        $region59: #{smollm2_mlp_packed.1} parent=50 // pred_fallthru
          _
        %v1124 = vld [vmem:[%s1097] sm:$0xff]
        %v1125 = vld [vmem:[%s1097 + $0x8] sm:$0xff]
        %v1126 = vld [vmem:[%s1097 + $0x10] sm:$0xff]
        %v1127 = vld [vmem:[%s1097 + $0x18] sm:$0xff]
        %v1128 = vld [vmem:[%s1097 + $0x20] sm:$0xff]
        %v1129 = vld [vmem:[%s1097 + $0x28] sm:$0xff]
        %v1130 = vld [vmem:[%s1097 + $0x30] sm:$0xff]
        %v1131 = vld [vmem:[%s1097 + $0x38] sm:$0xff]
        %v1132 = vld [vmem:[%s1097 + $0x40] sm:$0xff]
        %v1133 = vld [vmem:[%s1097 + $0x48] sm:$0xff]
        %v1134 = vpack.c.bf16 %v1129, %v1124
        %v1135 = vpack.c.bf16 %v1130, %v1125
        %v1136 = vpack.c.bf16 %v1131, %v1126
        %v1137 = vpack.c.bf16 %v1132, %v1127
        %v1138 = vpack.c.bf16 %v1133, %v1128
        %v1139 = vld [vmem:[%s1064] sm:$0xff]
        %v1140 = vld [vmem:[%s1064 + $0x8] sm:$0xff]
        %v1141 = vld [vmem:[%s1064 + $0x10] sm:$0xff]
        %v1142 = vld [vmem:[%s1064 + $0x18] sm:$0xff]
        %v1143 = vld [vmem:[%s1064 + $0x20] sm:$0xff]
        %v1144 = vld [vmem:[%s1064 + $0x28] sm:$0xff]
        %v1145 = vld [vmem:[%s1064 + $0x30] sm:$0xff]
        %v1146 = vld [vmem:[%s1064 + $0x38] sm:$0xff]
        %v1147 = vld [vmem:[%s1064 + $0x40] sm:$0xff]
        %v1148 = vld [vmem:[%s1064 + $0x48] sm:$0xff]
        %v1149 = vld [vmem:[%s1064 + $0x50] sm:$0xff]
        %v1150 = vld [vmem:[%s1064 + $0x58] sm:$0xff]
        %v1151 = vld [vmem:[%s1064 + $0x60] sm:$0xff]
        %v1152 = vld [vmem:[%s1064 + $0x68] sm:$0xff]
        %v1153 = vld [vmem:[%s1064 + $0x70] sm:$0xff]
        %v1154 = vld [vmem:[%s1064 + $0x78] sm:$0xff]
        %v1155 = vld [vmem:[%s1064 + $0x80] sm:$0xff]
        %v1156 = vld [vmem:[%s1064 + $0x88] sm:$0xff]
        %v1157 = vld [vmem:[%s1064 + $0x90] sm:$0xff]
        %v1158 = vld [vmem:[%s1064 + $0x98] sm:$0xff]
        %v1159 = vld [vmem:[%s1064 + $0xa0] sm:$0xff]
        %v1160 = vld [vmem:[%s1064 + $0xa8] sm:$0xff]
        %v1161 = vld [vmem:[%s1064 + $0xb0] sm:$0xff]
        %v1162 = vld [vmem:[%s1064 + $0xb8] sm:$0xff]
        %v1163 = vld [vmem:[%s1064 + $0xc0] sm:$0xff]
        %v1164 = vld [vmem:[%s1064 + $0xc8] sm:$0xff]
        %v1165 = vld [vmem:[%s1064 + $0xd0] sm:$0xff]
        %v1166 = vld [vmem:[%s1064 + $0xd8] sm:$0xff]
        %v1167 = vld [vmem:[%s1064 + $0xe0] sm:$0xff]
        %v1168 = vld [vmem:[%s1064 + $0xe8] sm:$0xff]
        %v1169 = vld [vmem:[%s1064 + $0xf0] sm:$0xff]
        %v1170 = vld [vmem:[%s1064 + $0xf8] sm:$0xff]
        %v1171 = vld [vmem:[%s1064 + $0x100] sm:$0xff]
        %v1172 = vld [vmem:[%s1064 + $0x108] sm:$0xff]
        %v1173 = vld [vmem:[%s1064 + $0x110] sm:$0xff]
        %v1174 = vld [vmem:[%s1064 + $0x118] sm:$0xff]
        %v1175 = vld [vmem:[%s1064 + $0x120] sm:$0xff]
        %v1176 = vld [vmem:[%s1064 + $0x128] sm:$0xff]
        %v1177 = vld [vmem:[%s1064 + $0x130] sm:$0xff]
        %v1178 = vld [vmem:[%s1064 + $0x138] sm:$0xff]
        %v1179 = vld [vmem:[%s1064 + $0x140] sm:$0xff]
        %v1180 = vld [vmem:[%s1064 + $0x148] sm:$0xff]
        %v1181 = vld [vmem:[%s1064 + $0x150] sm:$0xff]
        %v1182 = vld [vmem:[%s1064 + $0x158] sm:$0xff]
        %v1183 = vld [vmem:[%s1064 + $0x160] sm:$0xff]
        %v1184 = vld [vmem:[%s1064 + $0x168] sm:$0xff]
        %v1185 = vld [vmem:[%s1064 + $0x170] sm:$0xff]
        %v1186 = vld [vmem:[%s1064 + $0x178] sm:$0xff]
        %v1187 = vld [vmem:[%s1064 + $0x180] sm:$0xff]
        %v1188 = vld [vmem:[%s1064 + $0x188] sm:$0xff]
        %v1189 = vld [vmem:[%s1064 + $0x190] sm:$0xff]
        %v1190 = vld [vmem:[%s1064 + $0x198] sm:$0xff]
        %v1191 = vld [vmem:[%s1064 + $0x1a0] sm:$0xff]
        %v1192 = vld [vmem:[%s1064 + $0x1a8] sm:$0xff]
        %v1193 = vld [vmem:[%s1064 + $0x1b0] sm:$0xff]
        %v1194 = vld [vmem:[%s1064 + $0x1b8] sm:$0xff]
        %v1195 = vld [vmem:[%s1064 + $0x1c0] sm:$0xff]
        %v1196 = vld [vmem:[%s1064 + $0x1c8] sm:$0xff]
        %v1197 = vld [vmem:[%s1064 + $0x1d0] sm:$0xff]
        %v1198 = vld [vmem:[%s1064 + $0x1d8] sm:$0xff]
        %v1199 = vld [vmem:[%s1064 + $0x1e0] sm:$0xff]
        %v1200 = vld [vmem:[%s1064 + $0x1e8] sm:$0xff]
        %v1201 = vld [vmem:[%s1064 + $0x1f0] sm:$0xff]
        %v1202 = vld [vmem:[%s1064 + $0x1f8] sm:$0xff]
        %v1203 = vld [vmem:[%s1064 + $0x200] sm:$0xff]
        %v1204 = vld [vmem:[%s1064 + $0x208] sm:$0xff]
        %v1205 = vld [vmem:[%s1064 + $0x210] sm:$0xff]
        %v1206 = vld [vmem:[%s1064 + $0x218] sm:$0xff]
        %v1207 = vld [vmem:[%s1064 + $0x220] sm:$0xff]
        %v1208 = vld [vmem:[%s1064 + $0x228] sm:$0xff]
        %v1209 = vld [vmem:[%s1064 + $0x230] sm:$0xff]
        %v1210 = vld [vmem:[%s1064 + $0x238] sm:$0xff]
        %v1211 = vld [vmem:[%s1064 + $0x240] sm:$0xff]
        %v1212 = vld [vmem:[%s1064 + $0x248] sm:$0xff]
        %v1213 = vld [vmem:[%s1064 + $0x250] sm:$0xff]
        %v1214 = vld [vmem:[%s1064 + $0x258] sm:$0xff]
        %v1215 = vld [vmem:[%s1064 + $0x260] sm:$0xff]
        %v1216 = vld [vmem:[%s1064 + $0x268] sm:$0xff]
        %v1217 = vld [vmem:[%s1064 + $0x270] sm:$0xff]
        %v1218 = vld [vmem:[%s1064 + $0x278] sm:$0xff]
        %v1219 = vld [vmem:[%s1064 + $0x280] sm:$0xff]
        %v1220 = vld [vmem:[%s1064 + $0x288] sm:$0xff]
        %v1221 = vld [vmem:[%s1064 + $0x290] sm:$0xff]
        %v1222 = vld [vmem:[%s1064 + $0x298] sm:$0xff]
        %v1223 = vld [vmem:[%s1064 + $0x2a0] sm:$0xff]
        %v1224 = vld [vmem:[%s1064 + $0x2a8] sm:$0xff]
        %v1225 = vld [vmem:[%s1064 + $0x2b0] sm:$0xff]
        %v1226 = vld [vmem:[%s1064 + $0x2b8] sm:$0xff]
        %v1227 = vld [vmem:[%s1064 + $0x2c0] sm:$0xff]
        %v1228 = vld [vmem:[%s1064 + $0x2c8] sm:$0xff]
        %v1229 = vld [vmem:[%s1064 + $0x2d0] sm:$0xff]
        %v1230 = vld [vmem:[%s1064 + $0x2d8] sm:$0xff]
        %v1231 = vld [vmem:[%s1064 + $0x2e0] sm:$0xff]
        %v1232 = vld [vmem:[%s1064 + $0x2e8] sm:$0xff]
        %v1233 = vld [vmem:[%s1064 + $0x2f0] sm:$0xff]
        %v1234 = vld [vmem:[%s1064 + $0x2f8] sm:$0xff]
        %v1235 = vld [vmem:[%s1064 + $0x300] sm:$0xff]
        %v1236 = vld [vmem:[%s1064 + $0x308] sm:$0xff]
        %v1237 = vld [vmem:[%s1064 + $0x310] sm:$0xff]
        %v1238 = vld [vmem:[%s1064 + $0x318] sm:$0xff]
        %v1239 = vld [vmem:[%s1064 + $0x320] sm:$0xff]
        %v1240 = vld [vmem:[%s1064 + $0x328] sm:$0xff]
        %v1241 = vld [vmem:[%s1064 + $0x330] sm:$0xff]
        %v1242 = vld [vmem:[%s1064 + $0x338] sm:$0xff]
        %v1243 = vld [vmem:[%s1064 + $0x340] sm:$0xff]
        %v1244 = vld [vmem:[%s1064 + $0x348] sm:$0xff]
        %v1245 = vld [vmem:[%s1064 + $0x350] sm:$0xff]
        %v1246 = vld [vmem:[%s1064 + $0x358] sm:$0xff]
        %v1247 = vld [vmem:[%s1064 + $0x360] sm:$0xff]
        %v1248 = vld [vmem:[%s1064 + $0x368] sm:$0xff]
        %v1249 = vld [vmem:[%s1064 + $0x370] sm:$0xff]
        %v1250 = vld [vmem:[%s1064 + $0x378] sm:$0xff]
        %v1251 = vld [vmem:[%s1064 + $0x380] sm:$0xff]
        %v1252 = vld [vmem:[%s1064 + $0x388] sm:$0xff]
        %v1253 = vld [vmem:[%s1064 + $0x390] sm:$0xff]
        %v1254 = vld [vmem:[%s1064 + $0x398] sm:$0xff]
        %v1255 = vld [vmem:[%s1064 + $0x3a0] sm:$0xff]
        %v1256 = vld [vmem:[%s1064 + $0x3a8] sm:$0xff]
        %v1257 = vld [vmem:[%s1064 + $0x3b0] sm:$0xff]
        %v1258 = vld [vmem:[%s1064 + $0x3b8] sm:$0xff]
        %v1259 = vld [vmem:[%s1064 + $0x3c0] sm:$0xff]
        %v1260 = vld [vmem:[%s1064 + $0x3c8] sm:$0xff]
        %v1261 = vld [vmem:[%s1064 + $0x3d0] sm:$0xff]
        %v1262 = vld [vmem:[%s1064 + $0x3d8] sm:$0xff]
        %v1263 = vld [vmem:[%s1064 + $0x3e0] sm:$0xff]
        %v1264 = vld [vmem:[%s1064 + $0x3e8] sm:$0xff]
        %v1265 = vld [vmem:[%s1064 + $0x3f0] sm:$0xff]
        %v1266 = vld [vmem:[%s1064 + $0x3f8] sm:$0xff]
        %v1267 = vld [vmem:[%s1064 + $0x400] sm:$0xff]
        %v1268 = vld [vmem:[%s1064 + $0x408] sm:$0xff]
        %v1269 = vld [vmem:[%s1064 + $0x410] sm:$0xff]
        %v1270 = vld [vmem:[%s1064 + $0x418] sm:$0xff]
        %v1271 = vld [vmem:[%s1064 + $0x420] sm:$0xff]
        %v1272 = vld [vmem:[%s1064 + $0x428] sm:$0xff]
        %v1273 = vld [vmem:[%s1064 + $0x430] sm:$0xff]
        %v1274 = vld [vmem:[%s1064 + $0x438] sm:$0xff]
        %v1275 = vld [vmem:[%s1064 + $0x440] sm:$0xff]
        %v1276 = vld [vmem:[%s1064 + $0x448] sm:$0xff]
        %v1277 = vld [vmem:[%s1064 + $0x450] sm:$0xff]
        %v1278 = vld [vmem:[%s1064 + $0x458] sm:$0xff]
        %v1279 = vld [vmem:[%s1064 + $0x460] sm:$0xff]
        %v1280 = vld [vmem:[%s1064 + $0x468] sm:$0xff]
        %v1281 = vld [vmem:[%s1064 + $0x470] sm:$0xff]
        %v1282 = vld [vmem:[%s1064 + $0x478] sm:$0xff]
        %v1283 = vld [vmem:[%s1064 + $0x480] sm:$0xff]
        %v1284 = vld [vmem:[%s1064 + $0x488] sm:$0xff]
        %v1285 = vld [vmem:[%s1064 + $0x490] sm:$0xff]
        %v1286 = vld [vmem:[%s1064 + $0x498] sm:$0xff]
        %v1287 = vld [vmem:[%s1064 + $0x4a0] sm:$0xff]
        %v1288 = vld [vmem:[%s1064 + $0x4a8] sm:$0xff]
        %v1289 = vld [vmem:[%s1064 + $0x4b0] sm:$0xff]
        %v1290 = vld [vmem:[%s1064 + $0x4b8] sm:$0xff]
        %v1291 = vld [vmem:[%s1064 + $0x4c0] sm:$0xff]
        %v1292 = vld [vmem:[%s1064 + $0x4c8] sm:$0xff]
        %v1293 = vld [vmem:[%s1064 + $0x4d0] sm:$0xff]
        %v1294 = vld [vmem:[%s1064 + $0x4d8] sm:$0xff]
        %v1295 = vld [vmem:[%s1064 + $0x4e0] sm:$0xff]
        %v1296 = vld [vmem:[%s1064 + $0x4e8] sm:$0xff]
        %v1297 = vld [vmem:[%s1064 + $0x4f0] sm:$0xff]
        %v1298 = vld [vmem:[%s1064 + $0x4f8] sm:$0xff]
        %v1299 = vld [vmem:[%s1064 + $0x500] sm:$0xff]
        %v1300 = vld [vmem:[%s1064 + $0x508] sm:$0xff]
        %v1301 = vld [vmem:[%s1064 + $0x510] sm:$0xff]
        %v1302 = vld [vmem:[%s1064 + $0x518] sm:$0xff]
        %v1303 = vld [vmem:[%s1064 + $0x520] sm:$0xff]
        %v1304 = vld [vmem:[%s1064 + $0x528] sm:$0xff]
        %v1305 = vld [vmem:[%s1064 + $0x530] sm:$0xff]
        %v1306 = vld [vmem:[%s1064 + $0x538] sm:$0xff]
        %v1307 = vld [vmem:[%s1064 + $0x540] sm:$0xff]
        %v1308 = vld [vmem:[%s1064 + $0x548] sm:$0xff]
        %v1309 = vld [vmem:[%s1064 + $0x550] sm:$0xff]
        %v1310 = vld [vmem:[%s1064 + $0x558] sm:$0xff]
        %v1311 = vld [vmem:[%s1064 + $0x560] sm:$0xff]
        %v1312 = vld [vmem:[%s1064 + $0x568] sm:$0xff]
        %v1313 = vld [vmem:[%s1064 + $0x570] sm:$0xff]
        %v1314 = vld [vmem:[%s1064 + $0x578] sm:$0xff]
        %v1315 = vld [vmem:[%s1064 + $0x580] sm:$0xff]
        %v1316 = vld [vmem:[%s1064 + $0x588] sm:$0xff]
        %v1317 = vld [vmem:[%s1064 + $0x590] sm:$0xff]
        %v1318 = vld [vmem:[%s1064 + $0x598] sm:$0xff]
        %v1319 = vld [vmem:[%s1064 + $0x5a0] sm:$0xff]
        %v1320 = vld [vmem:[%s1064 + $0x5a8] sm:$0xff]
        %v1321 = vld [vmem:[%s1064 + $0x5b0] sm:$0xff]
        %v1322 = vld [vmem:[%s1064 + $0x5b8] sm:$0xff]
        %v1323 = vld [vmem:[%s1064 + $0x5c0] sm:$0xff]
        %v1324 = vld [vmem:[%s1064 + $0x5c8] sm:$0xff]
        %v1325 = vld [vmem:[%s1064 + $0x5d0] sm:$0xff]
        %v1326 = vld [vmem:[%s1064 + $0x5d8] sm:$0xff]
        %v1327 = vld [vmem:[%s1064 + $0x5e0] sm:$0xff]
        %v1328 = vld [vmem:[%s1064 + $0x5e8] sm:$0xff]
        %v1329 = vld [vmem:[%s1064 + $0x5f0] sm:$0xff]
        %v1330 = vld [vmem:[%s1064 + $0x5f8] sm:$0xff]
        %v1331 = vld [vmem:[%s1064 + $0x600] sm:$0xff]
        %v1332 = vld [vmem:[%s1064 + $0x608] sm:$0xff]
        %v1333 = vld [vmem:[%s1064 + $0x610] sm:$0xff]
        %v1334 = vld [vmem:[%s1064 + $0x618] sm:$0xff]
        %v1335 = vld [vmem:[%s1064 + $0x620] sm:$0xff]
        %v1336 = vld [vmem:[%s1064 + $0x628] sm:$0xff]
        %v1337 = vld [vmem:[%s1064 + $0x630] sm:$0xff]
        %v1338 = vld [vmem:[%s1064 + $0x638] sm:$0xff]
        %v1339 = vld [vmem:[%s1064 + $0x640] sm:$0xff]
        %v1340 = vld [vmem:[%s1064 + $0x648] sm:$0xff]
        %v1341 = vld [vmem:[%s1064 + $0x650] sm:$0xff]
        %v1342 = vld [vmem:[%s1064 + $0x658] sm:$0xff]
        %v1343 = vld [vmem:[%s1064 + $0x660] sm:$0xff]
        %v1344 = vld [vmem:[%s1064 + $0x668] sm:$0xff]
        %v1345 = vld [vmem:[%s1064 + $0x670] sm:$0xff]
        %v1346 = vld [vmem:[%s1064 + $0x678] sm:$0xff]
        %v1347 = vld [vmem:[%s1064 + $0x680] sm:$0xff]
        %v1348 = vld [vmem:[%s1064 + $0x688] sm:$0xff]
        %v1349 = vld [vmem:[%s1064 + $0x690] sm:$0xff]
        %v1350 = vld [vmem:[%s1064 + $0x698] sm:$0xff]
        %v1351 = vld [vmem:[%s1064 + $0x6a0] sm:$0xff]
        %v1352 = vld [vmem:[%s1064 + $0x6a8] sm:$0xff]
        %v1353 = vld [vmem:[%s1064 + $0x6b0] sm:$0xff]
        %v1354 = vld [vmem:[%s1064 + $0x6b8] sm:$0xff]
        %v1355 = vld [vmem:[%s1064 + $0x6c0] sm:$0xff]
        %v1356 = vld [vmem:[%s1064 + $0x6c8] sm:$0xff]
        %v1357 = vld [vmem:[%s1064 + $0x6d0] sm:$0xff]
        %v1358 = vld [vmem:[%s1064 + $0x6d8] sm:$0xff]
        %v1359 = vld [vmem:[%s1064 + $0x6e0] sm:$0xff]
        %v1360 = vld [vmem:[%s1064 + $0x6e8] sm:$0xff]
        %v1361 = vld [vmem:[%s1064 + $0x6f0] sm:$0xff]
        %v1362 = vld [vmem:[%s1064 + $0x6f8] sm:$0xff]
        %v1363 = vld [vmem:[%s1064 + $0x700] sm:$0xff]
        %v1364 = vld [vmem:[%s1064 + $0x708] sm:$0xff]
        %v1365 = vld [vmem:[%s1064 + $0x710] sm:$0xff]
        %v1366 = vld [vmem:[%s1064 + $0x718] sm:$0xff]
        %v1367 = vld [vmem:[%s1064 + $0x720] sm:$0xff]
        %v1368 = vld [vmem:[%s1064 + $0x728] sm:$0xff]
        %v1369 = vld [vmem:[%s1064 + $0x730] sm:$0xff]
        %v1370 = vld [vmem:[%s1064 + $0x738] sm:$0xff]
        %v1371 = vld [vmem:[%s1064 + $0x740] sm:$0xff]
        %v1372 = vld [vmem:[%s1064 + $0x748] sm:$0xff]
        %v1373 = vld [vmem:[%s1064 + $0x750] sm:$0xff]
        %v1374 = vld [vmem:[%s1064 + $0x758] sm:$0xff]
        %v1375 = vld [vmem:[%s1064 + $0x760] sm:$0xff]
        %v1376 = vld [vmem:[%s1064 + $0x768] sm:$0xff]
        %v1377 = vld [vmem:[%s1064 + $0x770] sm:$0xff]
        %v1378 = vld [vmem:[%s1064 + $0x778] sm:$0xff]
        %v1379 = vld [vmem:[%s1064 + $0x780] sm:$0xff]
        %v1380 = vld [vmem:[%s1064 + $0x788] sm:$0xff]
        %v1381 = vld [vmem:[%s1064 + $0x790] sm:$0xff]
        %v1382 = vld [vmem:[%s1064 + $0x798] sm:$0xff]
        %v1383 = vld [vmem:[%s1064 + $0x7a0] sm:$0xff]
        %v1384 = vld [vmem:[%s1064 + $0x7a8] sm:$0xff]
        %v1385 = vld [vmem:[%s1064 + $0x7b0] sm:$0xff]
        %v1386 = vld [vmem:[%s1064 + $0x7b8] sm:$0xff]
        %v1387 = vld [vmem:[%s1064 + $0x7c0] sm:$0xff]
        %v1388 = vld [vmem:[%s1064 + $0x7c8] sm:$0xff]
        %v1389 = vld [vmem:[%s1064 + $0x7d0] sm:$0xff]
        %v1390 = vld [vmem:[%s1064 + $0x7d8] sm:$0xff]
        %v1391 = vld [vmem:[%s1064 + $0x7e0] sm:$0xff]
        %v1392 = vld [vmem:[%s1064 + $0x7e8] sm:$0xff]
        %v1393 = vld [vmem:[%s1064 + $0x7f0] sm:$0xff]
        %v1394 = vld [vmem:[%s1064 + $0x7f8] sm:$0xff]
        %v1395 = vld [vmem:[%s1064 + $0x800] sm:$0xff]
        %v1396 = vld [vmem:[%s1064 + $0x808] sm:$0xff]
        %v1397 = vld [vmem:[%s1064 + $0x810] sm:$0xff]
        %v1398 = vld [vmem:[%s1064 + $0x818] sm:$0xff]
        %v1399 = vld [vmem:[%s1064 + $0x820] sm:$0xff]
        %v1400 = vld [vmem:[%s1064 + $0x828] sm:$0xff]
        %v1401 = vld [vmem:[%s1064 + $0x830] sm:$0xff]
        %v1402 = vld [vmem:[%s1064 + $0x838] sm:$0xff]
        %v1403 = vld [vmem:[%s1064 + $0x840] sm:$0xff]
        %v1404 = vld [vmem:[%s1064 + $0x848] sm:$0xff]
        %v1405 = vld [vmem:[%s1064 + $0x850] sm:$0xff]
        %v1406 = vld [vmem:[%s1064 + $0x858] sm:$0xff]
        %v1407 = vld [vmem:[%s1064 + $0x860] sm:$0xff]
        %v1408 = vld [vmem:[%s1064 + $0x868] sm:$0xff]
        %v1409 = vld [vmem:[%s1064 + $0x870] sm:$0xff]
        %v1410 = vld [vmem:[%s1064 + $0x878] sm:$0xff]
        %v1411 = vld [vmem:[%s1064 + $0x880] sm:$0xff]
        %v1412 = vld [vmem:[%s1064 + $0x888] sm:$0xff]
        %v1413 = vld [vmem:[%s1064 + $0x890] sm:$0xff]
        %v1414 = vld [vmem:[%s1064 + $0x898] sm:$0xff]
        %v1415 = vld [vmem:[%s1064 + $0x8a0] sm:$0xff]
        %v1416 = vld [vmem:[%s1064 + $0x8a8] sm:$0xff]
        %v1417 = vld [vmem:[%s1064 + $0x8b0] sm:$0xff]
        %v1418 = vld [vmem:[%s1064 + $0x8b8] sm:$0xff]
        %v1419 = vld [vmem:[%s1064 + $0x8c0] sm:$0xff]
        %v1420 = vld [vmem:[%s1064 + $0x8c8] sm:$0xff]
        %v1421 = vld [vmem:[%s1064 + $0x8d0] sm:$0xff]
        %v1422 = vld [vmem:[%s1064 + $0x8d8] sm:$0xff]
        %v1423 = vld [vmem:[%s1064 + $0x8e0] sm:$0xff]
        %v1424 = vld [vmem:[%s1064 + $0x8e8] sm:$0xff]
        %v1425 = vld [vmem:[%s1064 + $0x8f0] sm:$0xff]
        %v1426 = vld [vmem:[%s1064 + $0x8f8] sm:$0xff]
        %v1427 = vld [vmem:[%s1064 + $0x900] sm:$0xff]
        %v1428 = vld [vmem:[%s1064 + $0x908] sm:$0xff]
        %v1429 = vld [vmem:[%s1064 + $0x910] sm:$0xff]
        %v1430 = vld [vmem:[%s1064 + $0x918] sm:$0xff]
        %v1431 = vld [vmem:[%s1064 + $0x920] sm:$0xff]
        %v1432 = vld [vmem:[%s1064 + $0x928] sm:$0xff]
        %v1433 = vld [vmem:[%s1064 + $0x930] sm:$0xff]
        %v1434 = vld [vmem:[%s1064 + $0x938] sm:$0xff]
        %v1435 = vld [vmem:[%s1064 + $0x940] sm:$0xff]
        %v1436 = vld [vmem:[%s1064 + $0x948] sm:$0xff]
        %v1437 = vld [vmem:[%s1064 + $0x950] sm:$0xff]
        %v1438 = vld [vmem:[%s1064 + $0x958] sm:$0xff]
        %v1439 = vld [vmem:[%s1064 + $0x960] sm:$0xff]
        %v1440 = vld [vmem:[%s1064 + $0x968] sm:$0xff]
        %v1441 = vld [vmem:[%s1064 + $0x970] sm:$0xff]
        %v1442 = vld [vmem:[%s1064 + $0x978] sm:$0xff]
        %v1443 = vld [vmem:[%s1064 + $0x980] sm:$0xff]
        %v1444 = vld [vmem:[%s1064 + $0x988] sm:$0xff]
        %v1445 = vld [vmem:[%s1064 + $0x990] sm:$0xff]
        %v1446 = vld [vmem:[%s1064 + $0x998] sm:$0xff]
        %v1447 = vld [vmem:[%s1064 + $0x9a0] sm:$0xff]
        %v1448 = vld [vmem:[%s1064 + $0x9a8] sm:$0xff]
        %v1449 = vld [vmem:[%s1064 + $0x9b0] sm:$0xff]
        %v1450 = vld [vmem:[%s1064 + $0x9b8] sm:$0xff]
        %v1451 = vld [vmem:[%s1064 + $0x9c0] sm:$0xff]
        %v1452 = vld [vmem:[%s1064 + $0x9c8] sm:$0xff]
        %v1453 = vld [vmem:[%s1064 + $0x9d0] sm:$0xff]
        %v1454 = vld [vmem:[%s1064 + $0x9d8] sm:$0xff]
        %v1455 = vld [vmem:[%s1064 + $0x9e0] sm:$0xff]
        %v1456 = vld [vmem:[%s1064 + $0x9e8] sm:$0xff]
        %v1457 = vld [vmem:[%s1064 + $0x9f0] sm:$0xff]
        %v1458 = vld [vmem:[%s1064 + $0x9f8] sm:$0xff]
        %v1459 = vld [vmem:[%s1064 + $0xa00] sm:$0xff]
        %v1460 = vld [vmem:[%s1064 + $0xa08] sm:$0xff]
        %v1461 = vld [vmem:[%s1064 + $0xa10] sm:$0xff]
        %v1462 = vld [vmem:[%s1064 + $0xa18] sm:$0xff]
        %v1463 = vld [vmem:[%s1064 + $0xa20] sm:$0xff]
        %v1464 = vld [vmem:[%s1064 + $0xa28] sm:$0xff]
        %v1465 = vld [vmem:[%s1064 + $0xa30] sm:$0xff]
        %v1466 = vld [vmem:[%s1064 + $0xa38] sm:$0xff]
        %v1467 = vld [vmem:[%s1064 + $0xa40] sm:$0xff]
        %v1468 = vld [vmem:[%s1064 + $0xa48] sm:$0xff]
        %v1469 = vld [vmem:[%s1064 + $0xa50] sm:$0xff]
        %v1470 = vld [vmem:[%s1064 + $0xa58] sm:$0xff]
        %v1471 = vld [vmem:[%s1064 + $0xa60] sm:$0xff]
        %v1472 = vld [vmem:[%s1064 + $0xa68] sm:$0xff]
        %v1473 = vld [vmem:[%s1064 + $0xa70] sm:$0xff]
        %v1474 = vld [vmem:[%s1064 + $0xa78] sm:$0xff]
        %v1475 = vld [vmem:[%s1064 + $0xa80] sm:$0xff]
        %v1476 = vld [vmem:[%s1064 + $0xa88] sm:$0xff]
        %v1477 = vld [vmem:[%s1064 + $0xa90] sm:$0xff]
        %v1478 = vld [vmem:[%s1064 + $0xa98] sm:$0xff]
        %v1479 = vld [vmem:[%s1064 + $0xaa0] sm:$0xff]
        %v1480 = vld [vmem:[%s1064 + $0xaa8] sm:$0xff]
        %v1481 = vld [vmem:[%s1064 + $0xab0] sm:$0xff]
        %v1482 = vld [vmem:[%s1064 + $0xab8] sm:$0xff]
        %v1483 = vld [vmem:[%s1064 + $0xac0] sm:$0xff]
        %v1484 = vld [vmem:[%s1064 + $0xac8] sm:$0xff]
        %v1485 = vld [vmem:[%s1064 + $0xad0] sm:$0xff]
        %v1486 = vld [vmem:[%s1064 + $0xad8] sm:$0xff]
        %v1487 = vld [vmem:[%s1064 + $0xae0] sm:$0xff]
        %v1488 = vld [vmem:[%s1064 + $0xae8] sm:$0xff]
        %v1489 = vld [vmem:[%s1064 + $0xaf0] sm:$0xff]
        %v1490 = vld [vmem:[%s1064 + $0xaf8] sm:$0xff]
        %v1491 = vld [vmem:[%s1064 + $0xb00] sm:$0xff]
        %v1492 = vld [vmem:[%s1064 + $0xb08] sm:$0xff]
        %v1493 = vld [vmem:[%s1064 + $0xb10] sm:$0xff]
        %v1494 = vld [vmem:[%s1064 + $0xb18] sm:$0xff]
        %v1495 = vld [vmem:[%s1064 + $0xb20] sm:$0xff]
        %v1496 = vld [vmem:[%s1064 + $0xb28] sm:$0xff]
        %v1497 = vld [vmem:[%s1064 + $0xb30] sm:$0xff]
        %v1498 = vld [vmem:[%s1064 + $0xb38] sm:$0xff]
        %v1499 = vld [vmem:[%s1064 + $0xb40] sm:$0xff]
        %v1500 = vld [vmem:[%s1064 + $0xb48] sm:$0xff]
        %v1501 = vld [vmem:[%s1064 + $0xb50] sm:$0xff]
        %v1502 = vld [vmem:[%s1064 + $0xb58] sm:$0xff]
        %v1503 = vld [vmem:[%s1064 + $0xb60] sm:$0xff]
        %v1504 = vld [vmem:[%s1064 + $0xb68] sm:$0xff]
        %v1505 = vld [vmem:[%s1064 + $0xb70] sm:$0xff]
        %v1506 = vld [vmem:[%s1064 + $0xb78] sm:$0xff]
        %v1507 = vld [vmem:[%s1064 + $0xb80] sm:$0xff]
        %v1508 = vld [vmem:[%s1064 + $0xb88] sm:$0xff]
        %v1509 = vld [vmem:[%s1064 + $0xb90] sm:$0xff]
        %v1510 = vld [vmem:[%s1064 + $0xb98] sm:$0xff]
        %v1511 = vld [vmem:[%s1064 + $0xba0] sm:$0xff]
        %v1512 = vld [vmem:[%s1064 + $0xba8] sm:$0xff]
        %v1513 = vld [vmem:[%s1064 + $0xbb0] sm:$0xff]
        %v1514 = vld [vmem:[%s1064 + $0xbb8] sm:$0xff]
        %v1515 = vld [vmem:[%s1064 + $0xbc0] sm:$0xff]
        %v1516 = vld [vmem:[%s1064 + $0xbc8] sm:$0xff]
        %v1517 = vld [vmem:[%s1064 + $0xbd0] sm:$0xff]
        %v1518 = vld [vmem:[%s1064 + $0xbd8] sm:$0xff]
        %v1519 = vld [vmem:[%s1064 + $0xbe0] sm:$0xff]
        %v1520 = vld [vmem:[%s1064 + $0xbe8] sm:$0xff]
        %v1521 = vld [vmem:[%s1064 + $0xbf0] sm:$0xff]
        %v1522 = vld [vmem:[%s1064 + $0xbf8] sm:$0xff]
        %v1523 = vld [vmem:[%s1064 + $0xc00] sm:$0xff]
        %v1524 = vld [vmem:[%s1064 + $0xc08] sm:$0xff]
        %v1525 = vld [vmem:[%s1064 + $0xc10] sm:$0xff]
        %v1526 = vld [vmem:[%s1064 + $0xc18] sm:$0xff]
        %v1527 = vld [vmem:[%s1064 + $0xc20] sm:$0xff]
        %v1528 = vld [vmem:[%s1064 + $0xc28] sm:$0xff]
        %v1529 = vld [vmem:[%s1064 + $0xc30] sm:$0xff]
        %v1530 = vld [vmem:[%s1064 + $0xc38] sm:$0xff]
        %v1531 = vld [vmem:[%s1064 + $0xc40] sm:$0xff]
        %v1532 = vld [vmem:[%s1064 + $0xc48] sm:$0xff]
        %v1533 = vld [vmem:[%s1064 + $0xc50] sm:$0xff]
        %v1534 = vld [vmem:[%s1064 + $0xc58] sm:$0xff]
        %v1535 = vld [vmem:[%s1064 + $0xc60] sm:$0xff]
        %v1536 = vld [vmem:[%s1064 + $0xc68] sm:$0xff]
        %v1537 = vld [vmem:[%s1064 + $0xc70] sm:$0xff]
        %v1538 = vld [vmem:[%s1064 + $0xc78] sm:$0xff]
        %v1539 = vld [vmem:[%s1064 + $0xc80] sm:$0xff]
        %v1540 = vld [vmem:[%s1064 + $0xc88] sm:$0xff]
        %v1541 = vld [vmem:[%s1064 + $0xc90] sm:$0xff]
        %v1542 = vld [vmem:[%s1064 + $0xc98] sm:$0xff]
        %v1543 = vld [vmem:[%s1064 + $0xca0] sm:$0xff]
        %v1544 = vld [vmem:[%s1064 + $0xca8] sm:$0xff]
        %v1545 = vld [vmem:[%s1064 + $0xcb0] sm:$0xff]
        %v1546 = vld [vmem:[%s1064 + $0xcb8] sm:$0xff]
        %v1547 = vld [vmem:[%s1064 + $0xcc0] sm:$0xff]
        %v1548 = vld [vmem:[%s1064 + $0xcc8] sm:$0xff]
        %v1549 = vld [vmem:[%s1064 + $0xcd0] sm:$0xff]
        %v1550 = vld [vmem:[%s1064 + $0xcd8] sm:$0xff]
        %v1551 = vld [vmem:[%s1064 + $0xce0] sm:$0xff]
        %v1552 = vld [vmem:[%s1064 + $0xce8] sm:$0xff]
        %v1553 = vld [vmem:[%s1064 + $0xcf0] sm:$0xff]
        %v1554 = vld [vmem:[%s1064 + $0xcf8] sm:$0xff]
        %v1555 = vld [vmem:[%s1064 + $0xd00] sm:$0xff]
        %v1556 = vld [vmem:[%s1064 + $0xd08] sm:$0xff]
        %v1557 = vld [vmem:[%s1064 + $0xd10] sm:$0xff]
        %v1558 = vld [vmem:[%s1064 + $0xd18] sm:$0xff]
        %v1559 = vld [vmem:[%s1064 + $0xd20] sm:$0xff]
        %v1560 = vld [vmem:[%s1064 + $0xd28] sm:$0xff]
        %v1561 = vld [vmem:[%s1064 + $0xd30] sm:$0xff]
        %v1562 = vld [vmem:[%s1064 + $0xd38] sm:$0xff]
        %v1563 = vld [vmem:[%s1064 + $0xd40] sm:$0xff]
        %v1564 = vld [vmem:[%s1064 + $0xd48] sm:$0xff]
        %v1565 = vld [vmem:[%s1064 + $0xd50] sm:$0xff]
        %v1566 = vld [vmem:[%s1064 + $0xd58] sm:$0xff]
        %v1567 = vld [vmem:[%s1064 + $0xd60] sm:$0xff]
        %v1568 = vld [vmem:[%s1064 + $0xd68] sm:$0xff]
        %v1569 = vld [vmem:[%s1064 + $0xd70] sm:$0xff]
        %v1570 = vld [vmem:[%s1064 + $0xd78] sm:$0xff]
        %v2003 = vunpack.c.l.b16 %v1139
        %v2004 = vunpack.c.h.b16 %v1139
        %v2005 = vunpack.c.l.b16 %v1140
        %v2006 = vunpack.c.h.b16 %v1140
        %v2007 = vunpack.c.l.b16 %v1141
        %v2008 = vunpack.c.h.b16 %v1141
        %v2009 = vunpack.c.l.b16 %v1142
        %v2010 = vunpack.c.h.b16 %v1142
        %v2011 = vunpack.c.l.b16 %v1143
        %v2012 = vunpack.c.h.b16 %v1143
        %v2013 = vunpack.c.l.b16 %v1144
        %v2014 = vunpack.c.h.b16 %v1144
        %v2015 = vunpack.c.l.b16 %v1145
        %v2016 = vunpack.c.h.b16 %v1145
        %v2017 = vunpack.c.l.b16 %v1146
        %v2018 = vunpack.c.h.b16 %v1146
        %v2019 = vunpack.c.l.b16 %v1147
        %v2020 = vunpack.c.h.b16 %v1147
        %v2021 = vunpack.c.l.b16 %v1148
        %v2022 = vunpack.c.h.b16 %v1148
        %v2023 = vunpack.c.l.b16 %v1149
        %v2024 = vunpack.c.h.b16 %v1149
        %v2025 = vunpack.c.l.b16 %v1150
        %v2026 = vunpack.c.h.b16 %v1150
        %v2027 = vunpack.c.l.b16 %v1151
        %v2028 = vunpack.c.h.b16 %v1151
        %v2029 = vunpack.c.l.b16 %v1152
        %v2030 = vunpack.c.h.b16 %v1152
        %v2031 = vunpack.c.l.b16 %v1153
        %v2032 = vunpack.c.h.b16 %v1153
        %v2033 = vunpack.c.l.b16 %v1154
        %v2034 = vunpack.c.h.b16 %v1154
        %v2035 = vunpack.c.l.b16 %v1155
        %v2036 = vunpack.c.h.b16 %v1155
        %v2037 = vunpack.c.l.b16 %v1156
        %v2038 = vunpack.c.h.b16 %v1156
        %v2039 = vunpack.c.l.b16 %v1157
        %v2040 = vunpack.c.h.b16 %v1157
        %v2041 = vunpack.c.l.b16 %v1158
        %v2042 = vunpack.c.h.b16 %v1158
        %v2043 = vunpack.c.l.b16 %v1159
        %v2044 = vunpack.c.h.b16 %v1159
        %v2045 = vunpack.c.l.b16 %v1160
        %v2046 = vunpack.c.h.b16 %v1160
        %v2047 = vunpack.c.l.b16 %v1161
        %v2048 = vunpack.c.h.b16 %v1161
        %v2049 = vunpack.c.l.b16 %v1162
        %v2050 = vunpack.c.h.b16 %v1162
        %v2051 = vunpack.c.l.b16 %v1163
        %v2052 = vunpack.c.h.b16 %v1163
        %v2053 = vunpack.c.l.b16 %v1164
        %v2054 = vunpack.c.h.b16 %v1164
        %v2055 = vunpack.c.l.b16 %v1165
        %v2056 = vunpack.c.h.b16 %v1165
        %v2057 = vunpack.c.l.b16 %v1166
        %v2058 = vunpack.c.h.b16 %v1166
        %v2059 = vunpack.c.l.b16 %v1167
        %v2060 = vunpack.c.h.b16 %v1167
        %v2061 = vunpack.c.l.b16 %v1168
        %v2062 = vunpack.c.h.b16 %v1168
        %v2063 = vunpack.c.l.b16 %v1169
        %v2064 = vunpack.c.h.b16 %v1169
        %v2065 = vunpack.c.l.b16 %v1170
        %v2066 = vunpack.c.h.b16 %v1170
        %v2067 = vunpack.c.l.b16 %v1171
        %v2068 = vunpack.c.h.b16 %v1171
        %v2069 = vunpack.c.l.b16 %v1172
        %v2070 = vunpack.c.h.b16 %v1172
        %v2071 = vunpack.c.l.b16 %v1173
        %v2072 = vunpack.c.h.b16 %v1173
        %v2073 = vunpack.c.l.b16 %v1174
        %v2074 = vunpack.c.h.b16 %v1174
        %v2075 = vunpack.c.l.b16 %v1175
        %v2076 = vunpack.c.h.b16 %v1175
        %v2077 = vunpack.c.l.b16 %v1176
        %v2078 = vunpack.c.h.b16 %v1176
        %v2079 = vunpack.c.l.b16 %v1177
        %v2080 = vunpack.c.h.b16 %v1177
        %v2081 = vunpack.c.l.b16 %v1178
        %v2082 = vunpack.c.h.b16 %v1178
        %v2083 = vunpack.c.l.b16 %v1179
        %v2084 = vunpack.c.h.b16 %v1179
        %v2085 = vunpack.c.l.b16 %v1180
        %v2086 = vunpack.c.h.b16 %v1180
        %v2087 = vunpack.c.l.b16 %v1181
        %v2088 = vunpack.c.h.b16 %v1181
        %v2089 = vunpack.c.l.b16 %v1182
        %v2090 = vunpack.c.h.b16 %v1182
        %v2091 = vunpack.c.l.b16 %v1183
        %v2092 = vunpack.c.h.b16 %v1183
        %v2093 = vunpack.c.l.b16 %v1184
        %v2094 = vunpack.c.h.b16 %v1184
        %v2095 = vunpack.c.l.b16 %v1185
        %v2096 = vunpack.c.h.b16 %v1185
        %v2097 = vunpack.c.l.b16 %v1186
        %v2098 = vunpack.c.h.b16 %v1186
        %v2099 = vunpack.c.l.b16 %v1187
        %v2100 = vunpack.c.h.b16 %v1187
        %v2101 = vunpack.c.l.b16 %v1188
        %v2102 = vunpack.c.h.b16 %v1188
        %v2103 = vunpack.c.l.b16 %v1189
        %v2104 = vunpack.c.h.b16 %v1189
        %v2105 = vunpack.c.l.b16 %v1190
        %v2106 = vunpack.c.h.b16 %v1190
        %v2107 = vunpack.c.l.b16 %v1191
        %v2108 = vunpack.c.h.b16 %v1191
        %v2109 = vunpack.c.l.b16 %v1192
        %v2110 = vunpack.c.h.b16 %v1192
        %v2111 = vunpack.c.l.b16 %v1193
        %v2112 = vunpack.c.h.b16 %v1193
        %v2113 = vunpack.c.l.b16 %v1194
        %v2114 = vunpack.c.h.b16 %v1194
        %v2115 = vunpack.c.l.b16 %v1195
        %v2116 = vunpack.c.h.b16 %v1195
        %v2117 = vunpack.c.l.b16 %v1196
        %v2118 = vunpack.c.h.b16 %v1196
        %v2119 = vunpack.c.l.b16 %v1197
        %v2120 = vunpack.c.h.b16 %v1197
        %v2121 = vunpack.c.l.b16 %v1198
        %v2122 = vunpack.c.h.b16 %v1198
        %v2123 = vunpack.c.l.b16 %v1199
        %v2124 = vunpack.c.h.b16 %v1199
        %v2125 = vunpack.c.l.b16 %v1200
        %v2126 = vunpack.c.h.b16 %v1200
        %v2127 = vunpack.c.l.b16 %v1201
        %v2128 = vunpack.c.h.b16 %v1201
        %v2129 = vunpack.c.l.b16 %v1202
        %v2130 = vunpack.c.h.b16 %v1202
        %v2131 = vunpack.c.l.b16 %v1203
        %v2132 = vunpack.c.h.b16 %v1203
        %v2133 = vunpack.c.l.b16 %v1204
        %v2134 = vunpack.c.h.b16 %v1204
        %v2135 = vunpack.c.l.b16 %v1205
        %v2136 = vunpack.c.h.b16 %v1205
        %v2137 = vunpack.c.l.b16 %v1206
        %v2138 = vunpack.c.h.b16 %v1206
        %v2139 = vunpack.c.l.b16 %v1207
        %v2140 = vunpack.c.h.b16 %v1207
        %v2141 = vunpack.c.l.b16 %v1208
        %v2142 = vunpack.c.h.b16 %v1208
        %v2143 = vunpack.c.l.b16 %v1209
        %v2144 = vunpack.c.h.b16 %v1209
        %v2145 = vunpack.c.l.b16 %v1210
        %v2146 = vunpack.c.h.b16 %v1210
        %v2147 = vunpack.c.l.b16 %v1211
        %v2148 = vunpack.c.h.b16 %v1211
        %v2149 = vunpack.c.l.b16 %v1212
        %v2150 = vunpack.c.h.b16 %v1212
        %v2151 = vunpack.c.l.b16 %v1213
        %v2152 = vunpack.c.h.b16 %v1213
        %v2153 = vunpack.c.l.b16 %v1214
        %v2154 = vunpack.c.h.b16 %v1214
        %v2155 = vunpack.c.l.b16 %v1215
        %v2156 = vunpack.c.h.b16 %v1215
        %v2157 = vunpack.c.l.b16 %v1216
        %v2158 = vunpack.c.h.b16 %v1216
        %v2159 = vunpack.c.l.b16 %v1217
        %v2160 = vunpack.c.h.b16 %v1217
        %v2161 = vunpack.c.l.b16 %v1218
        %v2162 = vunpack.c.h.b16 %v1218
        %v2163 = vunpack.c.l.b16 %v1219
        %v2164 = vunpack.c.h.b16 %v1219
        %v2165 = vunpack.c.l.b16 %v1220
        %v2166 = vunpack.c.h.b16 %v1220
        %v2167 = vunpack.c.l.b16 %v1221
        %v2168 = vunpack.c.h.b16 %v1221
        %v2169 = vunpack.c.l.b16 %v1222
        %v2170 = vunpack.c.h.b16 %v1222
        %v2171 = vunpack.c.l.b16 %v1223
        %v2172 = vunpack.c.h.b16 %v1223
        %v2173 = vunpack.c.l.b16 %v1224
        %v2174 = vunpack.c.h.b16 %v1224
        %v2175 = vunpack.c.l.b16 %v1225
        %v2176 = vunpack.c.h.b16 %v1225
        %v2177 = vunpack.c.l.b16 %v1226
        %v2178 = vunpack.c.h.b16 %v1226
        %v2179 = vunpack.c.l.b16 %v1227
        %v2180 = vunpack.c.h.b16 %v1227
        %v2181 = vunpack.c.l.b16 %v1228
        %v2182 = vunpack.c.h.b16 %v1228
        %v2183 = vunpack.c.l.b16 %v1229
        %v2184 = vunpack.c.h.b16 %v1229
        %v2185 = vunpack.c.l.b16 %v1230
        %v2186 = vunpack.c.h.b16 %v1230
        %v2187 = vunpack.c.l.b16 %v1231
        %v2188 = vunpack.c.h.b16 %v1231
        %v2189 = vunpack.c.l.b16 %v1232
        %v2190 = vunpack.c.h.b16 %v1232
        %v2191 = vunpack.c.l.b16 %v1233
        %v2192 = vunpack.c.h.b16 %v1233
        %v2193 = vunpack.c.l.b16 %v1234
        %v2194 = vunpack.c.h.b16 %v1234
        %v2195 = vunpack.c.l.b16 %v1235
        %v2196 = vunpack.c.h.b16 %v1235
        %v2197 = vunpack.c.l.b16 %v1236
        %v2198 = vunpack.c.h.b16 %v1236
        %v2199 = vunpack.c.l.b16 %v1237
        %v2200 = vunpack.c.h.b16 %v1237
        %v2201 = vunpack.c.l.b16 %v1238
        %v2202 = vunpack.c.h.b16 %v1238
        %v2203 = vunpack.c.l.b16 %v1239
        %v2204 = vunpack.c.h.b16 %v1239
        %v2205 = vunpack.c.l.b16 %v1240
        %v2206 = vunpack.c.h.b16 %v1240
        %v2207 = vunpack.c.l.b16 %v1241
        %v2208 = vunpack.c.h.b16 %v1241
        %v2209 = vunpack.c.l.b16 %v1242
        %v2210 = vunpack.c.h.b16 %v1242
        %v2211 = vunpack.c.l.b16 %v1243
        %v2212 = vunpack.c.h.b16 %v1243
        %v2213 = vunpack.c.l.b16 %v1244
        %v2214 = vunpack.c.h.b16 %v1244
        %v2215 = vunpack.c.l.b16 %v1245
        %v2216 = vunpack.c.h.b16 %v1245
        %v2217 = vunpack.c.l.b16 %v1246
        %v2218 = vunpack.c.h.b16 %v1246
        %v2219 = vunpack.c.l.b16 %v1247
        %v2220 = vunpack.c.h.b16 %v1247
        %v2221 = vunpack.c.l.b16 %v1248
        %v2222 = vunpack.c.h.b16 %v1248
        %v2223 = vunpack.c.l.b16 %v1249
        %v2224 = vunpack.c.h.b16 %v1249
        %v2225 = vunpack.c.l.b16 %v1250
        %v2226 = vunpack.c.h.b16 %v1250
        %v2227 = vunpack.c.l.b16 %v1251
        %v2228 = vunpack.c.h.b16 %v1251
        %v2229 = vunpack.c.l.b16 %v1252
        %v2230 = vunpack.c.h.b16 %v1252
        %v2231 = vunpack.c.l.b16 %v1253
        %v2232 = vunpack.c.h.b16 %v1253
        %v2233 = vunpack.c.l.b16 %v1254
        %v2234 = vunpack.c.h.b16 %v1254
        %v2235 = vunpack.c.l.b16 %v1255
        %v2236 = vunpack.c.h.b16 %v1255
        %v2237 = vunpack.c.l.b16 %v1256
        %v2238 = vunpack.c.h.b16 %v1256
        %v2239 = vunpack.c.l.b16 %v1257
        %v2240 = vunpack.c.h.b16 %v1257
        %v2241 = vunpack.c.l.b16 %v1258
        %v2242 = vunpack.c.h.b16 %v1258
        %v2243 = vunpack.c.l.b16 %v1259
        %v2244 = vunpack.c.h.b16 %v1259
        %v2245 = vunpack.c.l.b16 %v1260
        %v2246 = vunpack.c.h.b16 %v1260
        %v2247 = vunpack.c.l.b16 %v1261
        %v2248 = vunpack.c.h.b16 %v1261
        %v2249 = vunpack.c.l.b16 %v1262
        %v2250 = vunpack.c.h.b16 %v1262
        %v2251 = vunpack.c.l.b16 %v1263
        %v2252 = vunpack.c.h.b16 %v1263
        %v2253 = vunpack.c.l.b16 %v1264
        %v2254 = vunpack.c.h.b16 %v1264
        %v2255 = vunpack.c.l.b16 %v1265
        %v2256 = vunpack.c.h.b16 %v1265
        %v2257 = vunpack.c.l.b16 %v1266
        %v2258 = vunpack.c.h.b16 %v1266
        %v2259 = vunpack.c.l.b16 %v1267
        %v2260 = vunpack.c.h.b16 %v1267
        %v2261 = vunpack.c.l.b16 %v1268
        %v2262 = vunpack.c.h.b16 %v1268
        %v2263 = vunpack.c.l.b16 %v1269
        %v2264 = vunpack.c.h.b16 %v1269
        %v2265 = vunpack.c.l.b16 %v1270
        %v2266 = vunpack.c.h.b16 %v1270
        %v2267 = vunpack.c.l.b16 %v1271
        %v2268 = vunpack.c.h.b16 %v1271
        %v2269 = vunpack.c.l.b16 %v1272
        %v2270 = vunpack.c.h.b16 %v1272
        %v2271 = vunpack.c.l.b16 %v1273
        %v2272 = vunpack.c.h.b16 %v1273
        %v2273 = vunpack.c.l.b16 %v1274
        %v2274 = vunpack.c.h.b16 %v1274
        %v2275 = vunpack.c.l.b16 %v1275
        %v2276 = vunpack.c.h.b16 %v1275
        %v2277 = vunpack.c.l.b16 %v1276
        %v2278 = vunpack.c.h.b16 %v1276
        %v2279 = vunpack.c.l.b16 %v1277
        %v2280 = vunpack.c.h.b16 %v1277
        %v2281 = vunpack.c.l.b16 %v1278
        %v2282 = vunpack.c.h.b16 %v1278
        %v2283 = vunpack.c.l.b16 %v1279
        %v2284 = vunpack.c.h.b16 %v1279
        %v2285 = vunpack.c.l.b16 %v1280
        %v2286 = vunpack.c.h.b16 %v1280
        %v2287 = vunpack.c.l.b16 %v1281
        %v2288 = vunpack.c.h.b16 %v1281
        %v2289 = vunpack.c.l.b16 %v1282
        %v2290 = vunpack.c.h.b16 %v1282
        %v2291 = vunpack.c.l.b16 %v1283
        %v2292 = vunpack.c.h.b16 %v1283
        %v2293 = vunpack.c.l.b16 %v1284
        %v2294 = vunpack.c.h.b16 %v1284
        %v2295 = vunpack.c.l.b16 %v1285
        %v2296 = vunpack.c.h.b16 %v1285
        %v2297 = vunpack.c.l.b16 %v1286
        %v2298 = vunpack.c.h.b16 %v1286
        %v2299 = vunpack.c.l.b16 %v1287
        %v2300 = vunpack.c.h.b16 %v1287
        %v2301 = vunpack.c.l.b16 %v1288
        %v2302 = vunpack.c.h.b16 %v1288
        %v2303 = vunpack.c.l.b16 %v1289
        %v2304 = vunpack.c.h.b16 %v1289
        %v2305 = vunpack.c.l.b16 %v1290
        %v2306 = vunpack.c.h.b16 %v1290
        %v2307 = vunpack.c.l.b16 %v1291
        %v2308 = vunpack.c.h.b16 %v1291
        %v2309 = vunpack.c.l.b16 %v1292
        %v2310 = vunpack.c.h.b16 %v1292
        %v2311 = vunpack.c.l.b16 %v1293
        %v2312 = vunpack.c.h.b16 %v1293
        %v2313 = vunpack.c.l.b16 %v1294
        %v2314 = vunpack.c.h.b16 %v1294
        %v2315 = vunpack.c.l.b16 %v1295
        %v2316 = vunpack.c.h.b16 %v1295
        %v2317 = vunpack.c.l.b16 %v1296
        %v2318 = vunpack.c.h.b16 %v1296
        %v2319 = vunpack.c.l.b16 %v1297
        %v2320 = vunpack.c.h.b16 %v1297
        %v2321 = vunpack.c.l.b16 %v1298
        %v2322 = vunpack.c.h.b16 %v1298
        %v2323 = vunpack.c.l.b16 %v1299
        %v2324 = vunpack.c.h.b16 %v1299
        %v2325 = vunpack.c.l.b16 %v1300
        %v2326 = vunpack.c.h.b16 %v1300
        %v2327 = vunpack.c.l.b16 %v1301
        %v2328 = vunpack.c.h.b16 %v1301
        %v2329 = vunpack.c.l.b16 %v1302
        %v2330 = vunpack.c.h.b16 %v1302
        %v2331 = vunpack.c.l.b16 %v1303
        %v2332 = vunpack.c.h.b16 %v1303
        %v2333 = vunpack.c.l.b16 %v1304
        %v2334 = vunpack.c.h.b16 %v1304
        %v2335 = vunpack.c.l.b16 %v1305
        %v2336 = vunpack.c.h.b16 %v1305
        %v2337 = vunpack.c.l.b16 %v1306
        %v2338 = vunpack.c.h.b16 %v1306
        %v2339 = vunpack.c.l.b16 %v1307
        %v2340 = vunpack.c.h.b16 %v1307
        %v2341 = vunpack.c.l.b16 %v1308
        %v2342 = vunpack.c.h.b16 %v1308
        %v2343 = vunpack.c.l.b16 %v1309
        %v2344 = vunpack.c.h.b16 %v1309
        %v2345 = vunpack.c.l.b16 %v1310
        %v2346 = vunpack.c.h.b16 %v1310
        %v2347 = vunpack.c.l.b16 %v1311
        %v2348 = vunpack.c.h.b16 %v1311
        %v2349 = vunpack.c.l.b16 %v1312
        %v2350 = vunpack.c.h.b16 %v1312
        %v2351 = vunpack.c.l.b16 %v1313
        %v2352 = vunpack.c.h.b16 %v1313
        %v2353 = vunpack.c.l.b16 %v1314
        %v2354 = vunpack.c.h.b16 %v1314
        %v2355 = vunpack.c.l.b16 %v1315
        %v2356 = vunpack.c.h.b16 %v1315
        %v2357 = vunpack.c.l.b16 %v1316
        %v2358 = vunpack.c.h.b16 %v1316
        %v2359 = vunpack.c.l.b16 %v1317
        %v2360 = vunpack.c.h.b16 %v1317
        %v2361 = vunpack.c.l.b16 %v1318
        %v2362 = vunpack.c.h.b16 %v1318
        %v2363 = vunpack.c.l.b16 %v1319
        %v2364 = vunpack.c.h.b16 %v1319
        %v2365 = vunpack.c.l.b16 %v1320
        %v2366 = vunpack.c.h.b16 %v1320
        %v2367 = vunpack.c.l.b16 %v1321
        %v2368 = vunpack.c.h.b16 %v1321
        %v2369 = vunpack.c.l.b16 %v1322
        %v2370 = vunpack.c.h.b16 %v1322
        %v2371 = vunpack.c.l.b16 %v1323
        %v2372 = vunpack.c.h.b16 %v1323
        %v2373 = vunpack.c.l.b16 %v1324
        %v2374 = vunpack.c.h.b16 %v1324
        %v2375 = vunpack.c.l.b16 %v1325
        %v2376 = vunpack.c.h.b16 %v1325
        %v2377 = vunpack.c.l.b16 %v1326
        %v2378 = vunpack.c.h.b16 %v1326
        %v2379 = vunpack.c.l.b16 %v1327
        %v2380 = vunpack.c.h.b16 %v1327
        %v2381 = vunpack.c.l.b16 %v1328
        %v2382 = vunpack.c.h.b16 %v1328
        %v2383 = vunpack.c.l.b16 %v1329
        %v2384 = vunpack.c.h.b16 %v1329
        %v2385 = vunpack.c.l.b16 %v1330
        %v2386 = vunpack.c.h.b16 %v1330
        %v2387 = vunpack.c.l.b16 %v1331
        %v2388 = vunpack.c.h.b16 %v1331
        %v2389 = vunpack.c.l.b16 %v1332
        %v2390 = vunpack.c.h.b16 %v1332
        %v2391 = vunpack.c.l.b16 %v1333
        %v2392 = vunpack.c.h.b16 %v1333
        %v2393 = vunpack.c.l.b16 %v1334
        %v2394 = vunpack.c.h.b16 %v1334
        %v2395 = vunpack.c.l.b16 %v1335
        %v2396 = vunpack.c.h.b16 %v1335
        %v2397 = vunpack.c.l.b16 %v1336
        %v2398 = vunpack.c.h.b16 %v1336
        %v2399 = vunpack.c.l.b16 %v1337
        %v2400 = vunpack.c.h.b16 %v1337
        %v2401 = vunpack.c.l.b16 %v1338
        %v2402 = vunpack.c.h.b16 %v1338
        %v2403 = vunpack.c.l.b16 %v1339
        %v2404 = vunpack.c.h.b16 %v1339
        %v2405 = vunpack.c.l.b16 %v1340
        %v2406 = vunpack.c.h.b16 %v1340
        %v2407 = vunpack.c.l.b16 %v1341
        %v2408 = vunpack.c.h.b16 %v1341
        %v2409 = vunpack.c.l.b16 %v1342
        %v2410 = vunpack.c.h.b16 %v1342
        %v2411 = vunpack.c.l.b16 %v1343
        %v2412 = vunpack.c.h.b16 %v1343
        %v2413 = vunpack.c.l.b16 %v1344
        %v2414 = vunpack.c.h.b16 %v1344
        %v2415 = vunpack.c.l.b16 %v1345
        %v2416 = vunpack.c.h.b16 %v1345
        %v2417 = vunpack.c.l.b16 %v1346
        %v2418 = vunpack.c.h.b16 %v1346
        %v2419 = vunpack.c.l.b16 %v1347
        %v2420 = vunpack.c.h.b16 %v1347
        %v2421 = vunpack.c.l.b16 %v1348
        %v2422 = vunpack.c.h.b16 %v1348
        %v2423 = vunpack.c.l.b16 %v1349
        %v2424 = vunpack.c.h.b16 %v1349
        %v2425 = vunpack.c.l.b16 %v1350
        %v2426 = vunpack.c.h.b16 %v1350
        %v2427 = vunpack.c.l.b16 %v1351
        %v2428 = vunpack.c.h.b16 %v1351
        %v2429 = vunpack.c.l.b16 %v1352
        %v2430 = vunpack.c.h.b16 %v1352
        %v2431 = vunpack.c.l.b16 %v1353
        %v2432 = vunpack.c.h.b16 %v1353
        %v2433 = vunpack.c.l.b16 %v1354
        %v2434 = vunpack.c.h.b16 %v1354
        %v2435 = vunpack.c.l.b16 %v1355
        %v2436 = vunpack.c.h.b16 %v1355
        %v2437 = vunpack.c.l.b16 %v1356
        %v2438 = vunpack.c.h.b16 %v1356
        %v2439 = vunpack.c.l.b16 %v1357
        %v2440 = vunpack.c.h.b16 %v1357
        %v2441 = vunpack.c.l.b16 %v1358
        %v2442 = vunpack.c.h.b16 %v1358
        %v2443 = vunpack.c.l.b16 %v1359
        %v2444 = vunpack.c.h.b16 %v1359
        %v2445 = vunpack.c.l.b16 %v1360
        %v2446 = vunpack.c.h.b16 %v1360
        %v2447 = vunpack.c.l.b16 %v1361
        %v2448 = vunpack.c.h.b16 %v1361
        %v2449 = vunpack.c.l.b16 %v1362
        %v2450 = vunpack.c.h.b16 %v1362
        %v2451 = vunpack.c.l.b16 %v1363
        %v2452 = vunpack.c.h.b16 %v1363
        %v2453 = vunpack.c.l.b16 %v1364
        %v2454 = vunpack.c.h.b16 %v1364
        %v2455 = vunpack.c.l.b16 %v1365
        %v2456 = vunpack.c.h.b16 %v1365
        %v2457 = vunpack.c.l.b16 %v1366
        %v2458 = vunpack.c.h.b16 %v1366
        %v2459 = vunpack.c.l.b16 %v1367
        %v2460 = vunpack.c.h.b16 %v1367
        %v2461 = vunpack.c.l.b16 %v1368
        %v2462 = vunpack.c.h.b16 %v1368
        %v2463 = vunpack.c.l.b16 %v1369
        %v2464 = vunpack.c.h.b16 %v1369
        %v2465 = vunpack.c.l.b16 %v1370
        %v2466 = vunpack.c.h.b16 %v1370
        %v2467 = vunpack.c.l.b16 %v1371
        %v2468 = vunpack.c.h.b16 %v1371
        %v2469 = vunpack.c.l.b16 %v1372
        %v2470 = vunpack.c.h.b16 %v1372
        %v2471 = vunpack.c.l.b16 %v1373
        %v2472 = vunpack.c.h.b16 %v1373
        %v2473 = vunpack.c.l.b16 %v1374
        %v2474 = vunpack.c.h.b16 %v1374
        %v2475 = vunpack.c.l.b16 %v1375
        %v2476 = vunpack.c.h.b16 %v1375
        %v2477 = vunpack.c.l.b16 %v1376
        %v2478 = vunpack.c.h.b16 %v1376
        %v2479 = vunpack.c.l.b16 %v1377
        %v2480 = vunpack.c.h.b16 %v1377
        %v2481 = vunpack.c.l.b16 %v1378
        %v2482 = vunpack.c.h.b16 %v1378
        %v2483 = vunpack.c.l.b16 %v1379
        %v2484 = vunpack.c.h.b16 %v1379
        %v2485 = vunpack.c.l.b16 %v1380
        %v2486 = vunpack.c.h.b16 %v1380
        %v2487 = vunpack.c.l.b16 %v1381
        %v2488 = vunpack.c.h.b16 %v1381
        %v2489 = vunpack.c.l.b16 %v1382
        %v2490 = vunpack.c.h.b16 %v1382
        %v2491 = vunpack.c.l.b16 %v1383
        %v2492 = vunpack.c.h.b16 %v1383
        %v2493 = vunpack.c.l.b16 %v1384
        %v2494 = vunpack.c.h.b16 %v1384
        %v2495 = vunpack.c.l.b16 %v1385
        %v2496 = vunpack.c.h.b16 %v1385
        %v2497 = vunpack.c.l.b16 %v1386
        %v2498 = vunpack.c.h.b16 %v1386
        %v2499 = vunpack.c.l.b16 %v1387
        %v2500 = vunpack.c.h.b16 %v1387
        %v2501 = vunpack.c.l.b16 %v1388
        %v2502 = vunpack.c.h.b16 %v1388
        %v2503 = vunpack.c.l.b16 %v1389
        %v2504 = vunpack.c.h.b16 %v1389
        %v2505 = vunpack.c.l.b16 %v1390
        %v2506 = vunpack.c.h.b16 %v1390
        %v2507 = vunpack.c.l.b16 %v1391
        %v2508 = vunpack.c.h.b16 %v1391
        %v2509 = vunpack.c.l.b16 %v1392
        %v2510 = vunpack.c.h.b16 %v1392
        %v2511 = vunpack.c.l.b16 %v1393
        %v2512 = vunpack.c.h.b16 %v1393
        %v2513 = vunpack.c.l.b16 %v1394
        %v2514 = vunpack.c.h.b16 %v1394
        %v2515 = vunpack.c.l.b16 %v1395
        %v2516 = vunpack.c.h.b16 %v1395
        %v2517 = vunpack.c.l.b16 %v1396
        %v2518 = vunpack.c.h.b16 %v1396
        %v2519 = vunpack.c.l.b16 %v1397
        %v2520 = vunpack.c.h.b16 %v1397
        %v2521 = vunpack.c.l.b16 %v1398
        %v2522 = vunpack.c.h.b16 %v1398
        %v2523 = vunpack.c.l.b16 %v1399
        %v2524 = vunpack.c.h.b16 %v1399
        %v2525 = vunpack.c.l.b16 %v1400
        %v2526 = vunpack.c.h.b16 %v1400
        %v2527 = vunpack.c.l.b16 %v1401
        %v2528 = vunpack.c.h.b16 %v1401
        %v2529 = vunpack.c.l.b16 %v1402
        %v2530 = vunpack.c.h.b16 %v1402
        %v2531 = vunpack.c.l.b16 %v1403
        %v2532 = vunpack.c.h.b16 %v1403
        %v2533 = vunpack.c.l.b16 %v1404
        %v2534 = vunpack.c.h.b16 %v1404
        %v2535 = vunpack.c.l.b16 %v1405
        %v2536 = vunpack.c.h.b16 %v1405
        %v2537 = vunpack.c.l.b16 %v1406
        %v2538 = vunpack.c.h.b16 %v1406
        %v2539 = vunpack.c.l.b16 %v1407
        %v2540 = vunpack.c.h.b16 %v1407
        %v2541 = vunpack.c.l.b16 %v1408
        %v2542 = vunpack.c.h.b16 %v1408
        %v2543 = vunpack.c.l.b16 %v1409
        %v2544 = vunpack.c.h.b16 %v1409
        %v2545 = vunpack.c.l.b16 %v1410
        %v2546 = vunpack.c.h.b16 %v1410
        %v2547 = vunpack.c.l.b16 %v1411
        %v2548 = vunpack.c.h.b16 %v1411
        %v2549 = vunpack.c.l.b16 %v1412
        %v2550 = vunpack.c.h.b16 %v1412
        %v2551 = vunpack.c.l.b16 %v1413
        %v2552 = vunpack.c.h.b16 %v1413
        %v2553 = vunpack.c.l.b16 %v1414
        %v2554 = vunpack.c.h.b16 %v1414
        %v2555 = vunpack.c.l.b16 %v1415
        %v2556 = vunpack.c.h.b16 %v1415
        %v2557 = vunpack.c.l.b16 %v1416
        %v2558 = vunpack.c.h.b16 %v1416
        %v2559 = vunpack.c.l.b16 %v1417
        %v2560 = vunpack.c.h.b16 %v1417
        %v2561 = vunpack.c.l.b16 %v1418
        %v2562 = vunpack.c.h.b16 %v1418
        %v2563 = vunpack.c.l.b16 %v1419
        %v2564 = vunpack.c.h.b16 %v1419
        %v2565 = vunpack.c.l.b16 %v1420
        %v2566 = vunpack.c.h.b16 %v1420
        %v2567 = vunpack.c.l.b16 %v1421
        %v2568 = vunpack.c.h.b16 %v1421
        %v2569 = vunpack.c.l.b16 %v1422
        %v2570 = vunpack.c.h.b16 %v1422
        %v2571 = vunpack.c.l.b16 %v1423
        %v2572 = vunpack.c.h.b16 %v1423
        %v2573 = vunpack.c.l.b16 %v1424
        %v2574 = vunpack.c.h.b16 %v1424
        %v2575 = vunpack.c.l.b16 %v1425
        %v2576 = vunpack.c.h.b16 %v1425
        %v2577 = vunpack.c.l.b16 %v1426
        %v2578 = vunpack.c.h.b16 %v1426
        %v2579 = vunpack.c.l.b16 %v1427
        %v2580 = vunpack.c.h.b16 %v1427
        %v2581 = vunpack.c.l.b16 %v1428
        %v2582 = vunpack.c.h.b16 %v1428
        %v2583 = vunpack.c.l.b16 %v1429
        %v2584 = vunpack.c.h.b16 %v1429
        %v2585 = vunpack.c.l.b16 %v1430
        %v2586 = vunpack.c.h.b16 %v1430
        %v2587 = vunpack.c.l.b16 %v1431
        %v2588 = vunpack.c.h.b16 %v1431
        %v2589 = vunpack.c.l.b16 %v1432
        %v2590 = vunpack.c.h.b16 %v1432
        %v2591 = vunpack.c.l.b16 %v1433
        %v2592 = vunpack.c.h.b16 %v1433
        %v2593 = vunpack.c.l.b16 %v1434
        %v2594 = vunpack.c.h.b16 %v1434
        %v2595 = vunpack.c.l.b16 %v1435
        %v2596 = vunpack.c.h.b16 %v1435
        %v2597 = vunpack.c.l.b16 %v1436
        %v2598 = vunpack.c.h.b16 %v1436
        %v2599 = vunpack.c.l.b16 %v1437
        %v2600 = vunpack.c.h.b16 %v1437
        %v2601 = vunpack.c.l.b16 %v1438
        %v2602 = vunpack.c.h.b16 %v1438
        %v2603 = vunpack.c.l.b16 %v1439
        %v2604 = vunpack.c.h.b16 %v1439
        %v2605 = vunpack.c.l.b16 %v1440
        %v2606 = vunpack.c.h.b16 %v1440
        %v2607 = vunpack.c.l.b16 %v1441
        %v2608 = vunpack.c.h.b16 %v1441
        %v2609 = vunpack.c.l.b16 %v1442
        %v2610 = vunpack.c.h.b16 %v1442
        %v2611 = vunpack.c.l.b16 %v1443
        %v2612 = vunpack.c.h.b16 %v1443
        %v2613 = vunpack.c.l.b16 %v1444
        %v2614 = vunpack.c.h.b16 %v1444
        %v2615 = vunpack.c.l.b16 %v1445
        %v2616 = vunpack.c.h.b16 %v1445
        %v2617 = vunpack.c.l.b16 %v1446
        %v2618 = vunpack.c.h.b16 %v1446
        %v2619 = vunpack.c.l.b16 %v1447
        %v2620 = vunpack.c.h.b16 %v1447
        %v2621 = vunpack.c.l.b16 %v1448
        %v2622 = vunpack.c.h.b16 %v1448
        %v2623 = vunpack.c.l.b16 %v1449
        %v2624 = vunpack.c.h.b16 %v1449
        %v2625 = vunpack.c.l.b16 %v1450
        %v2626 = vunpack.c.h.b16 %v1450
        %v2627 = vunpack.c.l.b16 %v1451
        %v2628 = vunpack.c.h.b16 %v1451
        %v2629 = vunpack.c.l.b16 %v1452
        %v2630 = vunpack.c.h.b16 %v1452
        %v2631 = vunpack.c.l.b16 %v1453
        %v2632 = vunpack.c.h.b16 %v1453
        %v2633 = vunpack.c.l.b16 %v1454
        %v2634 = vunpack.c.h.b16 %v1454
        %v2635 = vunpack.c.l.b16 %v1455
        %v2636 = vunpack.c.h.b16 %v1455
        %v2637 = vunpack.c.l.b16 %v1456
        %v2638 = vunpack.c.h.b16 %v1456
        %v2639 = vunpack.c.l.b16 %v1457
        %v2640 = vunpack.c.h.b16 %v1457
        %v2641 = vunpack.c.l.b16 %v1458
        %v2642 = vunpack.c.h.b16 %v1458
        %v2643 = vunpack.c.l.b16 %v1459
        %v2644 = vunpack.c.h.b16 %v1459
        %v2645 = vunpack.c.l.b16 %v1460
        %v2646 = vunpack.c.h.b16 %v1460
        %v2647 = vunpack.c.l.b16 %v1461
        %v2648 = vunpack.c.h.b16 %v1461
        %v2649 = vunpack.c.l.b16 %v1462
        %v2650 = vunpack.c.h.b16 %v1462
        %v2651 = vunpack.c.l.b16 %v1463
        %v2652 = vunpack.c.h.b16 %v1463
        %v2653 = vunpack.c.l.b16 %v1464
        %v2654 = vunpack.c.h.b16 %v1464
        %v2655 = vunpack.c.l.b16 %v1465
        %v2656 = vunpack.c.h.b16 %v1465
        %v2657 = vunpack.c.l.b16 %v1466
        %v2658 = vunpack.c.h.b16 %v1466
        %v2659 = vunpack.c.l.b16 %v1467
        %v2660 = vunpack.c.h.b16 %v1467
        %v2661 = vunpack.c.l.b16 %v1468
        %v2662 = vunpack.c.h.b16 %v1468
        %v2663 = vunpack.c.l.b16 %v1469
        %v2664 = vunpack.c.h.b16 %v1469
        %v2665 = vunpack.c.l.b16 %v1470
        %v2666 = vunpack.c.h.b16 %v1470
        %v2667 = vunpack.c.l.b16 %v1471
        %v2668 = vunpack.c.h.b16 %v1471
        %v2669 = vunpack.c.l.b16 %v1472
        %v2670 = vunpack.c.h.b16 %v1472
        %v2671 = vunpack.c.l.b16 %v1473
        %v2672 = vunpack.c.h.b16 %v1473
        %v2673 = vunpack.c.l.b16 %v1474
        %v2674 = vunpack.c.h.b16 %v1474
        %v2675 = vunpack.c.l.b16 %v1475
        %v2676 = vunpack.c.h.b16 %v1475
        %v2677 = vunpack.c.l.b16 %v1476
        %v2678 = vunpack.c.h.b16 %v1476
        %v2679 = vunpack.c.l.b16 %v1477
        %v2680 = vunpack.c.h.b16 %v1477
        %v2681 = vunpack.c.l.b16 %v1478
        %v2682 = vunpack.c.h.b16 %v1478
        %v2683 = vunpack.c.l.b16 %v1479
        %v2684 = vunpack.c.h.b16 %v1479
        %v2685 = vunpack.c.l.b16 %v1480
        %v2686 = vunpack.c.h.b16 %v1480
        %v2687 = vunpack.c.l.b16 %v1481
        %v2688 = vunpack.c.h.b16 %v1481
        %v2689 = vunpack.c.l.b16 %v1482
        %v2690 = vunpack.c.h.b16 %v1482
        %v2691 = vunpack.c.l.b16 %v1483
        %v2692 = vunpack.c.h.b16 %v1483
        %v2693 = vunpack.c.l.b16 %v1484
        %v2694 = vunpack.c.h.b16 %v1484
        %v2695 = vunpack.c.l.b16 %v1485
        %v2696 = vunpack.c.h.b16 %v1485
        %v2697 = vunpack.c.l.b16 %v1486
        %v2698 = vunpack.c.h.b16 %v1486
        %v2699 = vunpack.c.l.b16 %v1487
        %v2700 = vunpack.c.h.b16 %v1487
        %v2701 = vunpack.c.l.b16 %v1488
        %v2702 = vunpack.c.h.b16 %v1488
        %v2703 = vunpack.c.l.b16 %v1489
        %v2704 = vunpack.c.h.b16 %v1489
        %v2705 = vunpack.c.l.b16 %v1490
        %v2706 = vunpack.c.h.b16 %v1490
        %v2707 = vunpack.c.l.b16 %v1491
        %v2708 = vunpack.c.h.b16 %v1491
        %v2709 = vunpack.c.l.b16 %v1492
        %v2710 = vunpack.c.h.b16 %v1492
        %v2711 = vunpack.c.l.b16 %v1493
        %v2712 = vunpack.c.h.b16 %v1493
        %v2713 = vunpack.c.l.b16 %v1494
        %v2714 = vunpack.c.h.b16 %v1494
        %v2715 = vunpack.c.l.b16 %v1495
        %v2716 = vunpack.c.h.b16 %v1495
        %v2717 = vunpack.c.l.b16 %v1496
        %v2718 = vunpack.c.h.b16 %v1496
        %v2719 = vunpack.c.l.b16 %v1497
        %v2720 = vunpack.c.h.b16 %v1497
        %v2721 = vunpack.c.l.b16 %v1498
        %v2722 = vunpack.c.h.b16 %v1498
        %v2723 = vunpack.c.l.b16 %v1499
        %v2724 = vunpack.c.h.b16 %v1499
        %v2725 = vunpack.c.l.b16 %v1500
        %v2726 = vunpack.c.h.b16 %v1500
        %v2727 = vunpack.c.l.b16 %v1501
        %v2728 = vunpack.c.h.b16 %v1501
        %v2729 = vunpack.c.l.b16 %v1502
        %v2730 = vunpack.c.h.b16 %v1502
        %v2731 = vunpack.c.l.b16 %v1503
        %v2732 = vunpack.c.h.b16 %v1503
        %v2733 = vunpack.c.l.b16 %v1504
        %v2734 = vunpack.c.h.b16 %v1504
        %v2735 = vunpack.c.l.b16 %v1505
        %v2736 = vunpack.c.h.b16 %v1505
        %v2737 = vunpack.c.l.b16 %v1506
        %v2738 = vunpack.c.h.b16 %v1506
        %v2739 = vunpack.c.l.b16 %v1507
        %v2740 = vunpack.c.h.b16 %v1507
        %v2741 = vunpack.c.l.b16 %v1508
        %v2742 = vunpack.c.h.b16 %v1508
        %v2743 = vunpack.c.l.b16 %v1509
        %v2744 = vunpack.c.h.b16 %v1509
        %v2745 = vunpack.c.l.b16 %v1510
        %v2746 = vunpack.c.h.b16 %v1510
        %v2747 = vunpack.c.l.b16 %v1511
        %v2748 = vunpack.c.h.b16 %v1511
        %v2749 = vunpack.c.l.b16 %v1512
        %v2750 = vunpack.c.h.b16 %v1512
        %v2751 = vunpack.c.l.b16 %v1513
        %v2752 = vunpack.c.h.b16 %v1513
        %v2753 = vunpack.c.l.b16 %v1514
        %v2754 = vunpack.c.h.b16 %v1514
        %v2755 = vunpack.c.l.b16 %v1515
        %v2756 = vunpack.c.h.b16 %v1515
        %v2757 = vunpack.c.l.b16 %v1516
        %v2758 = vunpack.c.h.b16 %v1516
        %v2759 = vunpack.c.l.b16 %v1517
        %v2760 = vunpack.c.h.b16 %v1517
        %v2761 = vunpack.c.l.b16 %v1518
        %v2762 = vunpack.c.h.b16 %v1518
        %v2763 = vunpack.c.l.b16 %v1519
        %v2764 = vunpack.c.h.b16 %v1519
        %v2765 = vunpack.c.l.b16 %v1520
        %v2766 = vunpack.c.h.b16 %v1520
        %v2767 = vunpack.c.l.b16 %v1521
        %v2768 = vunpack.c.h.b16 %v1521
        %v2769 = vunpack.c.l.b16 %v1522
        %v2770 = vunpack.c.h.b16 %v1522
        %v2771 = vunpack.c.l.b16 %v1523
        %v2772 = vunpack.c.h.b16 %v1523
        %v2773 = vunpack.c.l.b16 %v1524
        %v2774 = vunpack.c.h.b16 %v1524
        %v2775 = vunpack.c.l.b16 %v1525
        %v2776 = vunpack.c.h.b16 %v1525
        %v2777 = vunpack.c.l.b16 %v1526
        %v2778 = vunpack.c.h.b16 %v1526
        %v2779 = vunpack.c.l.b16 %v1527
        %v2780 = vunpack.c.h.b16 %v1527
        %v2781 = vunpack.c.l.b16 %v1528
        %v2782 = vunpack.c.h.b16 %v1528
        %v2783 = vunpack.c.l.b16 %v1529
        %v2784 = vunpack.c.h.b16 %v1529
        %v2785 = vunpack.c.l.b16 %v1530
        %v2786 = vunpack.c.h.b16 %v1530
        %v2787 = vunpack.c.l.b16 %v1531
        %v2788 = vunpack.c.h.b16 %v1531
        %v2789 = vunpack.c.l.b16 %v1532
        %v2790 = vunpack.c.h.b16 %v1532
        %v2791 = vunpack.c.l.b16 %v1533
        %v2792 = vunpack.c.h.b16 %v1533
        %v2793 = vunpack.c.l.b16 %v1534
        %v2794 = vunpack.c.h.b16 %v1534
        %v2795 = vunpack.c.l.b16 %v1535
        %v2796 = vunpack.c.h.b16 %v1535
        %v2797 = vunpack.c.l.b16 %v1536
        %v2798 = vunpack.c.h.b16 %v1536
        %v2799 = vunpack.c.l.b16 %v1537
        %v2800 = vunpack.c.h.b16 %v1537
        %v2801 = vunpack.c.l.b16 %v1538
        %v2802 = vunpack.c.h.b16 %v1538
        %v2803 = vunpack.c.l.b16 %v1539
        %v2804 = vunpack.c.h.b16 %v1539
        %v2805 = vunpack.c.l.b16 %v1540
        %v2806 = vunpack.c.h.b16 %v1540
        %v2807 = vunpack.c.l.b16 %v1541
        %v2808 = vunpack.c.h.b16 %v1541
        %v2809 = vunpack.c.l.b16 %v1542
        %v2810 = vunpack.c.h.b16 %v1542
        %v2811 = vunpack.c.l.b16 %v1543
        %v2812 = vunpack.c.h.b16 %v1543
        %v2813 = vunpack.c.l.b16 %v1544
        %v2814 = vunpack.c.h.b16 %v1544
        %v2815 = vunpack.c.l.b16 %v1545
        %v2816 = vunpack.c.h.b16 %v1545
        %v2817 = vunpack.c.l.b16 %v1546
        %v2818 = vunpack.c.h.b16 %v1546
        %v2819 = vunpack.c.l.b16 %v1547
        %v2820 = vunpack.c.h.b16 %v1547
        %v2821 = vunpack.c.l.b16 %v1548
        %v2822 = vunpack.c.h.b16 %v1548
        %v2823 = vunpack.c.l.b16 %v1549
        %v2824 = vunpack.c.h.b16 %v1549
        %v2825 = vunpack.c.l.b16 %v1550
        %v2826 = vunpack.c.h.b16 %v1550
        %v2827 = vunpack.c.l.b16 %v1551
        %v2828 = vunpack.c.h.b16 %v1551
        %v2829 = vunpack.c.l.b16 %v1552
        %v2830 = vunpack.c.h.b16 %v1552
        %v2831 = vunpack.c.l.b16 %v1553
        %v2832 = vunpack.c.h.b16 %v1553
        %v2833 = vunpack.c.l.b16 %v1554
        %v2834 = vunpack.c.h.b16 %v1554
        %v2835 = vunpack.c.l.b16 %v1555
        %v2836 = vunpack.c.h.b16 %v1555
        %v2837 = vunpack.c.l.b16 %v1556
        %v2838 = vunpack.c.h.b16 %v1556
        %v2839 = vunpack.c.l.b16 %v1557
        %v2840 = vunpack.c.h.b16 %v1557
        %v2841 = vunpack.c.l.b16 %v1558
        %v2842 = vunpack.c.h.b16 %v1558
        %v2843 = vunpack.c.l.b16 %v1559
        %v2844 = vunpack.c.h.b16 %v1559
        %v2845 = vunpack.c.l.b16 %v1560
        %v2846 = vunpack.c.h.b16 %v1560
        %v2847 = vunpack.c.l.b16 %v1561
        %v2848 = vunpack.c.h.b16 %v1561
        %v2849 = vunpack.c.l.b16 %v1562
        %v2850 = vunpack.c.h.b16 %v1562
        %v2851 = vunpack.c.l.b16 %v1563
        %v2852 = vunpack.c.h.b16 %v1563
        %v2853 = vunpack.c.l.b16 %v1564
        %v2854 = vunpack.c.h.b16 %v1564
        %v2855 = vunpack.c.l.b16 %v1565
        %v2856 = vunpack.c.h.b16 %v1565
        %v2857 = vunpack.c.l.b16 %v1566
        %v2858 = vunpack.c.h.b16 %v1566
        %v2859 = vunpack.c.l.b16 %v1567
        %v2860 = vunpack.c.h.b16 %v1567
        %v2861 = vunpack.c.l.b16 %v1568
        %v2862 = vunpack.c.h.b16 %v1568
        %v2863 = vunpack.c.l.b16 %v1569
        %v2864 = vunpack.c.h.b16 %v1569
        %v2865 = vunpack.c.l.b16 %v1570
        %v2866 = vunpack.c.h.b16 %v1570
        %v2867 = vpack.c.b16 %v2015, %v2003
        %v2868 = vpack.c.b16 %v2016, %v2004
        %v2869 = vpack.c.b16 %v2017, %v2005
        %v2870 = vpack.c.b16 %v2018, %v2006
        %v2871 = vpack.c.b16 %v2019, %v2007
        %v2872 = vpack.c.b16 %v2020, %v2008
        %v2873 = vpack.c.b16 %v2021, %v2009
        %v2874 = vpack.c.b16 %v2022, %v2010
        %v2875 = vpack.c.b16 %v2023, %v2011
        %v2876 = vpack.c.b16 %v2024, %v2012
        %v2877 = vpack.c.b16 %v2025, %v2013
        %v2878 = vpack.c.b16 %v2026, %v2014
        %v2879 = vpack.c.b16 %v2039, %v2027
        %v2880 = vpack.c.b16 %v2040, %v2028
        %v2881 = vpack.c.b16 %v2041, %v2029
        %v2882 = vpack.c.b16 %v2042, %v2030
        %v2883 = vpack.c.b16 %v2043, %v2031
        %v2884 = vpack.c.b16 %v2044, %v2032
        %v2885 = vpack.c.b16 %v2045, %v2033
        %v2886 = vpack.c.b16 %v2046, %v2034
        %v2887 = vpack.c.b16 %v2047, %v2035
        %v2888 = vpack.c.b16 %v2048, %v2036
        %v2889 = vpack.c.b16 %v2049, %v2037
        %v2890 = vpack.c.b16 %v2050, %v2038
        %v2891 = vpack.c.b16 %v2063, %v2051
        %v2892 = vpack.c.b16 %v2064, %v2052
        %v2893 = vpack.c.b16 %v2065, %v2053
        %v2894 = vpack.c.b16 %v2066, %v2054
        %v2895 = vpack.c.b16 %v2067, %v2055
        %v2896 = vpack.c.b16 %v2068, %v2056
        %v2897 = vpack.c.b16 %v2069, %v2057
        %v2898 = vpack.c.b16 %v2070, %v2058
        %v2899 = vpack.c.b16 %v2071, %v2059
        %v2900 = vpack.c.b16 %v2072, %v2060
        %v2901 = vpack.c.b16 %v2073, %v2061
        %v2902 = vpack.c.b16 %v2074, %v2062
        %v2903 = vpack.c.b16 %v2087, %v2075
        %v2904 = vpack.c.b16 %v2088, %v2076
        %v2905 = vpack.c.b16 %v2089, %v2077
        %v2906 = vpack.c.b16 %v2090, %v2078
        %v2907 = vpack.c.b16 %v2091, %v2079
        %v2908 = vpack.c.b16 %v2092, %v2080
        %v2909 = vpack.c.b16 %v2093, %v2081
        %v2910 = vpack.c.b16 %v2094, %v2082
        %v2911 = vpack.c.b16 %v2095, %v2083
        %v2912 = vpack.c.b16 %v2096, %v2084
        %v2913 = vpack.c.b16 %v2097, %v2085
        %v2914 = vpack.c.b16 %v2098, %v2086
        %v2915 = vpack.c.b16 %v2111, %v2099
        %v2916 = vpack.c.b16 %v2112, %v2100
        %v2917 = vpack.c.b16 %v2113, %v2101
        %v2918 = vpack.c.b16 %v2114, %v2102
        %v2919 = vpack.c.b16 %v2115, %v2103
        %v2920 = vpack.c.b16 %v2116, %v2104
        %v2921 = vpack.c.b16 %v2117, %v2105
        %v2922 = vpack.c.b16 %v2118, %v2106
        %v2923 = vpack.c.b16 %v2119, %v2107
        %v2924 = vpack.c.b16 %v2120, %v2108
        %v2925 = vpack.c.b16 %v2121, %v2109
        %v2926 = vpack.c.b16 %v2122, %v2110
        %v2927 = vpack.c.b16 %v2135, %v2123
        %v2928 = vpack.c.b16 %v2136, %v2124
        %v2929 = vpack.c.b16 %v2137, %v2125
        %v2930 = vpack.c.b16 %v2138, %v2126
        %v2931 = vpack.c.b16 %v2139, %v2127
        %v2932 = vpack.c.b16 %v2140, %v2128
        %v2933 = vpack.c.b16 %v2141, %v2129
        %v2934 = vpack.c.b16 %v2142, %v2130
        %v2935 = vpack.c.b16 %v2143, %v2131
        %v2936 = vpack.c.b16 %v2144, %v2132
        %v2937 = vpack.c.b16 %v2145, %v2133
        %v2938 = vpack.c.b16 %v2146, %v2134
        %v2939 = vpack.c.b16 %v2159, %v2147
        %v2940 = vpack.c.b16 %v2160, %v2148
        %v2941 = vpack.c.b16 %v2161, %v2149
        %v2942 = vpack.c.b16 %v2162, %v2150
        %v2943 = vpack.c.b16 %v2163, %v2151
        %v2944 = vpack.c.b16 %v2164, %v2152
        %v2945 = vpack.c.b16 %v2165, %v2153
        %v2946 = vpack.c.b16 %v2166, %v2154
        %v2947 = vpack.c.b16 %v2167, %v2155
        %v2948 = vpack.c.b16 %v2168, %v2156
        %v2949 = vpack.c.b16 %v2169, %v2157
        %v2950 = vpack.c.b16 %v2170, %v2158
        %v2951 = vpack.c.b16 %v2183, %v2171
        %v2952 = vpack.c.b16 %v2184, %v2172
        %v2953 = vpack.c.b16 %v2185, %v2173
        %v2954 = vpack.c.b16 %v2186, %v2174
        %v2955 = vpack.c.b16 %v2187, %v2175
        %v2956 = vpack.c.b16 %v2188, %v2176
        %v2957 = vpack.c.b16 %v2189, %v2177
        %v2958 = vpack.c.b16 %v2190, %v2178
        %v2959 = vpack.c.b16 %v2191, %v2179
        %v2960 = vpack.c.b16 %v2192, %v2180
        %v2961 = vpack.c.b16 %v2193, %v2181
        %v2962 = vpack.c.b16 %v2194, %v2182
        %v2963 = vpack.c.b16 %v2207, %v2195
        %v2964 = vpack.c.b16 %v2208, %v2196
        %v2965 = vpack.c.b16 %v2209, %v2197
        %v2966 = vpack.c.b16 %v2210, %v2198
        %v2967 = vpack.c.b16 %v2211, %v2199
        %v2968 = vpack.c.b16 %v2212, %v2200
        %v2969 = vpack.c.b16 %v2213, %v2201
        %v2970 = vpack.c.b16 %v2214, %v2202
        %v2971 = vpack.c.b16 %v2215, %v2203
        %v2972 = vpack.c.b16 %v2216, %v2204
        %v2973 = vpack.c.b16 %v2217, %v2205
        %v2974 = vpack.c.b16 %v2218, %v2206
        %v2975 = vpack.c.b16 %v2231, %v2219
        %v2976 = vpack.c.b16 %v2232, %v2220
        %v2977 = vpack.c.b16 %v2233, %v2221
        %v2978 = vpack.c.b16 %v2234, %v2222
        %v2979 = vpack.c.b16 %v2235, %v2223
        %v2980 = vpack.c.b16 %v2236, %v2224
        %v2981 = vpack.c.b16 %v2237, %v2225
        %v2982 = vpack.c.b16 %v2238, %v2226
        %v2983 = vpack.c.b16 %v2239, %v2227
        %v2984 = vpack.c.b16 %v2240, %v2228
        %v2985 = vpack.c.b16 %v2241, %v2229
        %v2986 = vpack.c.b16 %v2242, %v2230
        %v2987 = vpack.c.b16 %v2255, %v2243
        %v2988 = vpack.c.b16 %v2256, %v2244
        %v2989 = vpack.c.b16 %v2257, %v2245
        %v2990 = vpack.c.b16 %v2258, %v2246
        %v2991 = vpack.c.b16 %v2259, %v2247
        %v2992 = vpack.c.b16 %v2260, %v2248
        %v2993 = vpack.c.b16 %v2261, %v2249
        %v2994 = vpack.c.b16 %v2262, %v2250
        %v2995 = vpack.c.b16 %v2263, %v2251
        %v2996 = vpack.c.b16 %v2264, %v2252
        %v2997 = vpack.c.b16 %v2265, %v2253
        %v2998 = vpack.c.b16 %v2266, %v2254
        %v2999 = vpack.c.b16 %v2279, %v2267
        %v3000 = vpack.c.b16 %v2280, %v2268
        %v3001 = vpack.c.b16 %v2281, %v2269
        %v3002 = vpack.c.b16 %v2282, %v2270
        %v3003 = vpack.c.b16 %v2283, %v2271
        %v3004 = vpack.c.b16 %v2284, %v2272
        %v3005 = vpack.c.b16 %v2285, %v2273
        %v3006 = vpack.c.b16 %v2286, %v2274
        %v3007 = vpack.c.b16 %v2287, %v2275
        %v3008 = vpack.c.b16 %v2288, %v2276
        %v3009 = vpack.c.b16 %v2289, %v2277
        %v3010 = vpack.c.b16 %v2290, %v2278
        %v3011 = vpack.c.b16 %v2303, %v2291
        %v3012 = vpack.c.b16 %v2304, %v2292
        %v3013 = vpack.c.b16 %v2305, %v2293
        %v3014 = vpack.c.b16 %v2306, %v2294
        %v3015 = vpack.c.b16 %v2307, %v2295
        %v3016 = vpack.c.b16 %v2308, %v2296
        %v3017 = vpack.c.b16 %v2309, %v2297
        %v3018 = vpack.c.b16 %v2310, %v2298
        %v3019 = vpack.c.b16 %v2311, %v2299
        %v3020 = vpack.c.b16 %v2312, %v2300
        %v3021 = vpack.c.b16 %v2313, %v2301
        %v3022 = vpack.c.b16 %v2314, %v2302
        %v3023 = vpack.c.b16 %v2327, %v2315
        %v3024 = vpack.c.b16 %v2328, %v2316
        %v3025 = vpack.c.b16 %v2329, %v2317
        %v3026 = vpack.c.b16 %v2330, %v2318
        %v3027 = vpack.c.b16 %v2331, %v2319
        %v3028 = vpack.c.b16 %v2332, %v2320
        %v3029 = vpack.c.b16 %v2333, %v2321
        %v3030 = vpack.c.b16 %v2334, %v2322
        %v3031 = vpack.c.b16 %v2335, %v2323
        %v3032 = vpack.c.b16 %v2336, %v2324
        %v3033 = vpack.c.b16 %v2337, %v2325
        %v3034 = vpack.c.b16 %v2338, %v2326
        %v3035 = vpack.c.b16 %v2351, %v2339
        %v3036 = vpack.c.b16 %v2352, %v2340
        %v3037 = vpack.c.b16 %v2353, %v2341
        %v3038 = vpack.c.b16 %v2354, %v2342
        %v3039 = vpack.c.b16 %v2355, %v2343
        %v3040 = vpack.c.b16 %v2356, %v2344
        %v3041 = vpack.c.b16 %v2357, %v2345
        %v3042 = vpack.c.b16 %v2358, %v2346
        %v3043 = vpack.c.b16 %v2359, %v2347
        %v3044 = vpack.c.b16 %v2360, %v2348
        %v3045 = vpack.c.b16 %v2361, %v2349
        %v3046 = vpack.c.b16 %v2362, %v2350
        %v3047 = vpack.c.b16 %v2375, %v2363
        %v3048 = vpack.c.b16 %v2376, %v2364
        %v3049 = vpack.c.b16 %v2377, %v2365
        %v3050 = vpack.c.b16 %v2378, %v2366
        %v3051 = vpack.c.b16 %v2379, %v2367
        %v3052 = vpack.c.b16 %v2380, %v2368
        %v3053 = vpack.c.b16 %v2381, %v2369
        %v3054 = vpack.c.b16 %v2382, %v2370
        %v3055 = vpack.c.b16 %v2383, %v2371
        %v3056 = vpack.c.b16 %v2384, %v2372
        %v3057 = vpack.c.b16 %v2385, %v2373
        %v3058 = vpack.c.b16 %v2386, %v2374
        %v3059 = vpack.c.b16 %v2399, %v2387
        %v3060 = vpack.c.b16 %v2400, %v2388
        %v3061 = vpack.c.b16 %v2401, %v2389
        %v3062 = vpack.c.b16 %v2402, %v2390
        %v3063 = vpack.c.b16 %v2403, %v2391
        %v3064 = vpack.c.b16 %v2404, %v2392
        %v3065 = vpack.c.b16 %v2405, %v2393
        %v3066 = vpack.c.b16 %v2406, %v2394
        %v3067 = vpack.c.b16 %v2407, %v2395
        %v3068 = vpack.c.b16 %v2408, %v2396
        %v3069 = vpack.c.b16 %v2409, %v2397
        %v3070 = vpack.c.b16 %v2410, %v2398
        %v3071 = vpack.c.b16 %v2423, %v2411
        %v3072 = vpack.c.b16 %v2424, %v2412
        %v3073 = vpack.c.b16 %v2425, %v2413
        %v3074 = vpack.c.b16 %v2426, %v2414
        %v3075 = vpack.c.b16 %v2427, %v2415
        %v3076 = vpack.c.b16 %v2428, %v2416
        %v3077 = vpack.c.b16 %v2429, %v2417
        %v3078 = vpack.c.b16 %v2430, %v2418
        %v3079 = vpack.c.b16 %v2431, %v2419
        %v3080 = vpack.c.b16 %v2432, %v2420
        %v3081 = vpack.c.b16 %v2433, %v2421
        %v3082 = vpack.c.b16 %v2434, %v2422
        %v3083 = vpack.c.b16 %v2447, %v2435
        %v3084 = vpack.c.b16 %v2448, %v2436
        %v3085 = vpack.c.b16 %v2449, %v2437
        %v3086 = vpack.c.b16 %v2450, %v2438
        %v3087 = vpack.c.b16 %v2451, %v2439
        %v3088 = vpack.c.b16 %v2452, %v2440
        %v3089 = vpack.c.b16 %v2453, %v2441
        %v3090 = vpack.c.b16 %v2454, %v2442
        %v3091 = vpack.c.b16 %v2455, %v2443
        %v3092 = vpack.c.b16 %v2456, %v2444
        %v3093 = vpack.c.b16 %v2457, %v2445
        %v3094 = vpack.c.b16 %v2458, %v2446
        %v3095 = vpack.c.b16 %v2471, %v2459
        %v3096 = vpack.c.b16 %v2472, %v2460
        %v3097 = vpack.c.b16 %v2473, %v2461
        %v3098 = vpack.c.b16 %v2474, %v2462
        %v3099 = vpack.c.b16 %v2475, %v2463
        %v3100 = vpack.c.b16 %v2476, %v2464
        %v3101 = vpack.c.b16 %v2477, %v2465
        %v3102 = vpack.c.b16 %v2478, %v2466
        %v3103 = vpack.c.b16 %v2479, %v2467
        %v3104 = vpack.c.b16 %v2480, %v2468
        %v3105 = vpack.c.b16 %v2481, %v2469
        %v3106 = vpack.c.b16 %v2482, %v2470
        %v3107 = vpack.c.b16 %v2495, %v2483
        %v3108 = vpack.c.b16 %v2496, %v2484
        %v3109 = vpack.c.b16 %v2497, %v2485
        %v3110 = vpack.c.b16 %v2498, %v2486
        %v3111 = vpack.c.b16 %v2499, %v2487
        %v3112 = vpack.c.b16 %v2500, %v2488
        %v3113 = vpack.c.b16 %v2501, %v2489
        %v3114 = vpack.c.b16 %v2502, %v2490
        %v3115 = vpack.c.b16 %v2503, %v2491
        %v3116 = vpack.c.b16 %v2504, %v2492
        %v3117 = vpack.c.b16 %v2505, %v2493
        %v3118 = vpack.c.b16 %v2506, %v2494
        %v3119 = vpack.c.b16 %v2519, %v2507
        %v3120 = vpack.c.b16 %v2520, %v2508
        %v3121 = vpack.c.b16 %v2521, %v2509
        %v3122 = vpack.c.b16 %v2522, %v2510
        %v3123 = vpack.c.b16 %v2523, %v2511
        %v3124 = vpack.c.b16 %v2524, %v2512
        %v3125 = vpack.c.b16 %v2525, %v2513
        %v3126 = vpack.c.b16 %v2526, %v2514
        %v3127 = vpack.c.b16 %v2527, %v2515
        %v3128 = vpack.c.b16 %v2528, %v2516
        %v3129 = vpack.c.b16 %v2529, %v2517
        %v3130 = vpack.c.b16 %v2530, %v2518
        %v3131 = vpack.c.b16 %v2543, %v2531
        %v3132 = vpack.c.b16 %v2544, %v2532
        %v3133 = vpack.c.b16 %v2545, %v2533
        %v3134 = vpack.c.b16 %v2546, %v2534
        %v3135 = vpack.c.b16 %v2547, %v2535
        %v3136 = vpack.c.b16 %v2548, %v2536
        %v3137 = vpack.c.b16 %v2549, %v2537
        %v3138 = vpack.c.b16 %v2550, %v2538
        %v3139 = vpack.c.b16 %v2551, %v2539
        %v3140 = vpack.c.b16 %v2552, %v2540
        %v3141 = vpack.c.b16 %v2553, %v2541
        %v3142 = vpack.c.b16 %v2554, %v2542
        %v3143 = vpack.c.b16 %v2567, %v2555
        %v3144 = vpack.c.b16 %v2568, %v2556
        %v3145 = vpack.c.b16 %v2569, %v2557
        %v3146 = vpack.c.b16 %v2570, %v2558
        %v3147 = vpack.c.b16 %v2571, %v2559
        %v3148 = vpack.c.b16 %v2572, %v2560
        %v3149 = vpack.c.b16 %v2573, %v2561
        %v3150 = vpack.c.b16 %v2574, %v2562
        %v3151 = vpack.c.b16 %v2575, %v2563
        %v3152 = vpack.c.b16 %v2576, %v2564
        %v3153 = vpack.c.b16 %v2577, %v2565
        %v3154 = vpack.c.b16 %v2578, %v2566
        %v3155 = vpack.c.b16 %v2591, %v2579
        %v3156 = vpack.c.b16 %v2592, %v2580
        %v3157 = vpack.c.b16 %v2593, %v2581
        %v3158 = vpack.c.b16 %v2594, %v2582
        %v3159 = vpack.c.b16 %v2595, %v2583
        %v3160 = vpack.c.b16 %v2596, %v2584
        %v3161 = vpack.c.b16 %v2597, %v2585
        %v3162 = vpack.c.b16 %v2598, %v2586
        %v3163 = vpack.c.b16 %v2599, %v2587
        %v3164 = vpack.c.b16 %v2600, %v2588
        %v3165 = vpack.c.b16 %v2601, %v2589
        %v3166 = vpack.c.b16 %v2602, %v2590
        %v3167 = vpack.c.b16 %v2615, %v2603
        %v3168 = vpack.c.b16 %v2616, %v2604
        %v3169 = vpack.c.b16 %v2617, %v2605
        %v3170 = vpack.c.b16 %v2618, %v2606
        %v3171 = vpack.c.b16 %v2619, %v2607
        %v3172 = vpack.c.b16 %v2620, %v2608
        %v3173 = vpack.c.b16 %v2621, %v2609
        %v3174 = vpack.c.b16 %v2622, %v2610
        %v3175 = vpack.c.b16 %v2623, %v2611
        %v3176 = vpack.c.b16 %v2624, %v2612
        %v3177 = vpack.c.b16 %v2625, %v2613
        %v3178 = vpack.c.b16 %v2626, %v2614
        %v3179 = vpack.c.b16 %v2639, %v2627
        %v3180 = vpack.c.b16 %v2640, %v2628
        %v3181 = vpack.c.b16 %v2641, %v2629
        %v3182 = vpack.c.b16 %v2642, %v2630
        %v3183 = vpack.c.b16 %v2643, %v2631
        %v3184 = vpack.c.b16 %v2644, %v2632
        %v3185 = vpack.c.b16 %v2645, %v2633
        %v3186 = vpack.c.b16 %v2646, %v2634
        %v3187 = vpack.c.b16 %v2647, %v2635
        %v3188 = vpack.c.b16 %v2648, %v2636
        %v3189 = vpack.c.b16 %v2649, %v2637
        %v3190 = vpack.c.b16 %v2650, %v2638
        %v3191 = vpack.c.b16 %v2663, %v2651
        %v3192 = vpack.c.b16 %v2664, %v2652
        %v3193 = vpack.c.b16 %v2665, %v2653
        %v3194 = vpack.c.b16 %v2666, %v2654
        %v3195 = vpack.c.b16 %v2667, %v2655
        %v3196 = vpack.c.b16 %v2668, %v2656
        %v3197 = vpack.c.b16 %v2669, %v2657
        %v3198 = vpack.c.b16 %v2670, %v2658
        %v3199 = vpack.c.b16 %v2671, %v2659
        %v3200 = vpack.c.b16 %v2672, %v2660
        %v3201 = vpack.c.b16 %v2673, %v2661
        %v3202 = vpack.c.b16 %v2674, %v2662
        %v3203 = vpack.c.b16 %v2687, %v2675
        %v3204 = vpack.c.b16 %v2688, %v2676
        %v3205 = vpack.c.b16 %v2689, %v2677
        %v3206 = vpack.c.b16 %v2690, %v2678
        %v3207 = vpack.c.b16 %v2691, %v2679
        %v3208 = vpack.c.b16 %v2692, %v2680
        %v3209 = vpack.c.b16 %v2693, %v2681
        %v3210 = vpack.c.b16 %v2694, %v2682
        %v3211 = vpack.c.b16 %v2695, %v2683
        %v3212 = vpack.c.b16 %v2696, %v2684
        %v3213 = vpack.c.b16 %v2697, %v2685
        %v3214 = vpack.c.b16 %v2698, %v2686
        %v3215 = vpack.c.b16 %v2711, %v2699
        %v3216 = vpack.c.b16 %v2712, %v2700
        %v3217 = vpack.c.b16 %v2713, %v2701
        %v3218 = vpack.c.b16 %v2714, %v2702
        %v3219 = vpack.c.b16 %v2715, %v2703
        %v3220 = vpack.c.b16 %v2716, %v2704
        %v3221 = vpack.c.b16 %v2717, %v2705
        %v3222 = vpack.c.b16 %v2718, %v2706
        %v3223 = vpack.c.b16 %v2719, %v2707
        %v3224 = vpack.c.b16 %v2720, %v2708
        %v3225 = vpack.c.b16 %v2721, %v2709
        %v3226 = vpack.c.b16 %v2722, %v2710
        %v3227 = vpack.c.b16 %v2735, %v2723
        %v3228 = vpack.c.b16 %v2736, %v2724
        %v3229 = vpack.c.b16 %v2737, %v2725
        %v3230 = vpack.c.b16 %v2738, %v2726
        %v3231 = vpack.c.b16 %v2739, %v2727
        %v3232 = vpack.c.b16 %v2740, %v2728
        %v3233 = vpack.c.b16 %v2741, %v2729
        %v3234 = vpack.c.b16 %v2742, %v2730
        %v3235 = vpack.c.b16 %v2743, %v2731
        %v3236 = vpack.c.b16 %v2744, %v2732
        %v3237 = vpack.c.b16 %v2745, %v2733
        %v3238 = vpack.c.b16 %v2746, %v2734
        %v3239 = vpack.c.b16 %v2759, %v2747
        %v3240 = vpack.c.b16 %v2760, %v2748
        %v3241 = vpack.c.b16 %v2761, %v2749
        %v3242 = vpack.c.b16 %v2762, %v2750
        %v3243 = vpack.c.b16 %v2763, %v2751
        %v3244 = vpack.c.b16 %v2764, %v2752
        %v3245 = vpack.c.b16 %v2765, %v2753
        %v3246 = vpack.c.b16 %v2766, %v2754
        %v3247 = vpack.c.b16 %v2767, %v2755
        %v3248 = vpack.c.b16 %v2768, %v2756
        %v3249 = vpack.c.b16 %v2769, %v2757
        %v3250 = vpack.c.b16 %v2770, %v2758
        %v3251 = vpack.c.b16 %v2783, %v2771
        %v3252 = vpack.c.b16 %v2784, %v2772
        %v3253 = vpack.c.b16 %v2785, %v2773
        %v3254 = vpack.c.b16 %v2786, %v2774
        %v3255 = vpack.c.b16 %v2787, %v2775
        %v3256 = vpack.c.b16 %v2788, %v2776
        %v3257 = vpack.c.b16 %v2789, %v2777
        %v3258 = vpack.c.b16 %v2790, %v2778
        %v3259 = vpack.c.b16 %v2791, %v2779
        %v3260 = vpack.c.b16 %v2792, %v2780
        %v3261 = vpack.c.b16 %v2793, %v2781
        %v3262 = vpack.c.b16 %v2794, %v2782
        %v3263 = vpack.c.b16 %v2807, %v2795
        %v3264 = vpack.c.b16 %v2808, %v2796
        %v3265 = vpack.c.b16 %v2809, %v2797
        %v3266 = vpack.c.b16 %v2810, %v2798
        %v3267 = vpack.c.b16 %v2811, %v2799
        %v3268 = vpack.c.b16 %v2812, %v2800
        %v3269 = vpack.c.b16 %v2813, %v2801
        %v3270 = vpack.c.b16 %v2814, %v2802
        %v3271 = vpack.c.b16 %v2815, %v2803
        %v3272 = vpack.c.b16 %v2816, %v2804
        %v3273 = vpack.c.b16 %v2817, %v2805
        %v3274 = vpack.c.b16 %v2818, %v2806
        %v3275 = vpack.c.b16 %v2831, %v2819
        %v3276 = vpack.c.b16 %v2832, %v2820
        %v3277 = vpack.c.b16 %v2833, %v2821
        %v3278 = vpack.c.b16 %v2834, %v2822
        %v3279 = vpack.c.b16 %v2835, %v2823
        %v3280 = vpack.c.b16 %v2836, %v2824
        %v3281 = vpack.c.b16 %v2837, %v2825
        %v3282 = vpack.c.b16 %v2838, %v2826
        %v3283 = vpack.c.b16 %v2839, %v2827
        %v3284 = vpack.c.b16 %v2840, %v2828
        %v3285 = vpack.c.b16 %v2841, %v2829
        %v3286 = vpack.c.b16 %v2842, %v2830
        %v3287 = vpack.c.b16 %v2855, %v2843
        %v3288 = vpack.c.b16 %v2856, %v2844
        %v3289 = vpack.c.b16 %v2857, %v2845
        %v3290 = vpack.c.b16 %v2858, %v2846
        %v3291 = vpack.c.b16 %v2859, %v2847
        %v3292 = vpack.c.b16 %v2860, %v2848
        %v3293 = vpack.c.b16 %v2861, %v2849
        %v3294 = vpack.c.b16 %v2862, %v2850
        %v3295 = vpack.c.b16 %v2863, %v2851
        %v3296 = vpack.c.b16 %v2864, %v2852
        %v3297 = vpack.c.b16 %v2865, %v2853
        %v3298 = vpack.c.b16 %v2866, %v2854
        %vm3731 = vcmask 523264
        %v3733 = vsel %vm3731, %v1138, 0
        %3735 = vmatpush.bf16.msra.mxu0 %v2951
        %3736 = vmatpush.bf16.msra.mxu0 %v2939
        %3737 = vmatpush.bf16.msra.mxu0 %v2927
        %3738 = vmatpush.bf16.msra.mxu0 %v2915
        %3739 = vmatpush.bf16.msra.mxu0 %v2903
        %3740 = vmatpush.bf16.msra.mxu0 %v2891
        %3741 = vmatpush.bf16.msra.mxu0 %v2879
        %3742 = vmatpush.bf16.msra.mxu0 %v2867
        %3743 = vmatmul.bf16.gmra.mxu0 %v1134
        %v3744 = vpop.f32.mrf.mxu0
        %v3745 = vadd.f32 0.0, %v3744
        %v3746 = vpop.f32.mrf.mxu0
        %v3747 = vadd.f32 0.0, %v3746
        %3748 = vdwg.mxu0
        %3749 = vmatpush.bf16.msra.mxu0 %v3047
        %3750 = vmatpush.bf16.msra.mxu0 %v3035
        %3751 = vmatpush.bf16.msra.mxu0 %v3023
        %3752 = vmatpush.bf16.msra.mxu0 %v3011
        %3753 = vmatpush.bf16.msra.mxu0 %v2999
        %3754 = vmatpush.bf16.msra.mxu0 %v2987
        %3755 = vmatpush.bf16.msra.mxu0 %v2975
        %3756 = vmatpush.bf16.msra.mxu0 %v2963
        %3757 = vmatmul.bf16.gmra.mxu0 %v1135
        %v3758 = vpop.f32.mrf.mxu0
        %v3759 = vadd.f32 %v3745, %v3758
        %v3760 = vpop.f32.mrf.mxu0
        %v3761 = vadd.f32 %v3747, %v3760
        %3762 = vdwg.mxu0
        %3763 = vmatpush.bf16.msra.mxu0 %v3143
        %3764 = vmatpush.bf16.msra.mxu0 %v3131
        %3765 = vmatpush.bf16.msra.mxu0 %v3119
        %3766 = vmatpush.bf16.msra.mxu0 %v3107
        %3767 = vmatpush.bf16.msra.mxu0 %v3095
        %3768 = vmatpush.bf16.msra.mxu0 %v3083
        %3769 = vmatpush.bf16.msra.mxu0 %v3071
        %3770 = vmatpush.bf16.msra.mxu0 %v3059
        %3771 = vmatmul.bf16.gmra.mxu0 %v1136
        %v3772 = vpop.f32.mrf.mxu0
        %v3773 = vadd.f32 %v3759, %v3772
        %v3774 = vpop.f32.mrf.mxu0
        %v3775 = vadd.f32 %v3761, %v3774
        %3776 = vdwg.mxu0
        %3777 = vmatpush.bf16.msra.mxu0 %v3239
        %3778 = vmatpush.bf16.msra.mxu0 %v3227
        %3779 = vmatpush.bf16.msra.mxu0 %v3215
        %3780 = vmatpush.bf16.msra.mxu0 %v3203
        %3781 = vmatpush.bf16.msra.mxu0 %v3191
        %3782 = vmatpush.bf16.msra.mxu0 %v3179
        %3783 = vmatpush.bf16.msra.mxu0 %v3167
        %3784 = vmatpush.bf16.msra.mxu0 %v3155
        %3785 = vmatmul.bf16.gmra.mxu0 %v1137
        %v3786 = vpop.f32.mrf.mxu0
        %v3787 = vadd.f32 %v3773, %v3786
        %v3788 = vpop.f32.mrf.mxu0
        %v3789 = vadd.f32 %v3775, %v3788
        %3790 = vdwg.mxu0
        %3791 = vmatpush.bf16.msra.mxu0 0
        %3792 = vmatpush.bf16.msra.mxu0 0
        %3793 = vmatpush.bf16.msra.mxu0 0
        %3794 = vmatpush.bf16.msra.mxu0 0
        %3795 = vmatpush.bf16.msra.mxu0 %v3287
        %3796 = vmatpush.bf16.msra.mxu0 %v3275
        %3797 = vmatpush.bf16.msra.mxu0 %v3263
        %3798 = vmatpush.bf16.msra.mxu0 %v3251
        %3799 = vmatmul.bf16.gmra.mxu0 %v3733
        %v3800 = vpop.f32.mrf.mxu0
        %v3801 = vadd.f32 %v3787, %v3800
        %v3802 = vpop.f32.mrf.mxu0
        %v3803 = vadd.f32 %v3789, %v3802
        %3804 = vdwg.mxu0
        %3805 = vmatpush.bf16.msra.mxu0 %v2952
        %3806 = vmatpush.bf16.msra.mxu0 %v2940
        %3807 = vmatpush.bf16.msra.mxu0 %v2928
        %3808 = vmatpush.bf16.msra.mxu0 %v2916
        %3809 = vmatpush.bf16.msra.mxu0 %v2904
        %3810 = vmatpush.bf16.msra.mxu0 %v2892
        %3811 = vmatpush.bf16.msra.mxu0 %v2880
        %3812 = vmatpush.bf16.msra.mxu0 %v2868
        %3813 = vmatmul.bf16.gmra.mxu0 %v1134
        %v3814 = vpop.f32.mrf.mxu0
        %v3815 = vadd.f32 0.0, %v3814
        %v3816 = vpop.f32.mrf.mxu0
        %v3817 = vadd.f32 0.0, %v3816
        %3818 = vdwg.mxu0
        %3819 = vmatpush.bf16.msra.mxu0 %v3048
        %3820 = vmatpush.bf16.msra.mxu0 %v3036
        %3821 = vmatpush.bf16.msra.mxu0 %v3024
        %3822 = vmatpush.bf16.msra.mxu0 %v3012
        %3823 = vmatpush.bf16.msra.mxu0 %v3000
        %3824 = vmatpush.bf16.msra.mxu0 %v2988
        %3825 = vmatpush.bf16.msra.mxu0 %v2976
        %3826 = vmatpush.bf16.msra.mxu0 %v2964
        %3827 = vmatmul.bf16.gmra.mxu0 %v1135
        %v3828 = vpop.f32.mrf.mxu0
        %v3829 = vadd.f32 %v3815, %v3828
        %v3830 = vpop.f32.mrf.mxu0
        %v3831 = vadd.f32 %v3817, %v3830
        %3832 = vdwg.mxu0
        %3833 = vmatpush.bf16.msra.mxu0 %v3144
        %3834 = vmatpush.bf16.msra.mxu0 %v3132
        %3835 = vmatpush.bf16.msra.mxu0 %v3120
        %3836 = vmatpush.bf16.msra.mxu0 %v3108
        %3837 = vmatpush.bf16.msra.mxu0 %v3096
        %3838 = vmatpush.bf16.msra.mxu0 %v3084
        %3839 = vmatpush.bf16.msra.mxu0 %v3072
        %3840 = vmatpush.bf16.msra.mxu0 %v3060
        %3841 = vmatmul.bf16.gmra.mxu0 %v1136
        %v3842 = vpop.f32.mrf.mxu0
        %v3843 = vadd.f32 %v3829, %v3842
        %v3844 = vpop.f32.mrf.mxu0
        %v3845 = vadd.f32 %v3831, %v3844
        %3846 = vdwg.mxu0
        %3847 = vmatpush.bf16.msra.mxu0 %v3240
        %3848 = vmatpush.bf16.msra.mxu0 %v3228
        %3849 = vmatpush.bf16.msra.mxu0 %v3216
        %3850 = vmatpush.bf16.msra.mxu0 %v3204
        %3851 = vmatpush.bf16.msra.mxu0 %v3192
        %3852 = vmatpush.bf16.msra.mxu0 %v3180
        %3853 = vmatpush.bf16.msra.mxu0 %v3168
        %3854 = vmatpush.bf16.msra.mxu0 %v3156
        %3855 = vmatmul.bf16.gmra.mxu0 %v1137
        %v3856 = vpop.f32.mrf.mxu0
        %v3857 = vadd.f32 %v3843, %v3856
        %v3858 = vpop.f32.mrf.mxu0
        %v3859 = vadd.f32 %v3845, %v3858
        %3860 = vdwg.mxu0
        %3861 = vmatpush.bf16.msra.mxu0 0
        %3862 = vmatpush.bf16.msra.mxu0 0
        %3863 = vmatpush.bf16.msra.mxu0 0
        %3864 = vmatpush.bf16.msra.mxu0 0
        %3865 = vmatpush.bf16.msra.mxu0 %v3288
        %3866 = vmatpush.bf16.msra.mxu0 %v3276
        %3867 = vmatpush.bf16.msra.mxu0 %v3264
        %3868 = vmatpush.bf16.msra.mxu0 %v3252
        %3869 = vmatmul.bf16.gmra.mxu0 %v3733
        %v3870 = vpop.f32.mrf.mxu0
        %v3871 = vadd.f32 %v3857, %v3870
        %v3872 = vpop.f32.mrf.mxu0
        %v3873 = vadd.f32 %v3859, %v3872
        %3874 = vdwg.mxu0
        %3875 = vmatpush.bf16.msra.mxu0 %v2953
        %3876 = vmatpush.bf16.msra.mxu0 %v2941
        %3877 = vmatpush.bf16.msra.mxu0 %v2929
        %3878 = vmatpush.bf16.msra.mxu0 %v2917
        %3879 = vmatpush.bf16.msra.mxu0 %v2905
        %3880 = vmatpush.bf16.msra.mxu0 %v2893
        %3881 = vmatpush.bf16.msra.mxu0 %v2881
        %3882 = vmatpush.bf16.msra.mxu0 %v2869
        %3883 = vmatmul.bf16.gmra.mxu0 %v1134
        %v3884 = vpop.f32.mrf.mxu0
        %v3885 = vadd.f32 0.0, %v3884
        %v3886 = vpop.f32.mrf.mxu0
        %v3887 = vadd.f32 0.0, %v3886
        %3888 = vdwg.mxu0
        %3889 = vmatpush.bf16.msra.mxu0 %v3049
        %3890 = vmatpush.bf16.msra.mxu0 %v3037
        %3891 = vmatpush.bf16.msra.mxu0 %v3025
        %3892 = vmatpush.bf16.msra.mxu0 %v3013
        %3893 = vmatpush.bf16.msra.mxu0 %v3001
        %3894 = vmatpush.bf16.msra.mxu0 %v2989
        %3895 = vmatpush.bf16.msra.mxu0 %v2977
        %3896 = vmatpush.bf16.msra.mxu0 %v2965
        %3897 = vmatmul.bf16.gmra.mxu0 %v1135
        %v3898 = vpop.f32.mrf.mxu0
        %v3899 = vadd.f32 %v3885, %v3898
        %v3900 = vpop.f32.mrf.mxu0
        %v3901 = vadd.f32 %v3887, %v3900
        %3902 = vdwg.mxu0
        %3903 = vmatpush.bf16.msra.mxu0 %v3145
        %3904 = vmatpush.bf16.msra.mxu0 %v3133
        %3905 = vmatpush.bf16.msra.mxu0 %v3121
        %3906 = vmatpush.bf16.msra.mxu0 %v3109
        %3907 = vmatpush.bf16.msra.mxu0 %v3097
        %3908 = vmatpush.bf16.msra.mxu0 %v3085
        %3909 = vmatpush.bf16.msra.mxu0 %v3073
        %3910 = vmatpush.bf16.msra.mxu0 %v3061
        %3911 = vmatmul.bf16.gmra.mxu0 %v1136
        %v3912 = vpop.f32.mrf.mxu0
        %v3913 = vadd.f32 %v3899, %v3912
        %v3914 = vpop.f32.mrf.mxu0
        %v3915 = vadd.f32 %v3901, %v3914
        %3916 = vdwg.mxu0
        %3917 = vmatpush.bf16.msra.mxu0 %v3241
        %3918 = vmatpush.bf16.msra.mxu0 %v3229
        %3919 = vmatpush.bf16.msra.mxu0 %v3217
        %3920 = vmatpush.bf16.msra.mxu0 %v3205
        %3921 = vmatpush.bf16.msra.mxu0 %v3193
        %3922 = vmatpush.bf16.msra.mxu0 %v3181
        %3923 = vmatpush.bf16.msra.mxu0 %v3169
        %3924 = vmatpush.bf16.msra.mxu0 %v3157
        %3925 = vmatmul.bf16.gmra.mxu0 %v1137
        %v3926 = vpop.f32.mrf.mxu0
        %v3927 = vadd.f32 %v3913, %v3926
        %v3928 = vpop.f32.mrf.mxu0
        %v3929 = vadd.f32 %v3915, %v3928
        %3930 = vdwg.mxu0
        %3931 = vmatpush.bf16.msra.mxu0 0
        %3932 = vmatpush.bf16.msra.mxu0 0
        %3933 = vmatpush.bf16.msra.mxu0 0
        %3934 = vmatpush.bf16.msra.mxu0 0
        %3935 = vmatpush.bf16.msra.mxu0 %v3289
        %3936 = vmatpush.bf16.msra.mxu0 %v3277
        %3937 = vmatpush.bf16.msra.mxu0 %v3265
        %3938 = vmatpush.bf16.msra.mxu0 %v3253
        %3939 = vmatmul.bf16.gmra.mxu0 %v3733
        %v3940 = vpop.f32.mrf.mxu0
        %v3941 = vadd.f32 %v3927, %v3940
        %v3942 = vpop.f32.mrf.mxu0
        %v3943 = vadd.f32 %v3929, %v3942
        %3944 = vdwg.mxu0
        %3945 = vmatpush.bf16.msra.mxu0 %v2954
        %3946 = vmatpush.bf16.msra.mxu0 %v2942
        %3947 = vmatpush.bf16.msra.mxu0 %v2930
        %3948 = vmatpush.bf16.msra.mxu0 %v2918
        %3949 = vmatpush.bf16.msra.mxu0 %v2906
        %3950 = vmatpush.bf16.msra.mxu0 %v2894
        %3951 = vmatpush.bf16.msra.mxu0 %v2882
        %3952 = vmatpush.bf16.msra.mxu0 %v2870
        %3953 = vmatmul.bf16.gmra.mxu0 %v1134
        %v3954 = vpop.f32.mrf.mxu0
        %v3955 = vadd.f32 0.0, %v3954
        %v3956 = vpop.f32.mrf.mxu0
        %v3957 = vadd.f32 0.0, %v3956
        %3958 = vdwg.mxu0
        %3959 = vmatpush.bf16.msra.mxu0 %v3050
        %3960 = vmatpush.bf16.msra.mxu0 %v3038
        %3961 = vmatpush.bf16.msra.mxu0 %v3026
        %3962 = vmatpush.bf16.msra.mxu0 %v3014
        %3963 = vmatpush.bf16.msra.mxu0 %v3002
        %3964 = vmatpush.bf16.msra.mxu0 %v2990
        %3965 = vmatpush.bf16.msra.mxu0 %v2978
        %3966 = vmatpush.bf16.msra.mxu0 %v2966
        %3967 = vmatmul.bf16.gmra.mxu0 %v1135
        %v3968 = vpop.f32.mrf.mxu0
        %v3969 = vadd.f32 %v3955, %v3968
        %v3970 = vpop.f32.mrf.mxu0
        %v3971 = vadd.f32 %v3957, %v3970
        %3972 = vdwg.mxu0
        %3973 = vmatpush.bf16.msra.mxu0 %v3146
        %3974 = vmatpush.bf16.msra.mxu0 %v3134
        %3975 = vmatpush.bf16.msra.mxu0 %v3122
        %3976 = vmatpush.bf16.msra.mxu0 %v3110
        %3977 = vmatpush.bf16.msra.mxu0 %v3098
        %3978 = vmatpush.bf16.msra.mxu0 %v3086
        %3979 = vmatpush.bf16.msra.mxu0 %v3074
        %3980 = vmatpush.bf16.msra.mxu0 %v3062
        %3981 = vmatmul.bf16.gmra.mxu0 %v1136
        %v3982 = vpop.f32.mrf.mxu0
        %v3983 = vadd.f32 %v3969, %v3982
        %v3984 = vpop.f32.mrf.mxu0
        %v3985 = vadd.f32 %v3971, %v3984
        %3986 = vdwg.mxu0
        %3987 = vmatpush.bf16.msra.mxu0 %v3242
        %3988 = vmatpush.bf16.msra.mxu0 %v3230
        %3989 = vmatpush.bf16.msra.mxu0 %v3218
        %3990 = vmatpush.bf16.msra.mxu0 %v3206
        %3991 = vmatpush.bf16.msra.mxu0 %v3194
        %3992 = vmatpush.bf16.msra.mxu0 %v3182
        %3993 = vmatpush.bf16.msra.mxu0 %v3170
        %3994 = vmatpush.bf16.msra.mxu0 %v3158
        %3995 = vmatmul.bf16.gmra.mxu0 %v1137
        %v3996 = vpop.f32.mrf.mxu0
        %v3997 = vadd.f32 %v3983, %v3996
        %v3998 = vpop.f32.mrf.mxu0
        %v3999 = vadd.f32 %v3985, %v3998
        %4000 = vdwg.mxu0
        %4001 = vmatpush.bf16.msra.mxu0 0
        %4002 = vmatpush.bf16.msra.mxu0 0
        %4003 = vmatpush.bf16.msra.mxu0 0
        %4004 = vmatpush.bf16.msra.mxu0 0
        %4005 = vmatpush.bf16.msra.mxu0 %v3290
        %4006 = vmatpush.bf16.msra.mxu0 %v3278
        %4007 = vmatpush.bf16.msra.mxu0 %v3266
        %4008 = vmatpush.bf16.msra.mxu0 %v3254
        %4009 = vmatmul.bf16.gmra.mxu0 %v3733
        %v4010 = vpop.f32.mrf.mxu0
        %v4011 = vadd.f32 %v3997, %v4010
        %v4012 = vpop.f32.mrf.mxu0
        %v4013 = vadd.f32 %v3999, %v4012
        %4014 = vdwg.mxu0
        %4015 = vmatpush.bf16.msra.mxu0 %v2955
        %4016 = vmatpush.bf16.msra.mxu0 %v2943
        %4017 = vmatpush.bf16.msra.mxu0 %v2931
        %4018 = vmatpush.bf16.msra.mxu0 %v2919
        %4019 = vmatpush.bf16.msra.mxu0 %v2907
        %4020 = vmatpush.bf16.msra.mxu0 %v2895
        %4021 = vmatpush.bf16.msra.mxu0 %v2883
        %4022 = vmatpush.bf16.msra.mxu0 %v2871
        %4023 = vmatmul.bf16.gmra.mxu0 %v1134
        %v4024 = vpop.f32.mrf.mxu0
        %v4025 = vadd.f32 0.0, %v4024
        %v4026 = vpop.f32.mrf.mxu0
        %v4027 = vadd.f32 0.0, %v4026
        %4028 = vdwg.mxu0
        %4029 = vmatpush.bf16.msra.mxu0 %v3051
        %4030 = vmatpush.bf16.msra.mxu0 %v3039
        %4031 = vmatpush.bf16.msra.mxu0 %v3027
        %4032 = vmatpush.bf16.msra.mxu0 %v3015
        %4033 = vmatpush.bf16.msra.mxu0 %v3003
        %4034 = vmatpush.bf16.msra.mxu0 %v2991
        %4035 = vmatpush.bf16.msra.mxu0 %v2979
        %4036 = vmatpush.bf16.msra.mxu0 %v2967
        %4037 = vmatmul.bf16.gmra.mxu0 %v1135
        %v4038 = vpop.f32.mrf.mxu0
        %v4039 = vadd.f32 %v4025, %v4038
        %v4040 = vpop.f32.mrf.mxu0
        %v4041 = vadd.f32 %v4027, %v4040
        %4042 = vdwg.mxu0
        %4043 = vmatpush.bf16.msra.mxu0 %v3147
        %4044 = vmatpush.bf16.msra.mxu0 %v3135
        %4045 = vmatpush.bf16.msra.mxu0 %v3123
        %4046 = vmatpush.bf16.msra.mxu0 %v3111
        %4047 = vmatpush.bf16.msra.mxu0 %v3099
        %4048 = vmatpush.bf16.msra.mxu0 %v3087
        %4049 = vmatpush.bf16.msra.mxu0 %v3075
        %4050 = vmatpush.bf16.msra.mxu0 %v3063
        %4051 = vmatmul.bf16.gmra.mxu0 %v1136
        %v4052 = vpop.f32.mrf.mxu0
        %v4053 = vadd.f32 %v4039, %v4052
        %v4054 = vpop.f32.mrf.mxu0
        %v4055 = vadd.f32 %v4041, %v4054
        %4056 = vdwg.mxu0
        %4057 = vmatpush.bf16.msra.mxu0 %v3243
        %4058 = vmatpush.bf16.msra.mxu0 %v3231
        %4059 = vmatpush.bf16.msra.mxu0 %v3219
        %4060 = vmatpush.bf16.msra.mxu0 %v3207
        %4061 = vmatpush.bf16.msra.mxu0 %v3195
        %4062 = vmatpush.bf16.msra.mxu0 %v3183
        %4063 = vmatpush.bf16.msra.mxu0 %v3171
        %4064 = vmatpush.bf16.msra.mxu0 %v3159
        %4065 = vmatmul.bf16.gmra.mxu0 %v1137
        %v4066 = vpop.f32.mrf.mxu0
        %v4067 = vadd.f32 %v4053, %v4066
        %v4068 = vpop.f32.mrf.mxu0
        %v4069 = vadd.f32 %v4055, %v4068
        %4070 = vdwg.mxu0
        %4071 = vmatpush.bf16.msra.mxu0 0
        %4072 = vmatpush.bf16.msra.mxu0 0
        %4073 = vmatpush.bf16.msra.mxu0 0
        %4074 = vmatpush.bf16.msra.mxu0 0
        %4075 = vmatpush.bf16.msra.mxu0 %v3291
        %4076 = vmatpush.bf16.msra.mxu0 %v3279
        %4077 = vmatpush.bf16.msra.mxu0 %v3267
        %4078 = vmatpush.bf16.msra.mxu0 %v3255
        %4079 = vmatmul.bf16.gmra.mxu0 %v3733
        %v4080 = vpop.f32.mrf.mxu0
        %v4081 = vadd.f32 %v4067, %v4080
        %v4082 = vpop.f32.mrf.mxu0
        %v4083 = vadd.f32 %v4069, %v4082
        %4084 = vdwg.mxu0
        %4085 = vmatpush.bf16.msra.mxu0 %v2956
        %4086 = vmatpush.bf16.msra.mxu0 %v2944
        %4087 = vmatpush.bf16.msra.mxu0 %v2932
        %4088 = vmatpush.bf16.msra.mxu0 %v2920
        %4089 = vmatpush.bf16.msra.mxu0 %v2908
        %4090 = vmatpush.bf16.msra.mxu0 %v2896
        %4091 = vmatpush.bf16.msra.mxu0 %v2884
        %4092 = vmatpush.bf16.msra.mxu0 %v2872
        %4093 = vmatmul.bf16.gmra.mxu0 %v1134
        %v4094 = vpop.f32.mrf.mxu0
        %v4095 = vadd.f32 0.0, %v4094
        %v4096 = vpop.f32.mrf.mxu0
        %v4097 = vadd.f32 0.0, %v4096
        %4098 = vdwg.mxu0
        %4099 = vmatpush.bf16.msra.mxu0 %v3052
        %4100 = vmatpush.bf16.msra.mxu0 %v3040
        %4101 = vmatpush.bf16.msra.mxu0 %v3028
        %4102 = vmatpush.bf16.msra.mxu0 %v3016
        %4103 = vmatpush.bf16.msra.mxu0 %v3004
        %4104 = vmatpush.bf16.msra.mxu0 %v2992
        %4105 = vmatpush.bf16.msra.mxu0 %v2980
        %4106 = vmatpush.bf16.msra.mxu0 %v2968
        %4107 = vmatmul.bf16.gmra.mxu0 %v1135
        %v4108 = vpop.f32.mrf.mxu0
        %v4109 = vadd.f32 %v4095, %v4108
        %v4110 = vpop.f32.mrf.mxu0
        %v4111 = vadd.f32 %v4097, %v4110
        %4112 = vdwg.mxu0
        %4113 = vmatpush.bf16.msra.mxu0 %v3148
        %4114 = vmatpush.bf16.msra.mxu0 %v3136
        %4115 = vmatpush.bf16.msra.mxu0 %v3124
        %4116 = vmatpush.bf16.msra.mxu0 %v3112
        %4117 = vmatpush.bf16.msra.mxu0 %v3100
        %4118 = vmatpush.bf16.msra.mxu0 %v3088
        %4119 = vmatpush.bf16.msra.mxu0 %v3076
        %4120 = vmatpush.bf16.msra.mxu0 %v3064
        %4121 = vmatmul.bf16.gmra.mxu0 %v1136
        %v4122 = vpop.f32.mrf.mxu0
        %v4123 = vadd.f32 %v4109, %v4122
        %v4124 = vpop.f32.mrf.mxu0
        %v4125 = vadd.f32 %v4111, %v4124
        %4126 = vdwg.mxu0
        %4127 = vmatpush.bf16.msra.mxu0 %v3244
        %4128 = vmatpush.bf16.msra.mxu0 %v3232
        %4129 = vmatpush.bf16.msra.mxu0 %v3220
        %4130 = vmatpush.bf16.msra.mxu0 %v3208
        %4131 = vmatpush.bf16.msra.mxu0 %v3196
        %4132 = vmatpush.bf16.msra.mxu0 %v3184
        %4133 = vmatpush.bf16.msra.mxu0 %v3172
        %4134 = vmatpush.bf16.msra.mxu0 %v3160
        %4135 = vmatmul.bf16.gmra.mxu0 %v1137
        %v4136 = vpop.f32.mrf.mxu0
        %v4137 = vadd.f32 %v4123, %v4136
        %v4138 = vpop.f32.mrf.mxu0
        %v4139 = vadd.f32 %v4125, %v4138
        %4140 = vdwg.mxu0
        %4141 = vmatpush.bf16.msra.mxu0 0
        %4142 = vmatpush.bf16.msra.mxu0 0
        %4143 = vmatpush.bf16.msra.mxu0 0
        %4144 = vmatpush.bf16.msra.mxu0 0
        %4145 = vmatpush.bf16.msra.mxu0 %v3292
        %4146 = vmatpush.bf16.msra.mxu0 %v3280
        %4147 = vmatpush.bf16.msra.mxu0 %v3268
        %4148 = vmatpush.bf16.msra.mxu0 %v3256
        %4149 = vmatmul.bf16.gmra.mxu0 %v3733
        %v4150 = vpop.f32.mrf.mxu0
        %v4151 = vadd.f32 %v4137, %v4150
        %v4152 = vpop.f32.mrf.mxu0
        %v4153 = vadd.f32 %v4139, %v4152
        %4154 = vdwg.mxu0
        %4155 = vmatpush.bf16.msra.mxu0 %v2957
        %4156 = vmatpush.bf16.msra.mxu0 %v2945
        %4157 = vmatpush.bf16.msra.mxu0 %v2933
        %4158 = vmatpush.bf16.msra.mxu0 %v2921
        %4159 = vmatpush.bf16.msra.mxu0 %v2909
        %4160 = vmatpush.bf16.msra.mxu0 %v2897
        %4161 = vmatpush.bf16.msra.mxu0 %v2885
        %4162 = vmatpush.bf16.msra.mxu0 %v2873
        %4163 = vmatmul.bf16.gmra.mxu0 %v1134
        %v4164 = vpop.f32.mrf.mxu0
        %v4165 = vadd.f32 0.0, %v4164
        %v4166 = vpop.f32.mrf.mxu0
        %v4167 = vadd.f32 0.0, %v4166
        %4168 = vdwg.mxu0
        %4169 = vmatpush.bf16.msra.mxu0 %v3053
        %4170 = vmatpush.bf16.msra.mxu0 %v3041
        %4171 = vmatpush.bf16.msra.mxu0 %v3029
        %4172 = vmatpush.bf16.msra.mxu0 %v3017
        %4173 = vmatpush.bf16.msra.mxu0 %v3005
        %4174 = vmatpush.bf16.msra.mxu0 %v2993
        %4175 = vmatpush.bf16.msra.mxu0 %v2981
        %4176 = vmatpush.bf16.msra.mxu0 %v2969
        %4177 = vmatmul.bf16.gmra.mxu0 %v1135
        %v4178 = vpop.f32.mrf.mxu0
        %v4179 = vadd.f32 %v4165, %v4178
        %v4180 = vpop.f32.mrf.mxu0
        %v4181 = vadd.f32 %v4167, %v4180
        %4182 = vdwg.mxu0
        %4183 = vmatpush.bf16.msra.mxu0 %v3149
        %4184 = vmatpush.bf16.msra.mxu0 %v3137
        %4185 = vmatpush.bf16.msra.mxu0 %v3125
        %4186 = vmatpush.bf16.msra.mxu0 %v3113
        %4187 = vmatpush.bf16.msra.mxu0 %v3101
        %4188 = vmatpush.bf16.msra.mxu0 %v3089
        %4189 = vmatpush.bf16.msra.mxu0 %v3077
        %4190 = vmatpush.bf16.msra.mxu0 %v3065
        %4191 = vmatmul.bf16.gmra.mxu0 %v1136
        %v4192 = vpop.f32.mrf.mxu0
        %v4193 = vadd.f32 %v4179, %v4192
        %v4194 = vpop.f32.mrf.mxu0
        %v4195 = vadd.f32 %v4181, %v4194
        %4196 = vdwg.mxu0
        %4197 = vmatpush.bf16.msra.mxu0 %v3245
        %4198 = vmatpush.bf16.msra.mxu0 %v3233
        %4199 = vmatpush.bf16.msra.mxu0 %v3221
        %4200 = vmatpush.bf16.msra.mxu0 %v3209
        %4201 = vmatpush.bf16.msra.mxu0 %v3197
        %4202 = vmatpush.bf16.msra.mxu0 %v3185
        %4203 = vmatpush.bf16.msra.mxu0 %v3173
        %4204 = vmatpush.bf16.msra.mxu0 %v3161
        %4205 = vmatmul.bf16.gmra.mxu0 %v1137
        %v4206 = vpop.f32.mrf.mxu0
        %v4207 = vadd.f32 %v4193, %v4206
        %v4208 = vpop.f32.mrf.mxu0
        %v4209 = vadd.f32 %v4195, %v4208
        %4210 = vdwg.mxu0
        %4211 = vmatpush.bf16.msra.mxu0 0
        %4212 = vmatpush.bf16.msra.mxu0 0
        %4213 = vmatpush.bf16.msra.mxu0 0
        %4214 = vmatpush.bf16.msra.mxu0 0
        %4215 = vmatpush.bf16.msra.mxu0 %v3293
        %4216 = vmatpush.bf16.msra.mxu0 %v3281
        %4217 = vmatpush.bf16.msra.mxu0 %v3269
        %4218 = vmatpush.bf16.msra.mxu0 %v3257
        %4219 = vmatmul.bf16.gmra.mxu0 %v3733
        %v4220 = vpop.f32.mrf.mxu0
        %v4221 = vadd.f32 %v4207, %v4220
        %v4222 = vpop.f32.mrf.mxu0
        %v4223 = vadd.f32 %v4209, %v4222
        %4224 = vdwg.mxu0
        %4225 = vmatpush.bf16.msra.mxu0 %v2958
        %4226 = vmatpush.bf16.msra.mxu0 %v2946
        %4227 = vmatpush.bf16.msra.mxu0 %v2934
        %4228 = vmatpush.bf16.msra.mxu0 %v2922
        %4229 = vmatpush.bf16.msra.mxu0 %v2910
        %4230 = vmatpush.bf16.msra.mxu0 %v2898
        %4231 = vmatpush.bf16.msra.mxu0 %v2886
        %4232 = vmatpush.bf16.msra.mxu0 %v2874
        %4233 = vmatmul.bf16.gmra.mxu0 %v1134
        %v4234 = vpop.f32.mrf.mxu0
        %v4235 = vadd.f32 0.0, %v4234
        %v4236 = vpop.f32.mrf.mxu0
        %v4237 = vadd.f32 0.0, %v4236
        %4238 = vdwg.mxu0
        %4239 = vmatpush.bf16.msra.mxu0 %v3054
        %4240 = vmatpush.bf16.msra.mxu0 %v3042
        %4241 = vmatpush.bf16.msra.mxu0 %v3030
        %4242 = vmatpush.bf16.msra.mxu0 %v3018
        %4243 = vmatpush.bf16.msra.mxu0 %v3006
        %4244 = vmatpush.bf16.msra.mxu0 %v2994
        %4245 = vmatpush.bf16.msra.mxu0 %v2982
        %4246 = vmatpush.bf16.msra.mxu0 %v2970
        %4247 = vmatmul.bf16.gmra.mxu0 %v1135
        %v4248 = vpop.f32.mrf.mxu0
        %v4249 = vadd.f32 %v4235, %v4248
        %v4250 = vpop.f32.mrf.mxu0
        %v4251 = vadd.f32 %v4237, %v4250
        %4252 = vdwg.mxu0
        %4253 = vmatpush.bf16.msra.mxu0 %v3150
        %4254 = vmatpush.bf16.msra.mxu0 %v3138
        %4255 = vmatpush.bf16.msra.mxu0 %v3126
        %4256 = vmatpush.bf16.msra.mxu0 %v3114
        %4257 = vmatpush.bf16.msra.mxu0 %v3102
        %4258 = vmatpush.bf16.msra.mxu0 %v3090
        %4259 = vmatpush.bf16.msra.mxu0 %v3078
        %4260 = vmatpush.bf16.msra.mxu0 %v3066
        %4261 = vmatmul.bf16.gmra.mxu0 %v1136
        %v4262 = vpop.f32.mrf.mxu0
        %v4263 = vadd.f32 %v4249, %v4262
        %v4264 = vpop.f32.mrf.mxu0
        %v4265 = vadd.f32 %v4251, %v4264
        %4266 = vdwg.mxu0
        %4267 = vmatpush.bf16.msra.mxu0 %v3246
        %4268 = vmatpush.bf16.msra.mxu0 %v3234
        %4269 = vmatpush.bf16.msra.mxu0 %v3222
        %4270 = vmatpush.bf16.msra.mxu0 %v3210
        %4271 = vmatpush.bf16.msra.mxu0 %v3198
        %4272 = vmatpush.bf16.msra.mxu0 %v3186
        %4273 = vmatpush.bf16.msra.mxu0 %v3174
        %4274 = vmatpush.bf16.msra.mxu0 %v3162
        %4275 = vmatmul.bf16.gmra.mxu0 %v1137
        %v4276 = vpop.f32.mrf.mxu0
        %v4277 = vadd.f32 %v4263, %v4276
        %v4278 = vpop.f32.mrf.mxu0
        %v4279 = vadd.f32 %v4265, %v4278
        %4280 = vdwg.mxu0
        %4281 = vmatpush.bf16.msra.mxu0 0
        %4282 = vmatpush.bf16.msra.mxu0 0
        %4283 = vmatpush.bf16.msra.mxu0 0
        %4284 = vmatpush.bf16.msra.mxu0 0
        %4285 = vmatpush.bf16.msra.mxu0 %v3294
        %4286 = vmatpush.bf16.msra.mxu0 %v3282
        %4287 = vmatpush.bf16.msra.mxu0 %v3270
        %4288 = vmatpush.bf16.msra.mxu0 %v3258
        %4289 = vmatmul.bf16.gmra.mxu0 %v3733
        %v4290 = vpop.f32.mrf.mxu0
        %v4291 = vadd.f32 %v4277, %v4290
        %v4292 = vpop.f32.mrf.mxu0
        %v4293 = vadd.f32 %v4279, %v4292
        %4294 = vdwg.mxu0
        %4295 = vmatpush.bf16.msra.mxu0 %v2959
        %4296 = vmatpush.bf16.msra.mxu0 %v2947
        %4297 = vmatpush.bf16.msra.mxu0 %v2935
        %4298 = vmatpush.bf16.msra.mxu0 %v2923
        %4299 = vmatpush.bf16.msra.mxu0 %v2911
        %4300 = vmatpush.bf16.msra.mxu0 %v2899
        %4301 = vmatpush.bf16.msra.mxu0 %v2887
        %4302 = vmatpush.bf16.msra.mxu0 %v2875
        %4303 = vmatmul.bf16.gmra.mxu0 %v1134
        %v4304 = vpop.f32.mrf.mxu0
        %v4305 = vadd.f32 0.0, %v4304
        %v4306 = vpop.f32.mrf.mxu0
        %v4307 = vadd.f32 0.0, %v4306
        %4308 = vdwg.mxu0
        %4309 = vmatpush.bf16.msra.mxu0 %v3055
        %4310 = vmatpush.bf16.msra.mxu0 %v3043
        %4311 = vmatpush.bf16.msra.mxu0 %v3031
        %4312 = vmatpush.bf16.msra.mxu0 %v3019
        %4313 = vmatpush.bf16.msra.mxu0 %v3007
        %4314 = vmatpush.bf16.msra.mxu0 %v2995
        %4315 = vmatpush.bf16.msra.mxu0 %v2983
        %4316 = vmatpush.bf16.msra.mxu0 %v2971
        %4317 = vmatmul.bf16.gmra.mxu0 %v1135
        %v4318 = vpop.f32.mrf.mxu0
        %v4319 = vadd.f32 %v4305, %v4318
        %v4320 = vpop.f32.mrf.mxu0
        %v4321 = vadd.f32 %v4307, %v4320
        %4322 = vdwg.mxu0
        %4323 = vmatpush.bf16.msra.mxu0 %v3151
        %4324 = vmatpush.bf16.msra.mxu0 %v3139
        %4325 = vmatpush.bf16.msra.mxu0 %v3127
        %4326 = vmatpush.bf16.msra.mxu0 %v3115
        %4327 = vmatpush.bf16.msra.mxu0 %v3103
        %4328 = vmatpush.bf16.msra.mxu0 %v3091
        %4329 = vmatpush.bf16.msra.mxu0 %v3079
        %4330 = vmatpush.bf16.msra.mxu0 %v3067
        %4331 = vmatmul.bf16.gmra.mxu0 %v1136
        %v4332 = vpop.f32.mrf.mxu0
        %v4333 = vadd.f32 %v4319, %v4332
        %v4334 = vpop.f32.mrf.mxu0
        %v4335 = vadd.f32 %v4321, %v4334
        %4336 = vdwg.mxu0
        %4337 = vmatpush.bf16.msra.mxu0 %v3247
        %4338 = vmatpush.bf16.msra.mxu0 %v3235
        %4339 = vmatpush.bf16.msra.mxu0 %v3223
        %4340 = vmatpush.bf16.msra.mxu0 %v3211
        %4341 = vmatpush.bf16.msra.mxu0 %v3199
        %4342 = vmatpush.bf16.msra.mxu0 %v3187
        %4343 = vmatpush.bf16.msra.mxu0 %v3175
        %4344 = vmatpush.bf16.msra.mxu0 %v3163
        %4345 = vmatmul.bf16.gmra.mxu0 %v1137
        %v4346 = vpop.f32.mrf.mxu0
        %v4347 = vadd.f32 %v4333, %v4346
        %v4348 = vpop.f32.mrf.mxu0
        %v4349 = vadd.f32 %v4335, %v4348
        %4350 = vdwg.mxu0
        %4351 = vmatpush.bf16.msra.mxu0 0
        %4352 = vmatpush.bf16.msra.mxu0 0
        %4353 = vmatpush.bf16.msra.mxu0 0
        %4354 = vmatpush.bf16.msra.mxu0 0
        %4355 = vmatpush.bf16.msra.mxu0 %v3295
        %4356 = vmatpush.bf16.msra.mxu0 %v3283
        %4357 = vmatpush.bf16.msra.mxu0 %v3271
        %4358 = vmatpush.bf16.msra.mxu0 %v3259
        %4359 = vmatmul.bf16.gmra.mxu0 %v3733
        %v4360 = vpop.f32.mrf.mxu0
        %v4361 = vadd.f32 %v4347, %v4360
        %v4362 = vpop.f32.mrf.mxu0
        %v4363 = vadd.f32 %v4349, %v4362
        %4364 = vdwg.mxu0
        %4365 = vmatpush.bf16.msra.mxu0 %v2960
        %4366 = vmatpush.bf16.msra.mxu0 %v2948
        %4367 = vmatpush.bf16.msra.mxu0 %v2936
        %4368 = vmatpush.bf16.msra.mxu0 %v2924
        %4369 = vmatpush.bf16.msra.mxu0 %v2912
        %4370 = vmatpush.bf16.msra.mxu0 %v2900
        %4371 = vmatpush.bf16.msra.mxu0 %v2888
        %4372 = vmatpush.bf16.msra.mxu0 %v2876
        %4373 = vmatmul.bf16.gmra.mxu0 %v1134
        %v4374 = vpop.f32.mrf.mxu0
        %v4375 = vadd.f32 0.0, %v4374
        %v4376 = vpop.f32.mrf.mxu0
        %v4377 = vadd.f32 0.0, %v4376
        %4378 = vdwg.mxu0
        %4379 = vmatpush.bf16.msra.mxu0 %v3056
        %4380 = vmatpush.bf16.msra.mxu0 %v3044
        %4381 = vmatpush.bf16.msra.mxu0 %v3032
        %4382 = vmatpush.bf16.msra.mxu0 %v3020
        %4383 = vmatpush.bf16.msra.mxu0 %v3008
        %4384 = vmatpush.bf16.msra.mxu0 %v2996
        %4385 = vmatpush.bf16.msra.mxu0 %v2984
        %4386 = vmatpush.bf16.msra.mxu0 %v2972
        %4387 = vmatmul.bf16.gmra.mxu0 %v1135
        %v4388 = vpop.f32.mrf.mxu0
        %v4389 = vadd.f32 %v4375, %v4388
        %v4390 = vpop.f32.mrf.mxu0
        %v4391 = vadd.f32 %v4377, %v4390
        %4392 = vdwg.mxu0
        %4393 = vmatpush.bf16.msra.mxu0 %v3152
        %4394 = vmatpush.bf16.msra.mxu0 %v3140
        %4395 = vmatpush.bf16.msra.mxu0 %v3128
        %4396 = vmatpush.bf16.msra.mxu0 %v3116
        %4397 = vmatpush.bf16.msra.mxu0 %v3104
        %4398 = vmatpush.bf16.msra.mxu0 %v3092
        %4399 = vmatpush.bf16.msra.mxu0 %v3080
        %4400 = vmatpush.bf16.msra.mxu0 %v3068
        %4401 = vmatmul.bf16.gmra.mxu0 %v1136
        %v4402 = vpop.f32.mrf.mxu0
        %v4403 = vadd.f32 %v4389, %v4402
        %v4404 = vpop.f32.mrf.mxu0
        %v4405 = vadd.f32 %v4391, %v4404
        %4406 = vdwg.mxu0
        %4407 = vmatpush.bf16.msra.mxu0 %v3248
        %4408 = vmatpush.bf16.msra.mxu0 %v3236
        %4409 = vmatpush.bf16.msra.mxu0 %v3224
        %4410 = vmatpush.bf16.msra.mxu0 %v3212
        %4411 = vmatpush.bf16.msra.mxu0 %v3200
        %4412 = vmatpush.bf16.msra.mxu0 %v3188
        %4413 = vmatpush.bf16.msra.mxu0 %v3176
        %4414 = vmatpush.bf16.msra.mxu0 %v3164
        %4415 = vmatmul.bf16.gmra.mxu0 %v1137
        %v4416 = vpop.f32.mrf.mxu0
        %v4417 = vadd.f32 %v4403, %v4416
        %v4418 = vpop.f32.mrf.mxu0
        %v4419 = vadd.f32 %v4405, %v4418
        %4420 = vdwg.mxu0
        %4421 = vmatpush.bf16.msra.mxu0 0
        %4422 = vmatpush.bf16.msra.mxu0 0
        %4423 = vmatpush.bf16.msra.mxu0 0
        %4424 = vmatpush.bf16.msra.mxu0 0
        %4425 = vmatpush.bf16.msra.mxu0 %v3296
        %4426 = vmatpush.bf16.msra.mxu0 %v3284
        %4427 = vmatpush.bf16.msra.mxu0 %v3272
        %4428 = vmatpush.bf16.msra.mxu0 %v3260
        %4429 = vmatmul.bf16.gmra.mxu0 %v3733
        %v4430 = vpop.f32.mrf.mxu0
        %v4431 = vadd.f32 %v4417, %v4430
        %v4432 = vpop.f32.mrf.mxu0
        %v4433 = vadd.f32 %v4419, %v4432
        %4434 = vdwg.mxu0
        %4435 = vmatpush.bf16.msra.mxu0 %v2961
        %4436 = vmatpush.bf16.msra.mxu0 %v2949
        %4437 = vmatpush.bf16.msra.mxu0 %v2937
        %4438 = vmatpush.bf16.msra.mxu0 %v2925
        %4439 = vmatpush.bf16.msra.mxu0 %v2913
        %4440 = vmatpush.bf16.msra.mxu0 %v2901
        %4441 = vmatpush.bf16.msra.mxu0 %v2889
        %4442 = vmatpush.bf16.msra.mxu0 %v2877
        %4443 = vmatmul.bf16.gmra.mxu0 %v1134
        %v4444 = vpop.f32.mrf.mxu0
        %v4445 = vadd.f32 0.0, %v4444
        %v4446 = vpop.f32.mrf.mxu0
        %v4447 = vadd.f32 0.0, %v4446
        %4448 = vdwg.mxu0
        %4449 = vmatpush.bf16.msra.mxu0 %v3057
        %4450 = vmatpush.bf16.msra.mxu0 %v3045
        %4451 = vmatpush.bf16.msra.mxu0 %v3033
        %4452 = vmatpush.bf16.msra.mxu0 %v3021
        %4453 = vmatpush.bf16.msra.mxu0 %v3009
        %4454 = vmatpush.bf16.msra.mxu0 %v2997
        %4455 = vmatpush.bf16.msra.mxu0 %v2985
        %4456 = vmatpush.bf16.msra.mxu0 %v2973
        %4457 = vmatmul.bf16.gmra.mxu0 %v1135
        %v4458 = vpop.f32.mrf.mxu0
        %v4459 = vadd.f32 %v4445, %v4458
        %v4460 = vpop.f32.mrf.mxu0
        %v4461 = vadd.f32 %v4447, %v4460
        %4462 = vdwg.mxu0
        %4463 = vmatpush.bf16.msra.mxu0 %v3153
        %4464 = vmatpush.bf16.msra.mxu0 %v3141
        %4465 = vmatpush.bf16.msra.mxu0 %v3129
        %4466 = vmatpush.bf16.msra.mxu0 %v3117
        %4467 = vmatpush.bf16.msra.mxu0 %v3105
        %4468 = vmatpush.bf16.msra.mxu0 %v3093
        %4469 = vmatpush.bf16.msra.mxu0 %v3081
        %4470 = vmatpush.bf16.msra.mxu0 %v3069
        %4471 = vmatmul.bf16.gmra.mxu0 %v1136
        %v4472 = vpop.f32.mrf.mxu0
        %v4473 = vadd.f32 %v4459, %v4472
        %v4474 = vpop.f32.mrf.mxu0
        %v4475 = vadd.f32 %v4461, %v4474
        %4476 = vdwg.mxu0
        %4477 = vmatpush.bf16.msra.mxu0 %v3249
        %4478 = vmatpush.bf16.msra.mxu0 %v3237
        %4479 = vmatpush.bf16.msra.mxu0 %v3225
        %4480 = vmatpush.bf16.msra.mxu0 %v3213
        %4481 = vmatpush.bf16.msra.mxu0 %v3201
        %4482 = vmatpush.bf16.msra.mxu0 %v3189
        %4483 = vmatpush.bf16.msra.mxu0 %v3177
        %4484 = vmatpush.bf16.msra.mxu0 %v3165
        %4485 = vmatmul.bf16.gmra.mxu0 %v1137
        %v4486 = vpop.f32.mrf.mxu0
        %v4487 = vadd.f32 %v4473, %v4486
        %v4488 = vpop.f32.mrf.mxu0
        %v4489 = vadd.f32 %v4475, %v4488
        %4490 = vdwg.mxu0
        %4491 = vmatpush.bf16.msra.mxu0 0
        %4492 = vmatpush.bf16.msra.mxu0 0
        %4493 = vmatpush.bf16.msra.mxu0 0
        %4494 = vmatpush.bf16.msra.mxu0 0
        %4495 = vmatpush.bf16.msra.mxu0 %v3297
        %4496 = vmatpush.bf16.msra.mxu0 %v3285
        %4497 = vmatpush.bf16.msra.mxu0 %v3273
        %4498 = vmatpush.bf16.msra.mxu0 %v3261
        %4499 = vmatmul.bf16.gmra.mxu0 %v3733
        %v4500 = vpop.f32.mrf.mxu0
        %v4501 = vadd.f32 %v4487, %v4500
        %v4502 = vpop.f32.mrf.mxu0
        %v4503 = vadd.f32 %v4489, %v4502
        %4504 = vdwg.mxu0
        %4505 = vmatpush.bf16.msra.mxu0 %v2962
        %4506 = vmatpush.bf16.msra.mxu0 %v2950
        %4507 = vmatpush.bf16.msra.mxu0 %v2938
        %4508 = vmatpush.bf16.msra.mxu0 %v2926
        %4509 = vmatpush.bf16.msra.mxu0 %v2914
        %4510 = vmatpush.bf16.msra.mxu0 %v2902
        %4511 = vmatpush.bf16.msra.mxu0 %v2890
        %4512 = vmatpush.bf16.msra.mxu0 %v2878
        %4513 = vmatmul.bf16.gmra.mxu0 %v1134
        %v4514 = vpop.f32.mrf.mxu0
        %v4515 = vadd.f32 0.0, %v4514
        %v4516 = vpop.f32.mrf.mxu0
        %v4517 = vadd.f32 0.0, %v4516
        %4518 = vdwg.mxu0
        %4519 = vmatpush.bf16.msra.mxu0 %v3058
        %4520 = vmatpush.bf16.msra.mxu0 %v3046
        %4521 = vmatpush.bf16.msra.mxu0 %v3034
        %4522 = vmatpush.bf16.msra.mxu0 %v3022
        %4523 = vmatpush.bf16.msra.mxu0 %v3010
        %4524 = vmatpush.bf16.msra.mxu0 %v2998
        %4525 = vmatpush.bf16.msra.mxu0 %v2986
        %4526 = vmatpush.bf16.msra.mxu0 %v2974
        %4527 = vmatmul.bf16.gmra.mxu0 %v1135
        %v4528 = vpop.f32.mrf.mxu0
        %v4529 = vadd.f32 %v4515, %v4528
        %v4530 = vpop.f32.mrf.mxu0
        %v4531 = vadd.f32 %v4517, %v4530
        %4532 = vdwg.mxu0
        %4533 = vmatpush.bf16.msra.mxu0 %v3154
        %4534 = vmatpush.bf16.msra.mxu0 %v3142
        %4535 = vmatpush.bf16.msra.mxu0 %v3130
        %4536 = vmatpush.bf16.msra.mxu0 %v3118
        %4537 = vmatpush.bf16.msra.mxu0 %v3106
        %4538 = vmatpush.bf16.msra.mxu0 %v3094
        %4539 = vmatpush.bf16.msra.mxu0 %v3082
        %4540 = vmatpush.bf16.msra.mxu0 %v3070
        %4541 = vmatmul.bf16.gmra.mxu0 %v1136
        %v4542 = vpop.f32.mrf.mxu0
        %v4543 = vadd.f32 %v4529, %v4542
        %v4544 = vpop.f32.mrf.mxu0
        %v4545 = vadd.f32 %v4531, %v4544
        %4546 = vdwg.mxu0
        %4547 = vmatpush.bf16.msra.mxu0 %v3250
        %4548 = vmatpush.bf16.msra.mxu0 %v3238
        %4549 = vmatpush.bf16.msra.mxu0 %v3226
        %4550 = vmatpush.bf16.msra.mxu0 %v3214
        %4551 = vmatpush.bf16.msra.mxu0 %v3202
        %4552 = vmatpush.bf16.msra.mxu0 %v3190
        %4553 = vmatpush.bf16.msra.mxu0 %v3178
        %4554 = vmatpush.bf16.msra.mxu0 %v3166
        %4555 = vmatmul.bf16.gmra.mxu0 %v1137
        %v4556 = vpop.f32.mrf.mxu0
        %v4557 = vadd.f32 %v4543, %v4556
        %v4558 = vpop.f32.mrf.mxu0
        %v4559 = vadd.f32 %v4545, %v4558
        %4560 = vdwg.mxu0
        %4561 = vmatpush.bf16.msra.mxu0 0
        %4562 = vmatpush.bf16.msra.mxu0 0
        %4563 = vmatpush.bf16.msra.mxu0 0
        %4564 = vmatpush.bf16.msra.mxu0 0
        %4565 = vmatpush.bf16.msra.mxu0 %v3298
        %4566 = vmatpush.bf16.msra.mxu0 %v3286
        %4567 = vmatpush.bf16.msra.mxu0 %v3274
        %4568 = vmatpush.bf16.msra.mxu0 %v3262
        %4569 = vmatmul.bf16.gmra.mxu0 %v3733
        %v4570 = vpop.f32.mrf.mxu0
        %v4571 = vadd.f32 %v4557, %v4570
        %v4572 = vpop.f32.mrf.mxu0
        %v4573 = vadd.f32 %v4559, %v4572
        %4574 = vdwg.mxu0
        %v4575 = vxor.u32 %v3801, 2147483648
        %v4576 = vxor.u32 %v3871, 2147483648
        %v4577 = vxor.u32 %v3941, 2147483648
        %v4578 = vxor.u32 %v4011, 2147483648
        %v4579 = vxor.u32 %v4081, 2147483648
        %v4580 = vxor.u32 %v4151, 2147483648
        %v4581 = vxor.u32 %v3803, 2147483648
        %v4582 = vxor.u32 %v3873, 2147483648
        %v4583 = vxor.u32 %v3943, 2147483648
        %v4584 = vxor.u32 %v4013, 2147483648
        %v4585 = vxor.u32 %v4083, 2147483648
        %v4586 = vxor.u32 %v4153, 2147483648
        %v4587 = vmul.f32 %v4575, 1.442695
        %v4588 = vpow.pop %v4587
        %v4589 = vmul.f32 %v4576, 1.442695
        %v4590 = vpow.pop %v4589
        %v4591 = vmul.f32 %v4577, 1.442695
        %v4592 = vpow.pop %v4591
        %v4593 = vmul.f32 %v4578, 1.442695
        %v4594 = vpow.pop %v4593
        %v4595 = vmul.f32 %v4579, 1.442695
        %v4596 = vpow.pop %v4595
        %v4597 = vmul.f32 %v4580, 1.442695
        %v4598 = vpow.pop %v4597
        %v4599 = vmul.f32 %v4581, 1.442695
        %v4600 = vpow.pop %v4599
        %v4601 = vmul.f32 %v4582, 1.442695
        %v4602 = vpow.pop %v4601
        %v4603 = vmul.f32 %v4583, 1.442695
        %v4604 = vpow.pop %v4603
        %v4605 = vmul.f32 %v4584, 1.442695
        %v4606 = vpow.pop %v4605
        %v4607 = vmul.f32 %v4585, 1.442695
        %v4608 = vpow.pop %v4607
        %v4609 = vmul.f32 %v4586, 1.442695
        %v4610 = vpow.pop %v4609
        %v4611 = vadd.f32 %v4588, 1.0
        %v4612 = vadd.f32 %v4590, 1.0
        %v4613 = vadd.f32 %v4592, 1.0
        %v4614 = vadd.f32 %v4594, 1.0
        %v4615 = vadd.f32 %v4596, 1.0
        %v4616 = vadd.f32 %v4598, 1.0
        %v4617 = vadd.f32 %v4600, 1.0
        %v4618 = vadd.f32 %v4602, 1.0
        %v4619 = vadd.f32 %v4604, 1.0
        %v4620 = vadd.f32 %v4606, 1.0
        %v4621 = vadd.f32 %v4608, 1.0
        %v4622 = vadd.f32 %v4610, 1.0
        %v4623 = vrcp.pop %v4611
        %v4624 = vmul.f32 %v4611, %v4623
        %v4625 = vsub.f32 1.0, %v4624
        %v4626 = vmul.f32 %v4623, %v4625
        %v4627 = vadd.f32 %v4623, %v4626
        %vm4628 = vweird.f32 %v4611
        %vm4629 = vweird.f32 %v4623
        %vm4630 = vmor %vm4628, %vm4629
        %v4631 = vsel %vm4630, %v4623, %v4627
        %v4632 = vand.u32 2147483647, %v4611
        %vm4633 = vcmp.eq.f32.partialorder %v4632, 8.507059e+37
        %v4634 = vand.u32 %v4611, 2147483648
        %v4635 = vor.u32 1.1754944e-38, %v4634
        %v4636 = vsel %vm4633, %v4635, %v4631
        %v4637 = vmul.f32 1.0, %v4636
        %v4638 = vrcp.pop %v4612
        %v4639 = vmul.f32 %v4612, %v4638
        %v4640 = vsub.f32 1.0, %v4639
        %v4641 = vmul.f32 %v4638, %v4640
        %v4642 = vadd.f32 %v4638, %v4641
        %vm4643 = vweird.f32 %v4612
        %vm4644 = vweird.f32 %v4638
        %vm4645 = vmor %vm4643, %vm4644
        %v4646 = vsel %vm4645, %v4638, %v4642
        %v4647 = vand.u32 2147483647, %v4612
        %vm4648 = vcmp.eq.f32.partialorder %v4647, 8.507059e+37
        %v4649 = vand.u32 %v4612, 2147483648
        %v4650 = vor.u32 1.1754944e-38, %v4649
        %v4651 = vsel %vm4648, %v4650, %v4646
        %v4652 = vmul.f32 1.0, %v4651
        %v4653 = vrcp.pop %v4613
        %v4654 = vmul.f32 %v4613, %v4653
        %v4655 = vsub.f32 1.0, %v4654
        %v4656 = vmul.f32 %v4653, %v4655
        %v4657 = vadd.f32 %v4653, %v4656
        %vm4658 = vweird.f32 %v4613
        %vm4659 = vweird.f32 %v4653
        %vm4660 = vmor %vm4658, %vm4659
        %v4661 = vsel %vm4660, %v4653, %v4657
        %v4662 = vand.u32 2147483647, %v4613
        %vm4663 = vcmp.eq.f32.partialorder %v4662, 8.507059e+37
        %v4664 = vand.u32 %v4613, 2147483648
        %v4665 = vor.u32 1.1754944e-38, %v4664
        %v4666 = vsel %vm4663, %v4665, %v4661
        %v4667 = vmul.f32 1.0, %v4666
        %v4668 = vrcp.pop %v4614
        %v4669 = vmul.f32 %v4614, %v4668
        %v4670 = vsub.f32 1.0, %v4669
        %v4671 = vmul.f32 %v4668, %v4670
        %v4672 = vadd.f32 %v4668, %v4671
        %vm4673 = vweird.f32 %v4614
        %vm4674 = vweird.f32 %v4668
        %vm4675 = vmor %vm4673, %vm4674
        %v4676 = vsel %vm4675, %v4668, %v4672
        %v4677 = vand.u32 2147483647, %v4614
        %vm4678 = vcmp.eq.f32.partialorder %v4677, 8.507059e+37
        %v4679 = vand.u32 %v4614, 2147483648
        %v4680 = vor.u32 1.1754944e-38, %v4679
        %v4681 = vsel %vm4678, %v4680, %v4676
        %v4682 = vmul.f32 1.0, %v4681
        %v4683 = vrcp.pop %v4615
        %v4684 = vmul.f32 %v4615, %v4683
        %v4685 = vsub.f32 1.0, %v4684
        %v4686 = vmul.f32 %v4683, %v4685
        %v4687 = vadd.f32 %v4683, %v4686
        %vm4688 = vweird.f32 %v4615
        %vm4689 = vweird.f32 %v4683
        %vm4690 = vmor %vm4688, %vm4689
        %v4691 = vsel %vm4690, %v4683, %v4687
        %v4692 = vand.u32 2147483647, %v4615
        %vm4693 = vcmp.eq.f32.partialorder %v4692, 8.507059e+37
        %v4694 = vand.u32 %v4615, 2147483648
        %v4695 = vor.u32 1.1754944e-38, %v4694
        %v4696 = vsel %vm4693, %v4695, %v4691
        %v4697 = vmul.f32 1.0, %v4696
        %v4698 = vrcp.pop %v4616
        %v4699 = vmul.f32 %v4616, %v4698
        %v4700 = vsub.f32 1.0, %v4699
        %v4701 = vmul.f32 %v4698, %v4700
        %v4702 = vadd.f32 %v4698, %v4701
        %vm4703 = vweird.f32 %v4616
        %vm4704 = vweird.f32 %v4698
        %vm4705 = vmor %vm4703, %vm4704
        %v4706 = vsel %vm4705, %v4698, %v4702
        %v4707 = vand.u32 2147483647, %v4616
        %vm4708 = vcmp.eq.f32.partialorder %v4707, 8.507059e+37
        %v4709 = vand.u32 %v4616, 2147483648
        %v4710 = vor.u32 1.1754944e-38, %v4709
        %v4711 = vsel %vm4708, %v4710, %v4706
        %v4712 = vmul.f32 1.0, %v4711
        %v4713 = vrcp.pop %v4617
        %v4714 = vmul.f32 %v4617, %v4713
        %v4715 = vsub.f32 1.0, %v4714
        %v4716 = vmul.f32 %v4713, %v4715
        %v4717 = vadd.f32 %v4713, %v4716
        %vm4718 = vweird.f32 %v4617
        %vm4719 = vweird.f32 %v4713
        %vm4720 = vmor %vm4718, %vm4719
        %v4721 = vsel %vm4720, %v4713, %v4717
        %v4722 = vand.u32 2147483647, %v4617
        %vm4723 = vcmp.eq.f32.partialorder %v4722, 8.507059e+37
        %v4724 = vand.u32 %v4617, 2147483648
        %v4725 = vor.u32 1.1754944e-38, %v4724
        %v4726 = vsel %vm4723, %v4725, %v4721
        %v4727 = vmul.f32 1.0, %v4726
        %v4728 = vrcp.pop %v4618
        %v4729 = vmul.f32 %v4618, %v4728
        %v4730 = vsub.f32 1.0, %v4729
        %v4731 = vmul.f32 %v4728, %v4730
        %v4732 = vadd.f32 %v4728, %v4731
        %vm4733 = vweird.f32 %v4618
        %vm4734 = vweird.f32 %v4728
        %vm4735 = vmor %vm4733, %vm4734
        %v4736 = vsel %vm4735, %v4728, %v4732
        %v4737 = vand.u32 2147483647, %v4618
        %vm4738 = vcmp.eq.f32.partialorder %v4737, 8.507059e+37
        %v4739 = vand.u32 %v4618, 2147483648
        %v4740 = vor.u32 1.1754944e-38, %v4739
        %v4741 = vsel %vm4738, %v4740, %v4736
        %v4742 = vmul.f32 1.0, %v4741
        %v4743 = vrcp.pop %v4619
        %v4744 = vmul.f32 %v4619, %v4743
        %v4745 = vsub.f32 1.0, %v4744
        %v4746 = vmul.f32 %v4743, %v4745
        %v4747 = vadd.f32 %v4743, %v4746
        %vm4748 = vweird.f32 %v4619
        %vm4749 = vweird.f32 %v4743
        %vm4750 = vmor %vm4748, %vm4749
        %v4751 = vsel %vm4750, %v4743, %v4747
        %v4752 = vand.u32 2147483647, %v4619
        %vm4753 = vcmp.eq.f32.partialorder %v4752, 8.507059e+37
        %v4754 = vand.u32 %v4619, 2147483648
        %v4755 = vor.u32 1.1754944e-38, %v4754
        %v4756 = vsel %vm4753, %v4755, %v4751
        %v4757 = vmul.f32 1.0, %v4756
        %v4758 = vrcp.pop %v4620
        %v4759 = vmul.f32 %v4620, %v4758
        %v4760 = vsub.f32 1.0, %v4759
        %v4761 = vmul.f32 %v4758, %v4760
        %v4762 = vadd.f32 %v4758, %v4761
        %vm4763 = vweird.f32 %v4620
        %vm4764 = vweird.f32 %v4758
        %vm4765 = vmor %vm4763, %vm4764
        %v4766 = vsel %vm4765, %v4758, %v4762
        %v4767 = vand.u32 2147483647, %v4620
        %vm4768 = vcmp.eq.f32.partialorder %v4767, 8.507059e+37
        %v4769 = vand.u32 %v4620, 2147483648
        %v4770 = vor.u32 1.1754944e-38, %v4769
        %v4771 = vsel %vm4768, %v4770, %v4766
        %v4772 = vmul.f32 1.0, %v4771
        %v4773 = vrcp.pop %v4621
        %v4774 = vmul.f32 %v4621, %v4773
        %v4775 = vsub.f32 1.0, %v4774
        %v4776 = vmul.f32 %v4773, %v4775
        %v4777 = vadd.f32 %v4773, %v4776
        %vm4778 = vweird.f32 %v4621
        %vm4779 = vweird.f32 %v4773
        %vm4780 = vmor %vm4778, %vm4779
        %v4781 = vsel %vm4780, %v4773, %v4777
        %v4782 = vand.u32 2147483647, %v4621
        %vm4783 = vcmp.eq.f32.partialorder %v4782, 8.507059e+37
        %v4784 = vand.u32 %v4621, 2147483648
        %v4785 = vor.u32 1.1754944e-38, %v4784
        %v4786 = vsel %vm4783, %v4785, %v4781
        %v4787 = vmul.f32 1.0, %v4786
        %v4788 = vrcp.pop %v4622
        %v4789 = vmul.f32 %v4622, %v4788
        %v4790 = vsub.f32 1.0, %v4789
        %v4791 = vmul.f32 %v4788, %v4790
        %v4792 = vadd.f32 %v4788, %v4791
        %vm4793 = vweird.f32 %v4622
        %vm4794 = vweird.f32 %v4788
        %vm4795 = vmor %vm4793, %vm4794
        %v4796 = vsel %vm4795, %v4788, %v4792
        %v4797 = vand.u32 2147483647, %v4622
        %vm4798 = vcmp.eq.f32.partialorder %v4797, 8.507059e+37
        %v4799 = vand.u32 %v4622, 2147483648
        %v4800 = vor.u32 1.1754944e-38, %v4799
        %v4801 = vsel %vm4798, %v4800, %v4796
        %v4802 = vmul.f32 1.0, %v4801
        %v4803 = vmul.f32 %v3801, %v4637
        %v4804 = vmul.f32 %v3871, %v4652
        %v4805 = vmul.f32 %v3941, %v4667
        %v4806 = vmul.f32 %v4011, %v4682
        %v4807 = vmul.f32 %v4081, %v4697
        %v4808 = vmul.f32 %v4151, %v4712
        %v4809 = vmul.f32 %v3803, %v4727
        %v4810 = vmul.f32 %v3873, %v4742
        %v4811 = vmul.f32 %v3943, %v4757
        %v4812 = vmul.f32 %v4013, %v4772
        %v4813 = vmul.f32 %v4083, %v4787
        %v4814 = vmul.f32 %v4153, %v4802
        %v4815 = vmul.f32 %v4803, %v4221
        %v4816 = vmul.f32 %v4804, %v4291
        %v4817 = vmul.f32 %v4805, %v4361
        %v4818 = vmul.f32 %v4806, %v4431
        %v4819 = vmul.f32 %v4807, %v4501
        %v4820 = vmul.f32 %v4808, %v4571
        %v4821 = vmul.f32 %v4809, %v4223
        %v4822 = vmul.f32 %v4810, %v4293
        %v4823 = vmul.f32 %v4811, %v4363
        %v4824 = vmul.f32 %v4812, %v4433
        %v4825 = vmul.f32 %v4813, %v4503
        %v4826 = vmul.f32 %v4814, %v4573
        %v4827 = vld [vmem:[#allocation3] sm:$0xff]
        %v4828 = vld [vmem:[#allocation3 + $0x8] sm:$0xff]
        %v4829 = vld [vmem:[#allocation3 + $0x10] sm:$0xff]
        %v4830 = vld [vmem:[#allocation3 + $0x18] sm:$0xff]
        %v4831 = vld [vmem:[#allocation3 + $0x20] sm:$0xff]
        %v4832 = vld [vmem:[#allocation3 + $0x28] sm:$0xff]
        %v4833 = vld [vmem:[#allocation3 + $0x30] sm:$0xff]
        %v4834 = vld [vmem:[#allocation3 + $0x38] sm:$0xff]
        %v4835 = vld [vmem:[#allocation3 + $0x40] sm:$0xff]
        %v4836 = vld [vmem:[#allocation3 + $0x48] sm:$0xff]
        %v4837 = vpack.c.bf16 %v4821, %v4815
        %v4838 = vpack.c.bf16 %v4822, %v4816
        %v4839 = vpack.c.bf16 %v4823, %v4817
        %v4840 = vpack.c.bf16 %v4824, %v4818
        %v4841 = vpack.c.bf16 %v4825, %v4819
        %v4842 = vpack.c.bf16 %v4826, %v4820
        %v4843 = vld [vmem:[%s1105] sm:$0xff]
        %v4844 = vld [vmem:[%s1105 + $0x8] sm:$0xff]
        %v4845 = vld [vmem:[%s1105 + $0x10] sm:$0xf]
        %v4846 = vld [vmem:[%s1105 + $0x14] sm:$0xff]
        %v4847 = vld [vmem:[%s1105 + $0x1c] sm:$0xff]
        %v4848 = vld [vmem:[%s1105 + $0x24] sm:$0xf]
        %v4849 = vld [vmem:[%s1105 + $0x28] sm:$0xff]
        %v4850 = vld [vmem:[%s1105 + $0x30] sm:$0xff]
        %v4851 = vld [vmem:[%s1105 + $0x38] sm:$0xf]
        %v4852 = vld [vmem:[%s1105 + $0x3c] sm:$0xff]
        %v4853 = vld [vmem:[%s1105 + $0x44] sm:$0xff]
        %v4854 = vld [vmem:[%s1105 + $0x4c] sm:$0xf]
        %v4855 = vld [vmem:[%s1105 + $0x50] sm:$0xff]
        %v4856 = vld [vmem:[%s1105 + $0x58] sm:$0xff]
        %v4857 = vld [vmem:[%s1105 + $0x60] sm:$0xf]
        %v4858 = vld [vmem:[%s1105 + $0x64] sm:$0xff]
        %v4859 = vld [vmem:[%s1105 + $0x6c] sm:$0xff]
        %v4860 = vld [vmem:[%s1105 + $0x74] sm:$0xf]
        %v4861 = vld [vmem:[%s1105 + $0x78] sm:$0xff]
        %v4862 = vld [vmem:[%s1105 + $0x80] sm:$0xff]
        %v4863 = vld [vmem:[%s1105 + $0x88] sm:$0xf]
        %v4864 = vld [vmem:[%s1105 + $0x8c] sm:$0xff]
        %v4865 = vld [vmem:[%s1105 + $0x94] sm:$0xff]
        %v4866 = vld [vmem:[%s1105 + $0x9c] sm:$0xf]
        %v4867 = vld [vmem:[%s1105 + $0xa0] sm:$0xff]
        %v4868 = vld [vmem:[%s1105 + $0xa8] sm:$0xff]
        %v4869 = vld [vmem:[%s1105 + $0xb0] sm:$0xf]
        %v4870 = vld [vmem:[%s1105 + $0xb4] sm:$0xff]
        %v4871 = vld [vmem:[%s1105 + $0xbc] sm:$0xff]
        %v4872 = vld [vmem:[%s1105 + $0xc4] sm:$0xf]
        %v4873 = vld [vmem:[%s1105 + $0xc8] sm:$0xff]
        %v4874 = vld [vmem:[%s1105 + $0xd0] sm:$0xff]
        %v4875 = vld [vmem:[%s1105 + $0xd8] sm:$0xf]
        %v4876 = vld [vmem:[%s1105 + $0xdc] sm:$0xff]
        %v4877 = vld [vmem:[%s1105 + $0xe4] sm:$0xff]
        %v4878 = vld [vmem:[%s1105 + $0xec] sm:$0xf]
        %v4879 = vld [vmem:[%s1105 + $0xf0] sm:$0xff]
        %v4880 = vld [vmem:[%s1105 + $0xf8] sm:$0xff]
        %v4881 = vld [vmem:[%s1105 + $0x100] sm:$0xf]
        %v4882 = vld [vmem:[%s1105 + $0x104] sm:$0xff]
        %v4883 = vld [vmem:[%s1105 + $0x10c] sm:$0xff]
        %v4884 = vld [vmem:[%s1105 + $0x114] sm:$0xf]
        %v4885 = vld [vmem:[%s1105 + $0x118] sm:$0xff]
        %v4886 = vld [vmem:[%s1105 + $0x120] sm:$0xff]
        %v4887 = vld [vmem:[%s1105 + $0x128] sm:$0xf]
        %v4888 = vld [vmem:[%s1105 + $0x12c] sm:$0xff]
        %v4889 = vld [vmem:[%s1105 + $0x134] sm:$0xff]
        %v4890 = vld [vmem:[%s1105 + $0x13c] sm:$0xf]
        %v4891 = vld [vmem:[%s1105 + $0x140] sm:$0xff]
        %v4892 = vld [vmem:[%s1105 + $0x148] sm:$0xff]
        %v4893 = vld [vmem:[%s1105 + $0x150] sm:$0xf]
        %v4894 = vld [vmem:[%s1105 + $0x154] sm:$0xff]
        %v4895 = vld [vmem:[%s1105 + $0x15c] sm:$0xff]
        %v4896 = vld [vmem:[%s1105 + $0x164] sm:$0xf]
        %v4897 = vld [vmem:[%s1105 + $0x168] sm:$0xff]
        %v4898 = vld [vmem:[%s1105 + $0x170] sm:$0xff]
        %v4899 = vld [vmem:[%s1105 + $0x178] sm:$0xf]
        %v4900 = vld [vmem:[%s1105 + $0x17c] sm:$0xff]
        %v4901 = vld [vmem:[%s1105 + $0x184] sm:$0xff]
        %v4902 = vld [vmem:[%s1105 + $0x18c] sm:$0xf]
        %v4903 = vld [vmem:[%s1105 + $0x190] sm:$0xff]
        %v4904 = vld [vmem:[%s1105 + $0x198] sm:$0xff]
        %v4905 = vld [vmem:[%s1105 + $0x1a0] sm:$0xf]
        %v4906 = vld [vmem:[%s1105 + $0x1a4] sm:$0xff]
        %v4907 = vld [vmem:[%s1105 + $0x1ac] sm:$0xff]
        %v4908 = vld [vmem:[%s1105 + $0x1b4] sm:$0xf]
        %v4909 = vld [vmem:[%s1105 + $0x1b8] sm:$0xff]
        %v4910 = vld [vmem:[%s1105 + $0x1c0] sm:$0xff]
        %v4911 = vld [vmem:[%s1105 + $0x1c8] sm:$0xf]
        %v4912 = vld [vmem:[%s1105 + $0x1cc] sm:$0xff]
        %v4913 = vld [vmem:[%s1105 + $0x1d4] sm:$0xff]
        %v4914 = vld [vmem:[%s1105 + $0x1dc] sm:$0xf]
        %v4915 = vld [vmem:[%s1105 + $0x1e0] sm:$0xff]
        %v4916 = vld [vmem:[%s1105 + $0x1e8] sm:$0xff]
        %v4917 = vld [vmem:[%s1105 + $0x1f0] sm:$0xf]
        %v4918 = vld [vmem:[%s1105 + $0x1f4] sm:$0xff]
        %v4919 = vld [vmem:[%s1105 + $0x1fc] sm:$0xff]
        %v4920 = vld [vmem:[%s1105 + $0x204] sm:$0xf]
        %v4921 = vld [vmem:[%s1105 + $0x208] sm:$0xff]
        %v4922 = vld [vmem:[%s1105 + $0x210] sm:$0xff]
        %v4923 = vld [vmem:[%s1105 + $0x218] sm:$0xf]
        %v4924 = vld [vmem:[%s1105 + $0x21c] sm:$0xff]
        %v4925 = vld [vmem:[%s1105 + $0x224] sm:$0xff]
        %v4926 = vld [vmem:[%s1105 + $0x22c] sm:$0xf]
        %v4927 = vld [vmem:[%s1105 + $0x230] sm:$0xff]
        %v4928 = vld [vmem:[%s1105 + $0x238] sm:$0xff]
        %v4929 = vld [vmem:[%s1105 + $0x240] sm:$0xf]
        %v4930 = vld [vmem:[%s1105 + $0x244] sm:$0xff]
        %v4931 = vld [vmem:[%s1105 + $0x24c] sm:$0xff]
        %v4932 = vld [vmem:[%s1105 + $0x254] sm:$0xf]
        %v4933 = vld [vmem:[%s1105 + $0x258] sm:$0xff]
        %v4934 = vld [vmem:[%s1105 + $0x260] sm:$0xff]
        %v4935 = vld [vmem:[%s1105 + $0x268] sm:$0xf]
        %v4936 = vld [vmem:[%s1105 + $0x26c] sm:$0xff]
        %v4937 = vld [vmem:[%s1105 + $0x274] sm:$0xff]
        %v4938 = vld [vmem:[%s1105 + $0x27c] sm:$0xf]
        %v4939 = vld [vmem:[%s1105 + $0x280] sm:$0xff]
        %v4940 = vld [vmem:[%s1105 + $0x288] sm:$0xff]
        %v4941 = vld [vmem:[%s1105 + $0x290] sm:$0xf]
        %v4942 = vld [vmem:[%s1105 + $0x294] sm:$0xff]
        %v4943 = vld [vmem:[%s1105 + $0x29c] sm:$0xff]
        %v4944 = vld [vmem:[%s1105 + $0x2a4] sm:$0xf]
        %v4945 = vld [vmem:[%s1105 + $0x2a8] sm:$0xff]
        %v4946 = vld [vmem:[%s1105 + $0x2b0] sm:$0xff]
        %v4947 = vld [vmem:[%s1105 + $0x2b8] sm:$0xf]
        %v4948 = vld [vmem:[%s1105 + $0x2bc] sm:$0xff]
        %v4949 = vld [vmem:[%s1105 + $0x2c4] sm:$0xff]
        %v4950 = vld [vmem:[%s1105 + $0x2cc] sm:$0xf]
        %v4951 = vld [vmem:[%s1105 + $0x2d0] sm:$0xff]
        %v4952 = vld [vmem:[%s1105 + $0x2d8] sm:$0xff]
        %v4953 = vld [vmem:[%s1105 + $0x2e0] sm:$0xf]
        %v4954 = vld [vmem:[%s1105 + $0x2e4] sm:$0xff]
        %v4955 = vld [vmem:[%s1105 + $0x2ec] sm:$0xff]
        %v4956 = vld [vmem:[%s1105 + $0x2f4] sm:$0xf]
        %v4957 = vld [vmem:[%s1105 + $0x2f8] sm:$0xff]
        %v4958 = vld [vmem:[%s1105 + $0x300] sm:$0xff]
        %v4959 = vld [vmem:[%s1105 + $0x308] sm:$0xf]
        %v4960 = vld [vmem:[%s1105 + $0x30c] sm:$0xff]
        %v4961 = vld [vmem:[%s1105 + $0x314] sm:$0xff]
        %v4962 = vld [vmem:[%s1105 + $0x31c] sm:$0xf]
        %v4963 = vld [vmem:[%s1105 + $0x320] sm:$0xff]
        %v4964 = vld [vmem:[%s1105 + $0x328] sm:$0xff]
        %v4965 = vld [vmem:[%s1105 + $0x330] sm:$0xf]
        %v4966 = vld [vmem:[%s1105 + $0x334] sm:$0xff]
        %v4967 = vld [vmem:[%s1105 + $0x33c] sm:$0xff]
        %v4968 = vld [vmem:[%s1105 + $0x344] sm:$0xf]
        %v4969 = vld [vmem:[%s1105 + $0x348] sm:$0xff]
        %v4970 = vld [vmem:[%s1105 + $0x350] sm:$0xff]
        %v4971 = vld [vmem:[%s1105 + $0x358] sm:$0xf]
        %v4972 = vld [vmem:[%s1105 + $0x35c] sm:$0xff]
        %v4973 = vld [vmem:[%s1105 + $0x364] sm:$0xff]
        %v4974 = vld [vmem:[%s1105 + $0x36c] sm:$0xf]
        %v4975 = vld [vmem:[%s1105 + $0x370] sm:$0xff]
        %v4976 = vld [vmem:[%s1105 + $0x378] sm:$0xff]
        %v4977 = vld [vmem:[%s1105 + $0x380] sm:$0xf]
        %v4978 = vld [vmem:[%s1105 + $0x384] sm:$0xff]
        %v4979 = vld [vmem:[%s1105 + $0x38c] sm:$0xff]
        %v4980 = vld [vmem:[%s1105 + $0x394] sm:$0xf]
        %v4981 = vld [vmem:[%s1105 + $0x398] sm:$0xff]
        %v4982 = vld [vmem:[%s1105 + $0x3a0] sm:$0xff]
        %v4983 = vld [vmem:[%s1105 + $0x3a8] sm:$0xf]
        %v4984 = vld [vmem:[%s1105 + $0x3ac] sm:$0xff]
        %v4985 = vld [vmem:[%s1105 + $0x3b4] sm:$0xff]
        %v4986 = vld [vmem:[%s1105 + $0x3bc] sm:$0xf]
        %v4987 = vld [vmem:[%s1105 + $0x3c0] sm:$0xff]
        %v4988 = vld [vmem:[%s1105 + $0x3c8] sm:$0xff]
        %v4989 = vld [vmem:[%s1105 + $0x3d0] sm:$0xf]
        %v4990 = vld [vmem:[%s1105 + $0x3d4] sm:$0xff]
        %v4991 = vld [vmem:[%s1105 + $0x3dc] sm:$0xff]
        %v4992 = vld [vmem:[%s1105 + $0x3e4] sm:$0xf]
        %v4993 = vld [vmem:[%s1105 + $0x3e8] sm:$0xff]
        %v4994 = vld [vmem:[%s1105 + $0x3f0] sm:$0xff]
        %v4995 = vld [vmem:[%s1105 + $0x3f8] sm:$0xf]
        %v4996 = vld [vmem:[%s1105 + $0x3fc] sm:$0xff]
        %v4997 = vld [vmem:[%s1105 + $0x404] sm:$0xff]
        %v4998 = vld [vmem:[%s1105 + $0x40c] sm:$0xf]
        %v4999 = vld [vmem:[%s1105 + $0x410] sm:$0xff]
        %v5000 = vld [vmem:[%s1105 + $0x418] sm:$0xff]
        %v5001 = vld [vmem:[%s1105 + $0x420] sm:$0xf]
        %v5002 = vld [vmem:[%s1105 + $0x424] sm:$0xff]
        %v5003 = vld [vmem:[%s1105 + $0x42c] sm:$0xff]
        %v5004 = vld [vmem:[%s1105 + $0x434] sm:$0xf]
        %v5005 = vld [vmem:[%s1105 + $0x438] sm:$0xff]
        %v5006 = vld [vmem:[%s1105 + $0x440] sm:$0xff]
        %v5007 = vld [vmem:[%s1105 + $0x448] sm:$0xf]
        %v5008 = vld [vmem:[%s1105 + $0x44c] sm:$0xff]
        %v5009 = vld [vmem:[%s1105 + $0x454] sm:$0xff]
        %v5010 = vld [vmem:[%s1105 + $0x45c] sm:$0xf]
        %v5011 = vld [vmem:[%s1105 + $0x460] sm:$0xff]
        %v5012 = vld [vmem:[%s1105 + $0x468] sm:$0xff]
        %v5013 = vld [vmem:[%s1105 + $0x470] sm:$0xf]
        %v5014 = vld [vmem:[%s1105 + $0x474] sm:$0xff]
        %v5015 = vld [vmem:[%s1105 + $0x47c] sm:$0xff]
        %v5016 = vld [vmem:[%s1105 + $0x484] sm:$0xf]
        %v5017 = vld [vmem:[%s1105 + $0x488] sm:$0xff]
        %v5018 = vld [vmem:[%s1105 + $0x490] sm:$0xff]
        %v5019 = vld [vmem:[%s1105 + $0x498] sm:$0xf]
        %v5020 = vld [vmem:[%s1105 + $0x49c] sm:$0xff]
        %v5021 = vld [vmem:[%s1105 + $0x4a4] sm:$0xff]
        %v5022 = vld [vmem:[%s1105 + $0x4ac] sm:$0xf]
        %v5023 = vld [vmem:[%s1105 + $0x4b0] sm:$0xff]
        %v5024 = vld [vmem:[%s1105 + $0x4b8] sm:$0xff]
        %v5025 = vld [vmem:[%s1105 + $0x4c0] sm:$0xf]
        %v5026 = vld [vmem:[%s1105 + $0x4c4] sm:$0xff]
        %v5027 = vld [vmem:[%s1105 + $0x4cc] sm:$0xff]
        %v5028 = vld [vmem:[%s1105 + $0x4d4] sm:$0xf]
        %v5029 = vld [vmem:[%s1105 + $0x4d8] sm:$0xff]
        %v5030 = vld [vmem:[%s1105 + $0x4e0] sm:$0xff]
        %v5031 = vld [vmem:[%s1105 + $0x4e8] sm:$0xf]
        %v5032 = vld [vmem:[%s1105 + $0x4ec] sm:$0xff]
        %v5033 = vld [vmem:[%s1105 + $0x4f4] sm:$0xff]
        %v5034 = vld [vmem:[%s1105 + $0x4fc] sm:$0xf]
        %v5035 = vld [vmem:[%s1105 + $0x500] sm:$0xff]
        %v5036 = vld [vmem:[%s1105 + $0x508] sm:$0xff]
        %v5037 = vld [vmem:[%s1105 + $0x510] sm:$0xf]
        %v5038 = vld [vmem:[%s1105 + $0x514] sm:$0xff]
        %v5039 = vld [vmem:[%s1105 + $0x51c] sm:$0xff]
        %v5040 = vld [vmem:[%s1105 + $0x524] sm:$0xf]
        %v5041 = vld [vmem:[%s1105 + $0x528] sm:$0xff]
        %v5042 = vld [vmem:[%s1105 + $0x530] sm:$0xff]
        %v5043 = vld [vmem:[%s1105 + $0x538] sm:$0xf]
        %v5044 = vld [vmem:[%s1105 + $0x53c] sm:$0xff]
        %v5045 = vld [vmem:[%s1105 + $0x544] sm:$0xff]
        %v5046 = vld [vmem:[%s1105 + $0x54c] sm:$0xf]
        %v5047 = vld [vmem:[%s1105 + $0x550] sm:$0xff]
        %v5048 = vld [vmem:[%s1105 + $0x558] sm:$0xff]
        %v5049 = vld [vmem:[%s1105 + $0x560] sm:$0xf]
        %v5050 = vld [vmem:[%s1105 + $0x564] sm:$0xff]
        %v5051 = vld [vmem:[%s1105 + $0x56c] sm:$0xff]
        %v5052 = vld [vmem:[%s1105 + $0x574] sm:$0xf]
        %v5053 = vld [vmem:[%s1105 + $0x578] sm:$0xff]
        %v5054 = vld [vmem:[%s1105 + $0x580] sm:$0xff]
        %v5055 = vld [vmem:[%s1105 + $0x588] sm:$0xf]
        %v5056 = vld [vmem:[%s1105 + $0x58c] sm:$0xff]
        %v5057 = vld [vmem:[%s1105 + $0x594] sm:$0xff]
        %v5058 = vld [vmem:[%s1105 + $0x59c] sm:$0xf]
        %v5059 = vld [vmem:[%s1105 + $0x5a0] sm:$0xff]
        %v5060 = vld [vmem:[%s1105 + $0x5a8] sm:$0xff]
        %v5061 = vld [vmem:[%s1105 + $0x5b0] sm:$0xf]
        %v5062 = vld [vmem:[%s1105 + $0x5b4] sm:$0xff]
        %v5063 = vld [vmem:[%s1105 + $0x5bc] sm:$0xff]
        %v5064 = vld [vmem:[%s1105 + $0x5c4] sm:$0xf]
        %v5065 = vld [vmem:[%s1105 + $0x5c8] sm:$0xff]
        %v5066 = vld [vmem:[%s1105 + $0x5d0] sm:$0xff]
        %v5067 = vld [vmem:[%s1105 + $0x5d8] sm:$0xf]
        %v5068 = vld [vmem:[%s1105 + $0x5dc] sm:$0xff]
        %v5069 = vld [vmem:[%s1105 + $0x5e4] sm:$0xff]
        %v5070 = vld [vmem:[%s1105 + $0x5ec] sm:$0xf]
        %v5071 = vld [vmem:[%s1105 + $0x5f0] sm:$0xff]
        %v5072 = vld [vmem:[%s1105 + $0x5f8] sm:$0xff]
        %v5073 = vld [vmem:[%s1105 + $0x600] sm:$0xf]
        %v5074 = vld [vmem:[%s1105 + $0x604] sm:$0xff]
        %v5075 = vld [vmem:[%s1105 + $0x60c] sm:$0xff]
        %v5076 = vld [vmem:[%s1105 + $0x614] sm:$0xf]
        %v5077 = vld [vmem:[%s1105 + $0x618] sm:$0xff]
        %v5078 = vld [vmem:[%s1105 + $0x620] sm:$0xff]
        %v5079 = vld [vmem:[%s1105 + $0x628] sm:$0xf]
        %v5080 = vld [vmem:[%s1105 + $0x62c] sm:$0xff]
        %v5081 = vld [vmem:[%s1105 + $0x634] sm:$0xff]
        %v5082 = vld [vmem:[%s1105 + $0x63c] sm:$0xf]
        %v5083 = vld [vmem:[%s1105 + $0x640] sm:$0xff]
        %v5084 = vld [vmem:[%s1105 + $0x648] sm:$0xff]
        %v5085 = vld [vmem:[%s1105 + $0x650] sm:$0xf]
        %v5086 = vld [vmem:[%s1105 + $0x654] sm:$0xff]
        %v5087 = vld [vmem:[%s1105 + $0x65c] sm:$0xff]
        %v5088 = vld [vmem:[%s1105 + $0x664] sm:$0xf]
        %v5089 = vld [vmem:[%s1105 + $0x668] sm:$0xff]
        %v5090 = vld [vmem:[%s1105 + $0x670] sm:$0xff]
        %v5091 = vld [vmem:[%s1105 + $0x678] sm:$0xf]
        %v5092 = vld [vmem:[%s1105 + $0x67c] sm:$0xff]
        %v5093 = vld [vmem:[%s1105 + $0x684] sm:$0xff]
        %v5094 = vld [vmem:[%s1105 + $0x68c] sm:$0xf]
        %v5095 = vld [vmem:[%s1105 + $0x690] sm:$0xff]
        %v5096 = vld [vmem:[%s1105 + $0x698] sm:$0xff]
        %v5097 = vld [vmem:[%s1105 + $0x6a0] sm:$0xf]
        %v5098 = vld [vmem:[%s1105 + $0x6a4] sm:$0xff]
        %v5099 = vld [vmem:[%s1105 + $0x6ac] sm:$0xff]
        %v5100 = vld [vmem:[%s1105 + $0x6b4] sm:$0xf]
        %v5101 = vld [vmem:[%s1105 + $0x6b8] sm:$0xff]
        %v5102 = vld [vmem:[%s1105 + $0x6c0] sm:$0xff]
        %v5103 = vld [vmem:[%s1105 + $0x6c8] sm:$0xf]
        %v5104 = vld [vmem:[%s1105 + $0x6cc] sm:$0xff]
        %v5105 = vld [vmem:[%s1105 + $0x6d4] sm:$0xff]
        %v5106 = vld [vmem:[%s1105 + $0x6dc] sm:$0xf]
        %v5107 = vld [vmem:[%s1105 + $0x6e0] sm:$0xff]
        %v5108 = vld [vmem:[%s1105 + $0x6e8] sm:$0xff]
        %v5109 = vld [vmem:[%s1105 + $0x6f0] sm:$0xf]
        %v5110 = vld [vmem:[%s1105 + $0x6f4] sm:$0xff]
        %v5111 = vld [vmem:[%s1105 + $0x6fc] sm:$0xff]
        %v5112 = vld [vmem:[%s1105 + $0x704] sm:$0xf]
        %v5113 = vld [vmem:[%s1105 + $0x708] sm:$0xff]
        %v5114 = vld [vmem:[%s1105 + $0x710] sm:$0xff]
        %v5115 = vld [vmem:[%s1105 + $0x718] sm:$0xf]
        %v5116 = vld [vmem:[%s1105 + $0x71c] sm:$0xff]
        %v5117 = vld [vmem:[%s1105 + $0x724] sm:$0xff]
        %v5118 = vld [vmem:[%s1105 + $0x72c] sm:$0xf]
        %v5119 = vld [vmem:[%s1105 + $0x730] sm:$0xff]
        %v5120 = vld [vmem:[%s1105 + $0x738] sm:$0xff]
        %v5121 = vld [vmem:[%s1105 + $0x740] sm:$0xf]
        %v5122 = vld [vmem:[%s1105 + $0x744] sm:$0xff]
        %v5123 = vld [vmem:[%s1105 + $0x74c] sm:$0xff]
        %v5124 = vld [vmem:[%s1105 + $0x754] sm:$0xf]
        %v5125 = vld [vmem:[%s1105 + $0x758] sm:$0xff]
        %v5126 = vld [vmem:[%s1105 + $0x760] sm:$0xff]
        %v5127 = vld [vmem:[%s1105 + $0x768] sm:$0xf]
        %v5128 = vld [vmem:[%s1105 + $0x76c] sm:$0xff]
        %v5129 = vld [vmem:[%s1105 + $0x774] sm:$0xff]
        %v5130 = vld [vmem:[%s1105 + $0x77c] sm:$0xf]
        %v5419 = vunpack.c.l.b16 %v4843
        %v5420 = vunpack.c.h.b16 %v4843
        %v5421 = vunpack.c.l.b16 %v4844
        %v5422 = vunpack.c.h.b16 %v4844
        %v5423 = vunpack.c.l.b16 %v4845
        %v5424 = vunpack.c.l.b16 %v4846
        %v5425 = vunpack.c.h.b16 %v4846
        %v5426 = vunpack.c.l.b16 %v4847
        %v5427 = vunpack.c.h.b16 %v4847
        %v5428 = vunpack.c.l.b16 %v4848
        %v5429 = vunpack.c.l.b16 %v4849
        %v5430 = vunpack.c.h.b16 %v4849
        %v5431 = vunpack.c.l.b16 %v4850
        %v5432 = vunpack.c.h.b16 %v4850
        %v5433 = vunpack.c.l.b16 %v4851
        %v5434 = vunpack.c.l.b16 %v4852
        %v5435 = vunpack.c.h.b16 %v4852
        %v5436 = vunpack.c.l.b16 %v4853
        %v5437 = vunpack.c.h.b16 %v4853
        %v5438 = vunpack.c.l.b16 %v4854
        %v5439 = vunpack.c.l.b16 %v4855
        %v5440 = vunpack.c.h.b16 %v4855
        %v5441 = vunpack.c.l.b16 %v4856
        %v5442 = vunpack.c.h.b16 %v4856
        %v5443 = vunpack.c.l.b16 %v4857
        %v5444 = vunpack.c.l.b16 %v4858
        %v5445 = vunpack.c.h.b16 %v4858
        %v5446 = vunpack.c.l.b16 %v4859
        %v5447 = vunpack.c.h.b16 %v4859
        %v5448 = vunpack.c.l.b16 %v4860
        %v5449 = vunpack.c.l.b16 %v4861
        %v5450 = vunpack.c.h.b16 %v4861
        %v5451 = vunpack.c.l.b16 %v4862
        %v5452 = vunpack.c.h.b16 %v4862
        %v5453 = vunpack.c.l.b16 %v4863
        %v5454 = vunpack.c.l.b16 %v4864
        %v5455 = vunpack.c.h.b16 %v4864
        %v5456 = vunpack.c.l.b16 %v4865
        %v5457 = vunpack.c.h.b16 %v4865
        %v5458 = vunpack.c.l.b16 %v4866
        %v5459 = vunpack.c.l.b16 %v4867
        %v5460 = vunpack.c.h.b16 %v4867
        %v5461 = vunpack.c.l.b16 %v4868
        %v5462 = vunpack.c.h.b16 %v4868
        %v5463 = vunpack.c.l.b16 %v4869
        %v5464 = vunpack.c.l.b16 %v4870
        %v5465 = vunpack.c.h.b16 %v4870
        %v5466 = vunpack.c.l.b16 %v4871
        %v5467 = vunpack.c.h.b16 %v4871
        %v5468 = vunpack.c.l.b16 %v4872
        %v5469 = vunpack.c.l.b16 %v4873
        %v5470 = vunpack.c.h.b16 %v4873
        %v5471 = vunpack.c.l.b16 %v4874
        %v5472 = vunpack.c.h.b16 %v4874
        %v5473 = vunpack.c.l.b16 %v4875
        %v5474 = vunpack.c.l.b16 %v4876
        %v5475 = vunpack.c.h.b16 %v4876
        %v5476 = vunpack.c.l.b16 %v4877
        %v5477 = vunpack.c.h.b16 %v4877
        %v5478 = vunpack.c.l.b16 %v4878
        %v5479 = vunpack.c.l.b16 %v4879
        %v5480 = vunpack.c.h.b16 %v4879
        %v5481 = vunpack.c.l.b16 %v4880
        %v5482 = vunpack.c.h.b16 %v4880
        %v5483 = vunpack.c.l.b16 %v4881
        %v5484 = vunpack.c.l.b16 %v4882
        %v5485 = vunpack.c.h.b16 %v4882
        %v5486 = vunpack.c.l.b16 %v4883
        %v5487 = vunpack.c.h.b16 %v4883
        %v5488 = vunpack.c.l.b16 %v4884
        %v5489 = vunpack.c.l.b16 %v4885
        %v5490 = vunpack.c.h.b16 %v4885
        %v5491 = vunpack.c.l.b16 %v4886
        %v5492 = vunpack.c.h.b16 %v4886
        %v5493 = vunpack.c.l.b16 %v4887
        %v5494 = vunpack.c.l.b16 %v4888
        %v5495 = vunpack.c.h.b16 %v4888
        %v5496 = vunpack.c.l.b16 %v4889
        %v5497 = vunpack.c.h.b16 %v4889
        %v5498 = vunpack.c.l.b16 %v4890
        %v5499 = vunpack.c.l.b16 %v4891
        %v5500 = vunpack.c.h.b16 %v4891
        %v5501 = vunpack.c.l.b16 %v4892
        %v5502 = vunpack.c.h.b16 %v4892
        %v5503 = vunpack.c.l.b16 %v4893
        %v5504 = vunpack.c.l.b16 %v4894
        %v5505 = vunpack.c.h.b16 %v4894
        %v5506 = vunpack.c.l.b16 %v4895
        %v5507 = vunpack.c.h.b16 %v4895
        %v5508 = vunpack.c.l.b16 %v4896
        %v5509 = vunpack.c.l.b16 %v4897
        %v5510 = vunpack.c.h.b16 %v4897
        %v5511 = vunpack.c.l.b16 %v4898
        %v5512 = vunpack.c.h.b16 %v4898
        %v5513 = vunpack.c.l.b16 %v4899
        %v5514 = vunpack.c.l.b16 %v4900
        %v5515 = vunpack.c.h.b16 %v4900
        %v5516 = vunpack.c.l.b16 %v4901
        %v5517 = vunpack.c.h.b16 %v4901
        %v5518 = vunpack.c.l.b16 %v4902
        %v5519 = vunpack.c.l.b16 %v4903
        %v5520 = vunpack.c.h.b16 %v4903
        %v5521 = vunpack.c.l.b16 %v4904
        %v5522 = vunpack.c.h.b16 %v4904
        %v5523 = vunpack.c.l.b16 %v4905
        %v5524 = vunpack.c.l.b16 %v4906
        %v5525 = vunpack.c.h.b16 %v4906
        %v5526 = vunpack.c.l.b16 %v4907
        %v5527 = vunpack.c.h.b16 %v4907
        %v5528 = vunpack.c.l.b16 %v4908
        %v5529 = vunpack.c.l.b16 %v4909
        %v5530 = vunpack.c.h.b16 %v4909
        %v5531 = vunpack.c.l.b16 %v4910
        %v5532 = vunpack.c.h.b16 %v4910
        %v5533 = vunpack.c.l.b16 %v4911
        %v5534 = vunpack.c.l.b16 %v4912
        %v5535 = vunpack.c.h.b16 %v4912
        %v5536 = vunpack.c.l.b16 %v4913
        %v5537 = vunpack.c.h.b16 %v4913
        %v5538 = vunpack.c.l.b16 %v4914
        %v5539 = vunpack.c.l.b16 %v4915
        %v5540 = vunpack.c.h.b16 %v4915
        %v5541 = vunpack.c.l.b16 %v4916
        %v5542 = vunpack.c.h.b16 %v4916
        %v5543 = vunpack.c.l.b16 %v4917
        %v5544 = vunpack.c.l.b16 %v4918
        %v5545 = vunpack.c.h.b16 %v4918
        %v5546 = vunpack.c.l.b16 %v4919
        %v5547 = vunpack.c.h.b16 %v4919
        %v5548 = vunpack.c.l.b16 %v4920
        %v5549 = vunpack.c.l.b16 %v4921
        %v5550 = vunpack.c.h.b16 %v4921
        %v5551 = vunpack.c.l.b16 %v4922
        %v5552 = vunpack.c.h.b16 %v4922
        %v5553 = vunpack.c.l.b16 %v4923
        %v5554 = vunpack.c.l.b16 %v4924
        %v5555 = vunpack.c.h.b16 %v4924
        %v5556 = vunpack.c.l.b16 %v4925
        %v5557 = vunpack.c.h.b16 %v4925
        %v5558 = vunpack.c.l.b16 %v4926
        %v5559 = vunpack.c.l.b16 %v4927
        %v5560 = vunpack.c.h.b16 %v4927
        %v5561 = vunpack.c.l.b16 %v4928
        %v5562 = vunpack.c.h.b16 %v4928
        %v5563 = vunpack.c.l.b16 %v4929
        %v5564 = vunpack.c.l.b16 %v4930
        %v5565 = vunpack.c.h.b16 %v4930
        %v5566 = vunpack.c.l.b16 %v4931
        %v5567 = vunpack.c.h.b16 %v4931
        %v5568 = vunpack.c.l.b16 %v4932
        %v5569 = vunpack.c.l.b16 %v4933
        %v5570 = vunpack.c.h.b16 %v4933
        %v5571 = vunpack.c.l.b16 %v4934
        %v5572 = vunpack.c.h.b16 %v4934
        %v5573 = vunpack.c.l.b16 %v4935
        %v5574 = vunpack.c.l.b16 %v4936
        %v5575 = vunpack.c.h.b16 %v4936
        %v5576 = vunpack.c.l.b16 %v4937
        %v5577 = vunpack.c.h.b16 %v4937
        %v5578 = vunpack.c.l.b16 %v4938
        %v5579 = vunpack.c.l.b16 %v4939
        %v5580 = vunpack.c.h.b16 %v4939
        %v5581 = vunpack.c.l.b16 %v4940
        %v5582 = vunpack.c.h.b16 %v4940
        %v5583 = vunpack.c.l.b16 %v4941
        %v5584 = vunpack.c.l.b16 %v4942
        %v5585 = vunpack.c.h.b16 %v4942
        %v5586 = vunpack.c.l.b16 %v4943
        %v5587 = vunpack.c.h.b16 %v4943
        %v5588 = vunpack.c.l.b16 %v4944
        %v5589 = vunpack.c.l.b16 %v4945
        %v5590 = vunpack.c.h.b16 %v4945
        %v5591 = vunpack.c.l.b16 %v4946
        %v5592 = vunpack.c.h.b16 %v4946
        %v5593 = vunpack.c.l.b16 %v4947
        %v5594 = vunpack.c.l.b16 %v4948
        %v5595 = vunpack.c.h.b16 %v4948
        %v5596 = vunpack.c.l.b16 %v4949
        %v5597 = vunpack.c.h.b16 %v4949
        %v5598 = vunpack.c.l.b16 %v4950
        %v5599 = vunpack.c.l.b16 %v4951
        %v5600 = vunpack.c.h.b16 %v4951
        %v5601 = vunpack.c.l.b16 %v4952
        %v5602 = vunpack.c.h.b16 %v4952
        %v5603 = vunpack.c.l.b16 %v4953
        %v5604 = vunpack.c.l.b16 %v4954
        %v5605 = vunpack.c.h.b16 %v4954
        %v5606 = vunpack.c.l.b16 %v4955
        %v5607 = vunpack.c.h.b16 %v4955
        %v5608 = vunpack.c.l.b16 %v4956
        %v5609 = vunpack.c.l.b16 %v4957
        %v5610 = vunpack.c.h.b16 %v4957
        %v5611 = vunpack.c.l.b16 %v4958
        %v5612 = vunpack.c.h.b16 %v4958
        %v5613 = vunpack.c.l.b16 %v4959
        %v5614 = vunpack.c.l.b16 %v4960
        %v5615 = vunpack.c.h.b16 %v4960
        %v5616 = vunpack.c.l.b16 %v4961
        %v5617 = vunpack.c.h.b16 %v4961
        %v5618 = vunpack.c.l.b16 %v4962
        %v5619 = vunpack.c.l.b16 %v4963
        %v5620 = vunpack.c.h.b16 %v4963
        %v5621 = vunpack.c.l.b16 %v4964
        %v5622 = vunpack.c.h.b16 %v4964
        %v5623 = vunpack.c.l.b16 %v4965
        %v5624 = vunpack.c.l.b16 %v4966
        %v5625 = vunpack.c.h.b16 %v4966
        %v5626 = vunpack.c.l.b16 %v4967
        %v5627 = vunpack.c.h.b16 %v4967
        %v5628 = vunpack.c.l.b16 %v4968
        %v5629 = vunpack.c.l.b16 %v4969
        %v5630 = vunpack.c.h.b16 %v4969
        %v5631 = vunpack.c.l.b16 %v4970
        %v5632 = vunpack.c.h.b16 %v4970
        %v5633 = vunpack.c.l.b16 %v4971
        %v5634 = vunpack.c.l.b16 %v4972
        %v5635 = vunpack.c.h.b16 %v4972
        %v5636 = vunpack.c.l.b16 %v4973
        %v5637 = vunpack.c.h.b16 %v4973
        %v5638 = vunpack.c.l.b16 %v4974
        %v5639 = vunpack.c.l.b16 %v4975
        %v5640 = vunpack.c.h.b16 %v4975
        %v5641 = vunpack.c.l.b16 %v4976
        %v5642 = vunpack.c.h.b16 %v4976
        %v5643 = vunpack.c.l.b16 %v4977
        %v5644 = vunpack.c.l.b16 %v4978
        %v5645 = vunpack.c.h.b16 %v4978
        %v5646 = vunpack.c.l.b16 %v4979
        %v5647 = vunpack.c.h.b16 %v4979
        %v5648 = vunpack.c.l.b16 %v4980
        %v5649 = vunpack.c.l.b16 %v4981
        %v5650 = vunpack.c.h.b16 %v4981
        %v5651 = vunpack.c.l.b16 %v4982
        %v5652 = vunpack.c.h.b16 %v4982
        %v5653 = vunpack.c.l.b16 %v4983
        %v5654 = vunpack.c.l.b16 %v4984
        %v5655 = vunpack.c.h.b16 %v4984
        %v5656 = vunpack.c.l.b16 %v4985
        %v5657 = vunpack.c.h.b16 %v4985
        %v5658 = vunpack.c.l.b16 %v4986
        %v5659 = vunpack.c.l.b16 %v4987
        %v5660 = vunpack.c.h.b16 %v4987
        %v5661 = vunpack.c.l.b16 %v4988
        %v5662 = vunpack.c.h.b16 %v4988
        %v5663 = vunpack.c.l.b16 %v4989
        %v5664 = vunpack.c.l.b16 %v4990
        %v5665 = vunpack.c.h.b16 %v4990
        %v5666 = vunpack.c.l.b16 %v4991
        %v5667 = vunpack.c.h.b16 %v4991
        %v5668 = vunpack.c.l.b16 %v4992
        %v5669 = vunpack.c.l.b16 %v4993
        %v5670 = vunpack.c.h.b16 %v4993
        %v5671 = vunpack.c.l.b16 %v4994
        %v5672 = vunpack.c.h.b16 %v4994
        %v5673 = vunpack.c.l.b16 %v4995
        %v5674 = vunpack.c.l.b16 %v4996
        %v5675 = vunpack.c.h.b16 %v4996
        %v5676 = vunpack.c.l.b16 %v4997
        %v5677 = vunpack.c.h.b16 %v4997
        %v5678 = vunpack.c.l.b16 %v4998
        %v5679 = vunpack.c.l.b16 %v4999
        %v5680 = vunpack.c.h.b16 %v4999
        %v5681 = vunpack.c.l.b16 %v5000
        %v5682 = vunpack.c.h.b16 %v5000
        %v5683 = vunpack.c.l.b16 %v5001
        %v5684 = vunpack.c.l.b16 %v5002
        %v5685 = vunpack.c.h.b16 %v5002
        %v5686 = vunpack.c.l.b16 %v5003
        %v5687 = vunpack.c.h.b16 %v5003
        %v5688 = vunpack.c.l.b16 %v5004
        %v5689 = vunpack.c.l.b16 %v5005
        %v5690 = vunpack.c.h.b16 %v5005
        %v5691 = vunpack.c.l.b16 %v5006
        %v5692 = vunpack.c.h.b16 %v5006
        %v5693 = vunpack.c.l.b16 %v5007
        %v5694 = vunpack.c.l.b16 %v5008
        %v5695 = vunpack.c.h.b16 %v5008
        %v5696 = vunpack.c.l.b16 %v5009
        %v5697 = vunpack.c.h.b16 %v5009
        %v5698 = vunpack.c.l.b16 %v5010
        %v5699 = vunpack.c.l.b16 %v5011
        %v5700 = vunpack.c.h.b16 %v5011
        %v5701 = vunpack.c.l.b16 %v5012
        %v5702 = vunpack.c.h.b16 %v5012
        %v5703 = vunpack.c.l.b16 %v5013
        %v5704 = vunpack.c.l.b16 %v5014
        %v5705 = vunpack.c.h.b16 %v5014
        %v5706 = vunpack.c.l.b16 %v5015
        %v5707 = vunpack.c.h.b16 %v5015
        %v5708 = vunpack.c.l.b16 %v5016
        %v5709 = vunpack.c.l.b16 %v5017
        %v5710 = vunpack.c.h.b16 %v5017
        %v5711 = vunpack.c.l.b16 %v5018
        %v5712 = vunpack.c.h.b16 %v5018
        %v5713 = vunpack.c.l.b16 %v5019
        %v5714 = vunpack.c.l.b16 %v5020
        %v5715 = vunpack.c.h.b16 %v5020
        %v5716 = vunpack.c.l.b16 %v5021
        %v5717 = vunpack.c.h.b16 %v5021
        %v5718 = vunpack.c.l.b16 %v5022
        %v5719 = vunpack.c.l.b16 %v5023
        %v5720 = vunpack.c.h.b16 %v5023
        %v5721 = vunpack.c.l.b16 %v5024
        %v5722 = vunpack.c.h.b16 %v5024
        %v5723 = vunpack.c.l.b16 %v5025
        %v5724 = vunpack.c.l.b16 %v5026
        %v5725 = vunpack.c.h.b16 %v5026
        %v5726 = vunpack.c.l.b16 %v5027
        %v5727 = vunpack.c.h.b16 %v5027
        %v5728 = vunpack.c.l.b16 %v5028
        %v5729 = vunpack.c.l.b16 %v5029
        %v5730 = vunpack.c.h.b16 %v5029
        %v5731 = vunpack.c.l.b16 %v5030
        %v5732 = vunpack.c.h.b16 %v5030
        %v5733 = vunpack.c.l.b16 %v5031
        %v5734 = vunpack.c.l.b16 %v5032
        %v5735 = vunpack.c.h.b16 %v5032
        %v5736 = vunpack.c.l.b16 %v5033
        %v5737 = vunpack.c.h.b16 %v5033
        %v5738 = vunpack.c.l.b16 %v5034
        %v5739 = vunpack.c.l.b16 %v5035
        %v5740 = vunpack.c.h.b16 %v5035
        %v5741 = vunpack.c.l.b16 %v5036
        %v5742 = vunpack.c.h.b16 %v5036
        %v5743 = vunpack.c.l.b16 %v5037
        %v5744 = vunpack.c.l.b16 %v5038
        %v5745 = vunpack.c.h.b16 %v5038
        %v5746 = vunpack.c.l.b16 %v5039
        %v5747 = vunpack.c.h.b16 %v5039
        %v5748 = vunpack.c.l.b16 %v5040
        %v5749 = vunpack.c.l.b16 %v5041
        %v5750 = vunpack.c.h.b16 %v5041
        %v5751 = vunpack.c.l.b16 %v5042
        %v5752 = vunpack.c.h.b16 %v5042
        %v5753 = vunpack.c.l.b16 %v5043
        %v5754 = vunpack.c.l.b16 %v5044
        %v5755 = vunpack.c.h.b16 %v5044
        %v5756 = vunpack.c.l.b16 %v5045
        %v5757 = vunpack.c.h.b16 %v5045
        %v5758 = vunpack.c.l.b16 %v5046
        %v5759 = vunpack.c.l.b16 %v5047
        %v5760 = vunpack.c.h.b16 %v5047
        %v5761 = vunpack.c.l.b16 %v5048
        %v5762 = vunpack.c.h.b16 %v5048
        %v5763 = vunpack.c.l.b16 %v5049
        %v5764 = vunpack.c.l.b16 %v5050
        %v5765 = vunpack.c.h.b16 %v5050
        %v5766 = vunpack.c.l.b16 %v5051
        %v5767 = vunpack.c.h.b16 %v5051
        %v5768 = vunpack.c.l.b16 %v5052
        %v5769 = vunpack.c.l.b16 %v5053
        %v5770 = vunpack.c.h.b16 %v5053
        %v5771 = vunpack.c.l.b16 %v5054
        %v5772 = vunpack.c.h.b16 %v5054
        %v5773 = vunpack.c.l.b16 %v5055
        %v5774 = vunpack.c.l.b16 %v5056
        %v5775 = vunpack.c.h.b16 %v5056
        %v5776 = vunpack.c.l.b16 %v5057
        %v5777 = vunpack.c.h.b16 %v5057
        %v5778 = vunpack.c.l.b16 %v5058
        %v5779 = vunpack.c.l.b16 %v5059
        %v5780 = vunpack.c.h.b16 %v5059
        %v5781 = vunpack.c.l.b16 %v5060
        %v5782 = vunpack.c.h.b16 %v5060
        %v5783 = vunpack.c.l.b16 %v5061
        %v5784 = vunpack.c.l.b16 %v5062
        %v5785 = vunpack.c.h.b16 %v5062
        %v5786 = vunpack.c.l.b16 %v5063
        %v5787 = vunpack.c.h.b16 %v5063
        %v5788 = vunpack.c.l.b16 %v5064
        %v5789 = vunpack.c.l.b16 %v5065
        %v5790 = vunpack.c.h.b16 %v5065
        %v5791 = vunpack.c.l.b16 %v5066
        %v5792 = vunpack.c.h.b16 %v5066
        %v5793 = vunpack.c.l.b16 %v5067
        %v5794 = vunpack.c.l.b16 %v5068
        %v5795 = vunpack.c.h.b16 %v5068
        %v5796 = vunpack.c.l.b16 %v5069
        %v5797 = vunpack.c.h.b16 %v5069
        %v5798 = vunpack.c.l.b16 %v5070
        %v5799 = vunpack.c.l.b16 %v5071
        %v5800 = vunpack.c.h.b16 %v5071
        %v5801 = vunpack.c.l.b16 %v5072
        %v5802 = vunpack.c.h.b16 %v5072
        %v5803 = vunpack.c.l.b16 %v5073
        %v5804 = vunpack.c.l.b16 %v5074
        %v5805 = vunpack.c.h.b16 %v5074
        %v5806 = vunpack.c.l.b16 %v5075
        %v5807 = vunpack.c.h.b16 %v5075
        %v5808 = vunpack.c.l.b16 %v5076
        %v5809 = vunpack.c.l.b16 %v5077
        %v5810 = vunpack.c.h.b16 %v5077
        %v5811 = vunpack.c.l.b16 %v5078
        %v5812 = vunpack.c.h.b16 %v5078
        %v5813 = vunpack.c.l.b16 %v5079
        %v5814 = vunpack.c.l.b16 %v5080
        %v5815 = vunpack.c.h.b16 %v5080
        %v5816 = vunpack.c.l.b16 %v5081
        %v5817 = vunpack.c.h.b16 %v5081
        %v5818 = vunpack.c.l.b16 %v5082
        %v5819 = vunpack.c.l.b16 %v5083
        %v5820 = vunpack.c.h.b16 %v5083
        %v5821 = vunpack.c.l.b16 %v5084
        %v5822 = vunpack.c.h.b16 %v5084
        %v5823 = vunpack.c.l.b16 %v5085
        %v5824 = vunpack.c.l.b16 %v5086
        %v5825 = vunpack.c.h.b16 %v5086
        %v5826 = vunpack.c.l.b16 %v5087
        %v5827 = vunpack.c.h.b16 %v5087
        %v5828 = vunpack.c.l.b16 %v5088
        %v5829 = vunpack.c.l.b16 %v5089
        %v5830 = vunpack.c.h.b16 %v5089
        %v5831 = vunpack.c.l.b16 %v5090
        %v5832 = vunpack.c.h.b16 %v5090
        %v5833 = vunpack.c.l.b16 %v5091
        %v5834 = vunpack.c.l.b16 %v5092
        %v5835 = vunpack.c.h.b16 %v5092
        %v5836 = vunpack.c.l.b16 %v5093
        %v5837 = vunpack.c.h.b16 %v5093
        %v5838 = vunpack.c.l.b16 %v5094
        %v5839 = vunpack.c.l.b16 %v5095
        %v5840 = vunpack.c.h.b16 %v5095
        %v5841 = vunpack.c.l.b16 %v5096
        %v5842 = vunpack.c.h.b16 %v5096
        %v5843 = vunpack.c.l.b16 %v5097
        %v5844 = vunpack.c.l.b16 %v5098
        %v5845 = vunpack.c.h.b16 %v5098
        %v5846 = vunpack.c.l.b16 %v5099
        %v5847 = vunpack.c.h.b16 %v5099
        %v5848 = vunpack.c.l.b16 %v5100
        %v5849 = vunpack.c.l.b16 %v5101
        %v5850 = vunpack.c.h.b16 %v5101
        %v5851 = vunpack.c.l.b16 %v5102
        %v5852 = vunpack.c.h.b16 %v5102
        %v5853 = vunpack.c.l.b16 %v5103
        %v5854 = vunpack.c.l.b16 %v5104
        %v5855 = vunpack.c.h.b16 %v5104
        %v5856 = vunpack.c.l.b16 %v5105
        %v5857 = vunpack.c.h.b16 %v5105
        %v5858 = vunpack.c.l.b16 %v5106
        %v5859 = vunpack.c.l.b16 %v5107
        %v5860 = vunpack.c.h.b16 %v5107
        %v5861 = vunpack.c.l.b16 %v5108
        %v5862 = vunpack.c.h.b16 %v5108
        %v5863 = vunpack.c.l.b16 %v5109
        %v5864 = vunpack.c.l.b16 %v5110
        %v5865 = vunpack.c.h.b16 %v5110
        %v5866 = vunpack.c.l.b16 %v5111
        %v5867 = vunpack.c.h.b16 %v5111
        %v5868 = vunpack.c.l.b16 %v5112
        %v5869 = vunpack.c.l.b16 %v5113
        %v5870 = vunpack.c.h.b16 %v5113
        %v5871 = vunpack.c.l.b16 %v5114
        %v5872 = vunpack.c.h.b16 %v5114
        %v5873 = vunpack.c.l.b16 %v5115
        %v5874 = vunpack.c.l.b16 %v5116
        %v5875 = vunpack.c.h.b16 %v5116
        %v5876 = vunpack.c.l.b16 %v5117
        %v5877 = vunpack.c.h.b16 %v5117
        %v5878 = vunpack.c.l.b16 %v5118
        %v5879 = vunpack.c.l.b16 %v5119
        %v5880 = vunpack.c.h.b16 %v5119
        %v5881 = vunpack.c.l.b16 %v5120
        %v5882 = vunpack.c.h.b16 %v5120
        %v5883 = vunpack.c.l.b16 %v5121
        %v5884 = vunpack.c.l.b16 %v5122
        %v5885 = vunpack.c.h.b16 %v5122
        %v5886 = vunpack.c.l.b16 %v5123
        %v5887 = vunpack.c.h.b16 %v5123
        %v5888 = vunpack.c.l.b16 %v5124
        %v5889 = vunpack.c.l.b16 %v5125
        %v5890 = vunpack.c.h.b16 %v5125
        %v5891 = vunpack.c.l.b16 %v5126
        %v5892 = vunpack.c.h.b16 %v5126
        %v5893 = vunpack.c.l.b16 %v5127
        %v5894 = vunpack.c.l.b16 %v5128
        %v5895 = vunpack.c.h.b16 %v5128
        %v5896 = vunpack.c.l.b16 %v5129
        %v5897 = vunpack.c.h.b16 %v5129
        %v5898 = vunpack.c.l.b16 %v5130
        %v5899 = vpack.c.b16 %v5424, %v5419
        %v5900 = vpack.c.b16 %v5425, %v5420
        %v5901 = vpack.c.b16 %v5426, %v5421
        %v5902 = vpack.c.b16 %v5427, %v5422
        %v5903 = vpack.c.b16 %v5428, %v5423
        %v5904 = vpack.c.b16 %v5434, %v5429
        %v5905 = vpack.c.b16 %v5435, %v5430
        %v5906 = vpack.c.b16 %v5436, %v5431
        %v5907 = vpack.c.b16 %v5437, %v5432
        %v5908 = vpack.c.b16 %v5438, %v5433
        %v5909 = vpack.c.b16 %v5444, %v5439
        %v5910 = vpack.c.b16 %v5445, %v5440
        %v5911 = vpack.c.b16 %v5446, %v5441
        %v5912 = vpack.c.b16 %v5447, %v5442
        %v5913 = vpack.c.b16 %v5448, %v5443
        %v5914 = vpack.c.b16 %v5454, %v5449
        %v5915 = vpack.c.b16 %v5455, %v5450
        %v5916 = vpack.c.b16 %v5456, %v5451
        %v5917 = vpack.c.b16 %v5457, %v5452
        %v5918 = vpack.c.b16 %v5458, %v5453
        %v5919 = vpack.c.b16 %v5464, %v5459
        %v5920 = vpack.c.b16 %v5465, %v5460
        %v5921 = vpack.c.b16 %v5466, %v5461
        %v5922 = vpack.c.b16 %v5467, %v5462
        %v5923 = vpack.c.b16 %v5468, %v5463
        %v5924 = vpack.c.b16 %v5474, %v5469
        %v5925 = vpack.c.b16 %v5475, %v5470
        %v5926 = vpack.c.b16 %v5476, %v5471
        %v5927 = vpack.c.b16 %v5477, %v5472
        %v5928 = vpack.c.b16 %v5478, %v5473
        %v5929 = vpack.c.b16 %v5484, %v5479
        %v5930 = vpack.c.b16 %v5485, %v5480
        %v5931 = vpack.c.b16 %v5486, %v5481
        %v5932 = vpack.c.b16 %v5487, %v5482
        %v5933 = vpack.c.b16 %v5488, %v5483
        %v5934 = vpack.c.b16 %v5494, %v5489
        %v5935 = vpack.c.b16 %v5495, %v5490
        %v5936 = vpack.c.b16 %v5496, %v5491
        %v5937 = vpack.c.b16 %v5497, %v5492
        %v5938 = vpack.c.b16 %v5498, %v5493
        %v5939 = vpack.c.b16 %v5504, %v5499
        %v5940 = vpack.c.b16 %v5505, %v5500
        %v5941 = vpack.c.b16 %v5506, %v5501
        %v5942 = vpack.c.b16 %v5507, %v5502
        %v5943 = vpack.c.b16 %v5508, %v5503
        %v5944 = vpack.c.b16 %v5514, %v5509
        %v5945 = vpack.c.b16 %v5515, %v5510
        %v5946 = vpack.c.b16 %v5516, %v5511
        %v5947 = vpack.c.b16 %v5517, %v5512
        %v5948 = vpack.c.b16 %v5518, %v5513
        %v5949 = vpack.c.b16 %v5524, %v5519
        %v5950 = vpack.c.b16 %v5525, %v5520
        %v5951 = vpack.c.b16 %v5526, %v5521
        %v5952 = vpack.c.b16 %v5527, %v5522
        %v5953 = vpack.c.b16 %v5528, %v5523
        %v5954 = vpack.c.b16 %v5534, %v5529
        %v5955 = vpack.c.b16 %v5535, %v5530
        %v5956 = vpack.c.b16 %v5536, %v5531
        %v5957 = vpack.c.b16 %v5537, %v5532
        %v5958 = vpack.c.b16 %v5538, %v5533
        %v5959 = vpack.c.b16 %v5544, %v5539
        %v5960 = vpack.c.b16 %v5545, %v5540
        %v5961 = vpack.c.b16 %v5546, %v5541
        %v5962 = vpack.c.b16 %v5547, %v5542
        %v5963 = vpack.c.b16 %v5548, %v5543
        %v5964 = vpack.c.b16 %v5554, %v5549
        %v5965 = vpack.c.b16 %v5555, %v5550
        %v5966 = vpack.c.b16 %v5556, %v5551
        %v5967 = vpack.c.b16 %v5557, %v5552
        %v5968 = vpack.c.b16 %v5558, %v5553
        %v5969 = vpack.c.b16 %v5564, %v5559
        %v5970 = vpack.c.b16 %v5565, %v5560
        %v5971 = vpack.c.b16 %v5566, %v5561
        %v5972 = vpack.c.b16 %v5567, %v5562
        %v5973 = vpack.c.b16 %v5568, %v5563
        %v5974 = vpack.c.b16 %v5574, %v5569
        %v5975 = vpack.c.b16 %v5575, %v5570
        %v5976 = vpack.c.b16 %v5576, %v5571
        %v5977 = vpack.c.b16 %v5577, %v5572
        %v5978 = vpack.c.b16 %v5578, %v5573
        %v5979 = vpack.c.b16 %v5584, %v5579
        %v5980 = vpack.c.b16 %v5585, %v5580
        %v5981 = vpack.c.b16 %v5586, %v5581
        %v5982 = vpack.c.b16 %v5587, %v5582
        %v5983 = vpack.c.b16 %v5588, %v5583
        %v5984 = vpack.c.b16 %v5594, %v5589
        %v5985 = vpack.c.b16 %v5595, %v5590
        %v5986 = vpack.c.b16 %v5596, %v5591
        %v5987 = vpack.c.b16 %v5597, %v5592
        %v5988 = vpack.c.b16 %v5598, %v5593
        %v5989 = vpack.c.b16 %v5604, %v5599
        %v5990 = vpack.c.b16 %v5605, %v5600
        %v5991 = vpack.c.b16 %v5606, %v5601
        %v5992 = vpack.c.b16 %v5607, %v5602
        %v5993 = vpack.c.b16 %v5608, %v5603
        %v5994 = vpack.c.b16 %v5614, %v5609
        %v5995 = vpack.c.b16 %v5615, %v5610
        %v5996 = vpack.c.b16 %v5616, %v5611
        %v5997 = vpack.c.b16 %v5617, %v5612
        %v5998 = vpack.c.b16 %v5618, %v5613
        %v5999 = vpack.c.b16 %v5624, %v5619
        %v6000 = vpack.c.b16 %v5625, %v5620
        %v6001 = vpack.c.b16 %v5626, %v5621
        %v6002 = vpack.c.b16 %v5627, %v5622
        %v6003 = vpack.c.b16 %v5628, %v5623
        %v6004 = vpack.c.b16 %v5634, %v5629
        %v6005 = vpack.c.b16 %v5635, %v5630
        %v6006 = vpack.c.b16 %v5636, %v5631
        %v6007 = vpack.c.b16 %v5637, %v5632
        %v6008 = vpack.c.b16 %v5638, %v5633
        %v6009 = vpack.c.b16 %v5644, %v5639
        %v6010 = vpack.c.b16 %v5645, %v5640
        %v6011 = vpack.c.b16 %v5646, %v5641
        %v6012 = vpack.c.b16 %v5647, %v5642
        %v6013 = vpack.c.b16 %v5648, %v5643
        %v6014 = vpack.c.b16 %v5654, %v5649
        %v6015 = vpack.c.b16 %v5655, %v5650
        %v6016 = vpack.c.b16 %v5656, %v5651
        %v6017 = vpack.c.b16 %v5657, %v5652
        %v6018 = vpack.c.b16 %v5658, %v5653
        %v6019 = vpack.c.b16 %v5664, %v5659
        %v6020 = vpack.c.b16 %v5665, %v5660
        %v6021 = vpack.c.b16 %v5666, %v5661
        %v6022 = vpack.c.b16 %v5667, %v5662
        %v6023 = vpack.c.b16 %v5668, %v5663
        %v6024 = vpack.c.b16 %v5674, %v5669
        %v6025 = vpack.c.b16 %v5675, %v5670
        %v6026 = vpack.c.b16 %v5676, %v5671
        %v6027 = vpack.c.b16 %v5677, %v5672
        %v6028 = vpack.c.b16 %v5678, %v5673
        %v6029 = vpack.c.b16 %v5684, %v5679
        %v6030 = vpack.c.b16 %v5685, %v5680
        %v6031 = vpack.c.b16 %v5686, %v5681
        %v6032 = vpack.c.b16 %v5687, %v5682
        %v6033 = vpack.c.b16 %v5688, %v5683
        %v6034 = vpack.c.b16 %v5694, %v5689
        %v6035 = vpack.c.b16 %v5695, %v5690
        %v6036 = vpack.c.b16 %v5696, %v5691
        %v6037 = vpack.c.b16 %v5697, %v5692
        %v6038 = vpack.c.b16 %v5698, %v5693
        %v6039 = vpack.c.b16 %v5704, %v5699
        %v6040 = vpack.c.b16 %v5705, %v5700
        %v6041 = vpack.c.b16 %v5706, %v5701
        %v6042 = vpack.c.b16 %v5707, %v5702
        %v6043 = vpack.c.b16 %v5708, %v5703
        %v6044 = vpack.c.b16 %v5714, %v5709
        %v6045 = vpack.c.b16 %v5715, %v5710
        %v6046 = vpack.c.b16 %v5716, %v5711
        %v6047 = vpack.c.b16 %v5717, %v5712
        %v6048 = vpack.c.b16 %v5718, %v5713
        %v6049 = vpack.c.b16 %v5724, %v5719
        %v6050 = vpack.c.b16 %v5725, %v5720
        %v6051 = vpack.c.b16 %v5726, %v5721
        %v6052 = vpack.c.b16 %v5727, %v5722
        %v6053 = vpack.c.b16 %v5728, %v5723
        %v6054 = vpack.c.b16 %v5734, %v5729
        %v6055 = vpack.c.b16 %v5735, %v5730
        %v6056 = vpack.c.b16 %v5736, %v5731
        %v6057 = vpack.c.b16 %v5737, %v5732
        %v6058 = vpack.c.b16 %v5738, %v5733
        %v6059 = vpack.c.b16 %v5744, %v5739
        %v6060 = vpack.c.b16 %v5745, %v5740
        %v6061 = vpack.c.b16 %v5746, %v5741
        %v6062 = vpack.c.b16 %v5747, %v5742
        %v6063 = vpack.c.b16 %v5748, %v5743
        %v6064 = vpack.c.b16 %v5754, %v5749
        %v6065 = vpack.c.b16 %v5755, %v5750
        %v6066 = vpack.c.b16 %v5756, %v5751
        %v6067 = vpack.c.b16 %v5757, %v5752
        %v6068 = vpack.c.b16 %v5758, %v5753
        %v6069 = vpack.c.b16 %v5764, %v5759
        %v6070 = vpack.c.b16 %v5765, %v5760
        %v6071 = vpack.c.b16 %v5766, %v5761
        %v6072 = vpack.c.b16 %v5767, %v5762
        %v6073 = vpack.c.b16 %v5768, %v5763
        %v6074 = vpack.c.b16 %v5774, %v5769
        %v6075 = vpack.c.b16 %v5775, %v5770
        %v6076 = vpack.c.b16 %v5776, %v5771
        %v6077 = vpack.c.b16 %v5777, %v5772
        %v6078 = vpack.c.b16 %v5778, %v5773
        %v6079 = vpack.c.b16 %v5784, %v5779
        %v6080 = vpack.c.b16 %v5785, %v5780
        %v6081 = vpack.c.b16 %v5786, %v5781
        %v6082 = vpack.c.b16 %v5787, %v5782
        %v6083 = vpack.c.b16 %v5788, %v5783
        %v6084 = vpack.c.b16 %v5794, %v5789
        %v6085 = vpack.c.b16 %v5795, %v5790
        %v6086 = vpack.c.b16 %v5796, %v5791
        %v6087 = vpack.c.b16 %v5797, %v5792
        %v6088 = vpack.c.b16 %v5798, %v5793
        %v6089 = vpack.c.b16 %v5804, %v5799
        %v6090 = vpack.c.b16 %v5805, %v5800
        %v6091 = vpack.c.b16 %v5806, %v5801
        %v6092 = vpack.c.b16 %v5807, %v5802
        %v6093 = vpack.c.b16 %v5808, %v5803
        %v6094 = vpack.c.b16 %v5814, %v5809
        %v6095 = vpack.c.b16 %v5815, %v5810
        %v6096 = vpack.c.b16 %v5816, %v5811
        %v6097 = vpack.c.b16 %v5817, %v5812
        %v6098 = vpack.c.b16 %v5818, %v5813
        %v6099 = vpack.c.b16 %v5824, %v5819
        %v6100 = vpack.c.b16 %v5825, %v5820
        %v6101 = vpack.c.b16 %v5826, %v5821
        %v6102 = vpack.c.b16 %v5827, %v5822
        %v6103 = vpack.c.b16 %v5828, %v5823
        %v6104 = vpack.c.b16 %v5834, %v5829
        %v6105 = vpack.c.b16 %v5835, %v5830
        %v6106 = vpack.c.b16 %v5836, %v5831
        %v6107 = vpack.c.b16 %v5837, %v5832
        %v6108 = vpack.c.b16 %v5838, %v5833
        %v6109 = vpack.c.b16 %v5844, %v5839
        %v6110 = vpack.c.b16 %v5845, %v5840
        %v6111 = vpack.c.b16 %v5846, %v5841
        %v6112 = vpack.c.b16 %v5847, %v5842
        %v6113 = vpack.c.b16 %v5848, %v5843
        %v6114 = vpack.c.b16 %v5854, %v5849
        %v6115 = vpack.c.b16 %v5855, %v5850
        %v6116 = vpack.c.b16 %v5856, %v5851
        %v6117 = vpack.c.b16 %v5857, %v5852
        %v6118 = vpack.c.b16 %v5858, %v5853
        %v6119 = vpack.c.b16 %v5864, %v5859
        %v6120 = vpack.c.b16 %v5865, %v5860
        %v6121 = vpack.c.b16 %v5866, %v5861
        %v6122 = vpack.c.b16 %v5867, %v5862
        %v6123 = vpack.c.b16 %v5868, %v5863
        %v6124 = vpack.c.b16 %v5874, %v5869
        %v6125 = vpack.c.b16 %v5875, %v5870
        %v6126 = vpack.c.b16 %v5876, %v5871
        %v6127 = vpack.c.b16 %v5877, %v5872
        %v6128 = vpack.c.b16 %v5878, %v5873
        %v6129 = vpack.c.b16 %v5884, %v5879
        %v6130 = vpack.c.b16 %v5885, %v5880
        %v6131 = vpack.c.b16 %v5886, %v5881
        %v6132 = vpack.c.b16 %v5887, %v5882
        %v6133 = vpack.c.b16 %v5888, %v5883
        %v6134 = vpack.c.b16 %v5894, %v5889
        %v6135 = vpack.c.b16 %v5895, %v5890
        %v6136 = vpack.c.b16 %v5896, %v5891
        %v6137 = vpack.c.b16 %v5897, %v5892
        %v6138 = vpack.c.b16 %v5898, %v5893
        %6379 = vmatpush.bf16.msra.mxu0 %v5934
        %6380 = vmatpush.bf16.msra.mxu0 %v5929
        %6381 = vmatpush.bf16.msra.mxu0 %v5924
        %6382 = vmatpush.bf16.msra.mxu0 %v5919
        %6383 = vmatpush.bf16.msra.mxu0 %v5914
        %6384 = vmatpush.bf16.msra.mxu0 %v5909
        %6385 = vmatpush.bf16.msra.mxu0 %v5904
        %6386 = vmatpush.bf16.msra.mxu0 %v5899
        %6387 = vmatmul.bf16.gmra.mxu0 %v4837
        %v6388 = vpop.f32.mrf.mxu0
        %v6389 = vadd.f32 0.0, %v6388
        %v6390 = vpop.f32.mrf.mxu0
        %v6391 = vadd.f32 0.0, %v6390
        %6392 = vdwg.mxu0
        %6393 = vmatpush.bf16.msra.mxu0 %v5974
        %6394 = vmatpush.bf16.msra.mxu0 %v5969
        %6395 = vmatpush.bf16.msra.mxu0 %v5964
        %6396 = vmatpush.bf16.msra.mxu0 %v5959
        %6397 = vmatpush.bf16.msra.mxu0 %v5954
        %6398 = vmatpush.bf16.msra.mxu0 %v5949
        %6399 = vmatpush.bf16.msra.mxu0 %v5944
        %6400 = vmatpush.bf16.msra.mxu0 %v5939
        %6401 = vmatmul.bf16.gmra.mxu0 %v4838
        %v6402 = vpop.f32.mrf.mxu0
        %v6403 = vadd.f32 %v6389, %v6402
        %v6404 = vpop.f32.mrf.mxu0
        %v6405 = vadd.f32 %v6391, %v6404
        %6406 = vdwg.mxu0
        %6407 = vmatpush.bf16.msra.mxu0 %v6014
        %6408 = vmatpush.bf16.msra.mxu0 %v6009
        %6409 = vmatpush.bf16.msra.mxu0 %v6004
        %6410 = vmatpush.bf16.msra.mxu0 %v5999
        %6411 = vmatpush.bf16.msra.mxu0 %v5994
        %6412 = vmatpush.bf16.msra.mxu0 %v5989
        %6413 = vmatpush.bf16.msra.mxu0 %v5984
        %6414 = vmatpush.bf16.msra.mxu0 %v5979
        %6415 = vmatmul.bf16.gmra.mxu0 %v4839
        %v6416 = vpop.f32.mrf.mxu0
        %v6417 = vadd.f32 %v6403, %v6416
        %v6418 = vpop.f32.mrf.mxu0
        %v6419 = vadd.f32 %v6405, %v6418
        %6420 = vdwg.mxu0
        %6421 = vmatpush.bf16.msra.mxu0 %v6054
        %6422 = vmatpush.bf16.msra.mxu0 %v6049
        %6423 = vmatpush.bf16.msra.mxu0 %v6044
        %6424 = vmatpush.bf16.msra.mxu0 %v6039
        %6425 = vmatpush.bf16.msra.mxu0 %v6034
        %6426 = vmatpush.bf16.msra.mxu0 %v6029
        %6427 = vmatpush.bf16.msra.mxu0 %v6024
        %6428 = vmatpush.bf16.msra.mxu0 %v6019
        %6429 = vmatmul.bf16.gmra.mxu0 %v4840
        %v6430 = vpop.f32.mrf.mxu0
        %v6431 = vadd.f32 %v6417, %v6430
        %v6432 = vpop.f32.mrf.mxu0
        %v6433 = vadd.f32 %v6419, %v6432
        %6434 = vdwg.mxu0
        %6435 = vmatpush.bf16.msra.mxu0 %v6094
        %6436 = vmatpush.bf16.msra.mxu0 %v6089
        %6437 = vmatpush.bf16.msra.mxu0 %v6084
        %6438 = vmatpush.bf16.msra.mxu0 %v6079
        %6439 = vmatpush.bf16.msra.mxu0 %v6074
        %6440 = vmatpush.bf16.msra.mxu0 %v6069
        %6441 = vmatpush.bf16.msra.mxu0 %v6064
        %6442 = vmatpush.bf16.msra.mxu0 %v6059
        %6443 = vmatmul.bf16.gmra.mxu0 %v4841
        %v6444 = vpop.f32.mrf.mxu0
        %v6445 = vadd.f32 %v6431, %v6444
        %v6446 = vpop.f32.mrf.mxu0
        %v6447 = vadd.f32 %v6433, %v6446
        %6448 = vdwg.mxu0
        %6449 = vmatpush.bf16.msra.mxu0 %v6134
        %6450 = vmatpush.bf16.msra.mxu0 %v6129
        %6451 = vmatpush.bf16.msra.mxu0 %v6124
        %6452 = vmatpush.bf16.msra.mxu0 %v6119
        %6453 = vmatpush.bf16.msra.mxu0 %v6114
        %6454 = vmatpush.bf16.msra.mxu0 %v6109
        %6455 = vmatpush.bf16.msra.mxu0 %v6104
        %6456 = vmatpush.bf16.msra.mxu0 %v6099
        %6457 = vmatmul.bf16.gmra.mxu0 %v4842
        %v6458 = vpop.f32.mrf.mxu0
        %v6459 = vadd.f32 %v6445, %v6458
        %v6460 = vpop.f32.mrf.mxu0
        %v6461 = vadd.f32 %v6447, %v6460
        %6462 = vdwg.mxu0
        %6463 = vmatpush.bf16.msra.mxu0 %v5935
        %6464 = vmatpush.bf16.msra.mxu0 %v5930
        %6465 = vmatpush.bf16.msra.mxu0 %v5925
        %6466 = vmatpush.bf16.msra.mxu0 %v5920
        %6467 = vmatpush.bf16.msra.mxu0 %v5915
        %6468 = vmatpush.bf16.msra.mxu0 %v5910
        %6469 = vmatpush.bf16.msra.mxu0 %v5905
        %6470 = vmatpush.bf16.msra.mxu0 %v5900
        %6471 = vmatmul.bf16.gmra.mxu0 %v4837
        %v6472 = vpop.f32.mrf.mxu0
        %v6473 = vadd.f32 0.0, %v6472
        %v6474 = vpop.f32.mrf.mxu0
        %v6475 = vadd.f32 0.0, %v6474
        %6476 = vdwg.mxu0
        %6477 = vmatpush.bf16.msra.mxu0 %v5975
        %6478 = vmatpush.bf16.msra.mxu0 %v5970
        %6479 = vmatpush.bf16.msra.mxu0 %v5965
        %6480 = vmatpush.bf16.msra.mxu0 %v5960
        %6481 = vmatpush.bf16.msra.mxu0 %v5955
        %6482 = vmatpush.bf16.msra.mxu0 %v5950
        %6483 = vmatpush.bf16.msra.mxu0 %v5945
        %6484 = vmatpush.bf16.msra.mxu0 %v5940
        %6485 = vmatmul.bf16.gmra.mxu0 %v4838
        %v6486 = vpop.f32.mrf.mxu0
        %v6487 = vadd.f32 %v6473, %v6486
        %v6488 = vpop.f32.mrf.mxu0
        %v6489 = vadd.f32 %v6475, %v6488
        %6490 = vdwg.mxu0
        %6491 = vmatpush.bf16.msra.mxu0 %v6015
        %6492 = vmatpush.bf16.msra.mxu0 %v6010
        %6493 = vmatpush.bf16.msra.mxu0 %v6005
        %6494 = vmatpush.bf16.msra.mxu0 %v6000
        %6495 = vmatpush.bf16.msra.mxu0 %v5995
        %6496 = vmatpush.bf16.msra.mxu0 %v5990
        %6497 = vmatpush.bf16.msra.mxu0 %v5985
        %6498 = vmatpush.bf16.msra.mxu0 %v5980
        %6499 = vmatmul.bf16.gmra.mxu0 %v4839
        %v6500 = vpop.f32.mrf.mxu0
        %v6501 = vadd.f32 %v6487, %v6500
        %v6502 = vpop.f32.mrf.mxu0
        %v6503 = vadd.f32 %v6489, %v6502
        %6504 = vdwg.mxu0
        %6505 = vmatpush.bf16.msra.mxu0 %v6055
        %6506 = vmatpush.bf16.msra.mxu0 %v6050
        %6507 = vmatpush.bf16.msra.mxu0 %v6045
        %6508 = vmatpush.bf16.msra.mxu0 %v6040
        %6509 = vmatpush.bf16.msra.mxu0 %v6035
        %6510 = vmatpush.bf16.msra.mxu0 %v6030
        %6511 = vmatpush.bf16.msra.mxu0 %v6025
        %6512 = vmatpush.bf16.msra.mxu0 %v6020
        %6513 = vmatmul.bf16.gmra.mxu0 %v4840
        %v6514 = vpop.f32.mrf.mxu0
        %v6515 = vadd.f32 %v6501, %v6514
        %v6516 = vpop.f32.mrf.mxu0
        %v6517 = vadd.f32 %v6503, %v6516
        %6518 = vdwg.mxu0
        %6519 = vmatpush.bf16.msra.mxu0 %v6095
        %6520 = vmatpush.bf16.msra.mxu0 %v6090
        %6521 = vmatpush.bf16.msra.mxu0 %v6085
        %6522 = vmatpush.bf16.msra.mxu0 %v6080
        %6523 = vmatpush.bf16.msra.mxu0 %v6075
        %6524 = vmatpush.bf16.msra.mxu0 %v6070
        %6525 = vmatpush.bf16.msra.mxu0 %v6065
        %6526 = vmatpush.bf16.msra.mxu0 %v6060
        %6527 = vmatmul.bf16.gmra.mxu0 %v4841
        %v6528 = vpop.f32.mrf.mxu0
        %v6529 = vadd.f32 %v6515, %v6528
        %v6530 = vpop.f32.mrf.mxu0
        %v6531 = vadd.f32 %v6517, %v6530
        %6532 = vdwg.mxu0
        %6533 = vmatpush.bf16.msra.mxu0 %v6135
        %6534 = vmatpush.bf16.msra.mxu0 %v6130
        %6535 = vmatpush.bf16.msra.mxu0 %v6125
        %6536 = vmatpush.bf16.msra.mxu0 %v6120
        %6537 = vmatpush.bf16.msra.mxu0 %v6115
        %6538 = vmatpush.bf16.msra.mxu0 %v6110
        %6539 = vmatpush.bf16.msra.mxu0 %v6105
        %6540 = vmatpush.bf16.msra.mxu0 %v6100
        %6541 = vmatmul.bf16.gmra.mxu0 %v4842
        %v6542 = vpop.f32.mrf.mxu0
        %v6543 = vadd.f32 %v6529, %v6542
        %v6544 = vpop.f32.mrf.mxu0
        %v6545 = vadd.f32 %v6531, %v6544
        %6546 = vdwg.mxu0
        %6547 = vmatpush.bf16.msra.mxu0 %v5936
        %6548 = vmatpush.bf16.msra.mxu0 %v5931
        %6549 = vmatpush.bf16.msra.mxu0 %v5926
        %6550 = vmatpush.bf16.msra.mxu0 %v5921
        %6551 = vmatpush.bf16.msra.mxu0 %v5916
        %6552 = vmatpush.bf16.msra.mxu0 %v5911
        %6553 = vmatpush.bf16.msra.mxu0 %v5906
        %6554 = vmatpush.bf16.msra.mxu0 %v5901
        %6555 = vmatmul.bf16.gmra.mxu0 %v4837
        %v6556 = vpop.f32.mrf.mxu0
        %v6557 = vadd.f32 0.0, %v6556
        %v6558 = vpop.f32.mrf.mxu0
        %v6559 = vadd.f32 0.0, %v6558
        %6560 = vdwg.mxu0
        %6561 = vmatpush.bf16.msra.mxu0 %v5976
        %6562 = vmatpush.bf16.msra.mxu0 %v5971
        %6563 = vmatpush.bf16.msra.mxu0 %v5966
        %6564 = vmatpush.bf16.msra.mxu0 %v5961
        %6565 = vmatpush.bf16.msra.mxu0 %v5956
        %6566 = vmatpush.bf16.msra.mxu0 %v5951
        %6567 = vmatpush.bf16.msra.mxu0 %v5946
        %6568 = vmatpush.bf16.msra.mxu0 %v5941
        %6569 = vmatmul.bf16.gmra.mxu0 %v4838
        %v6570 = vpop.f32.mrf.mxu0
        %v6571 = vadd.f32 %v6557, %v6570
        %v6572 = vpop.f32.mrf.mxu0
        %v6573 = vadd.f32 %v6559, %v6572
        %6574 = vdwg.mxu0
        %6575 = vmatpush.bf16.msra.mxu0 %v6016
        %6576 = vmatpush.bf16.msra.mxu0 %v6011
        %6577 = vmatpush.bf16.msra.mxu0 %v6006
        %6578 = vmatpush.bf16.msra.mxu0 %v6001
        %6579 = vmatpush.bf16.msra.mxu0 %v5996
        %6580 = vmatpush.bf16.msra.mxu0 %v5991
        %6581 = vmatpush.bf16.msra.mxu0 %v5986
        %6582 = vmatpush.bf16.msra.mxu0 %v5981
        %6583 = vmatmul.bf16.gmra.mxu0 %v4839
        %v6584 = vpop.f32.mrf.mxu0
        %v6585 = vadd.f32 %v6571, %v6584
        %v6586 = vpop.f32.mrf.mxu0
        %v6587 = vadd.f32 %v6573, %v6586
        %6588 = vdwg.mxu0
        %6589 = vmatpush.bf16.msra.mxu0 %v6056
        %6590 = vmatpush.bf16.msra.mxu0 %v6051
        %6591 = vmatpush.bf16.msra.mxu0 %v6046
        %6592 = vmatpush.bf16.msra.mxu0 %v6041
        %6593 = vmatpush.bf16.msra.mxu0 %v6036
        %6594 = vmatpush.bf16.msra.mxu0 %v6031
        %6595 = vmatpush.bf16.msra.mxu0 %v6026
        %6596 = vmatpush.bf16.msra.mxu0 %v6021
        %6597 = vmatmul.bf16.gmra.mxu0 %v4840
        %v6598 = vpop.f32.mrf.mxu0
        %v6599 = vadd.f32 %v6585, %v6598
        %v6600 = vpop.f32.mrf.mxu0
        %v6601 = vadd.f32 %v6587, %v6600
        %6602 = vdwg.mxu0
        %6603 = vmatpush.bf16.msra.mxu0 %v6096
        %6604 = vmatpush.bf16.msra.mxu0 %v6091
        %6605 = vmatpush.bf16.msra.mxu0 %v6086
        %6606 = vmatpush.bf16.msra.mxu0 %v6081
        %6607 = vmatpush.bf16.msra.mxu0 %v6076
        %6608 = vmatpush.bf16.msra.mxu0 %v6071
        %6609 = vmatpush.bf16.msra.mxu0 %v6066
        %6610 = vmatpush.bf16.msra.mxu0 %v6061
        %6611 = vmatmul.bf16.gmra.mxu0 %v4841
        %v6612 = vpop.f32.mrf.mxu0
        %v6613 = vadd.f32 %v6599, %v6612
        %v6614 = vpop.f32.mrf.mxu0
        %v6615 = vadd.f32 %v6601, %v6614
        %6616 = vdwg.mxu0
        %6617 = vmatpush.bf16.msra.mxu0 %v6136
        %6618 = vmatpush.bf16.msra.mxu0 %v6131
        %6619 = vmatpush.bf16.msra.mxu0 %v6126
        %6620 = vmatpush.bf16.msra.mxu0 %v6121
        %6621 = vmatpush.bf16.msra.mxu0 %v6116
        %6622 = vmatpush.bf16.msra.mxu0 %v6111
        %6623 = vmatpush.bf16.msra.mxu0 %v6106
        %6624 = vmatpush.bf16.msra.mxu0 %v6101
        %6625 = vmatmul.bf16.gmra.mxu0 %v4842
        %v6626 = vpop.f32.mrf.mxu0
        %v6627 = vadd.f32 %v6613, %v6626
        %v6628 = vpop.f32.mrf.mxu0
        %v6629 = vadd.f32 %v6615, %v6628
        %6630 = vdwg.mxu0
        %6631 = vmatpush.bf16.msra.mxu0 %v5937
        %6632 = vmatpush.bf16.msra.mxu0 %v5932
        %6633 = vmatpush.bf16.msra.mxu0 %v5927
        %6634 = vmatpush.bf16.msra.mxu0 %v5922
        %6635 = vmatpush.bf16.msra.mxu0 %v5917
        %6636 = vmatpush.bf16.msra.mxu0 %v5912
        %6637 = vmatpush.bf16.msra.mxu0 %v5907
        %6638 = vmatpush.bf16.msra.mxu0 %v5902
        %6639 = vmatmul.bf16.gmra.mxu0 %v4837
        %v6640 = vpop.f32.mrf.mxu0
        %v6641 = vadd.f32 0.0, %v6640
        %v6642 = vpop.f32.mrf.mxu0
        %v6643 = vadd.f32 0.0, %v6642
        %6644 = vdwg.mxu0
        %6645 = vmatpush.bf16.msra.mxu0 %v5977
        %6646 = vmatpush.bf16.msra.mxu0 %v5972
        %6647 = vmatpush.bf16.msra.mxu0 %v5967
        %6648 = vmatpush.bf16.msra.mxu0 %v5962
        %6649 = vmatpush.bf16.msra.mxu0 %v5957
        %6650 = vmatpush.bf16.msra.mxu0 %v5952
        %6651 = vmatpush.bf16.msra.mxu0 %v5947
        %6652 = vmatpush.bf16.msra.mxu0 %v5942
        %6653 = vmatmul.bf16.gmra.mxu0 %v4838
        %v6654 = vpop.f32.mrf.mxu0
        %v6655 = vadd.f32 %v6641, %v6654
        %v6656 = vpop.f32.mrf.mxu0
        %v6657 = vadd.f32 %v6643, %v6656
        %6658 = vdwg.mxu0
        %6659 = vmatpush.bf16.msra.mxu0 %v6017
        %6660 = vmatpush.bf16.msra.mxu0 %v6012
        %6661 = vmatpush.bf16.msra.mxu0 %v6007
        %6662 = vmatpush.bf16.msra.mxu0 %v6002
        %6663 = vmatpush.bf16.msra.mxu0 %v5997
        %6664 = vmatpush.bf16.msra.mxu0 %v5992
        %6665 = vmatpush.bf16.msra.mxu0 %v5987
        %6666 = vmatpush.bf16.msra.mxu0 %v5982
        %6667 = vmatmul.bf16.gmra.mxu0 %v4839
        %v6668 = vpop.f32.mrf.mxu0
        %v6669 = vadd.f32 %v6655, %v6668
        %v6670 = vpop.f32.mrf.mxu0
        %v6671 = vadd.f32 %v6657, %v6670
        %6672 = vdwg.mxu0
        %6673 = vmatpush.bf16.msra.mxu0 %v6057
        %6674 = vmatpush.bf16.msra.mxu0 %v6052
        %6675 = vmatpush.bf16.msra.mxu0 %v6047
        %6676 = vmatpush.bf16.msra.mxu0 %v6042
        %6677 = vmatpush.bf16.msra.mxu0 %v6037
        %6678 = vmatpush.bf16.msra.mxu0 %v6032
        %6679 = vmatpush.bf16.msra.mxu0 %v6027
        %6680 = vmatpush.bf16.msra.mxu0 %v6022
        %6681 = vmatmul.bf16.gmra.mxu0 %v4840
        %v6682 = vpop.f32.mrf.mxu0
        %v6683 = vadd.f32 %v6669, %v6682
        %v6684 = vpop.f32.mrf.mxu0
        %v6685 = vadd.f32 %v6671, %v6684
        %6686 = vdwg.mxu0
        %6687 = vmatpush.bf16.msra.mxu0 %v6097
        %6688 = vmatpush.bf16.msra.mxu0 %v6092
        %6689 = vmatpush.bf16.msra.mxu0 %v6087
        %6690 = vmatpush.bf16.msra.mxu0 %v6082
        %6691 = vmatpush.bf16.msra.mxu0 %v6077
        %6692 = vmatpush.bf16.msra.mxu0 %v6072
        %6693 = vmatpush.bf16.msra.mxu0 %v6067
        %6694 = vmatpush.bf16.msra.mxu0 %v6062
        %6695 = vmatmul.bf16.gmra.mxu0 %v4841
        %v6696 = vpop.f32.mrf.mxu0
        %v6697 = vadd.f32 %v6683, %v6696
        %v6698 = vpop.f32.mrf.mxu0
        %v6699 = vadd.f32 %v6685, %v6698
        %6700 = vdwg.mxu0
        %6701 = vmatpush.bf16.msra.mxu0 %v6137
        %6702 = vmatpush.bf16.msra.mxu0 %v6132
        %6703 = vmatpush.bf16.msra.mxu0 %v6127
        %6704 = vmatpush.bf16.msra.mxu0 %v6122
        %6705 = vmatpush.bf16.msra.mxu0 %v6117
        %6706 = vmatpush.bf16.msra.mxu0 %v6112
        %6707 = vmatpush.bf16.msra.mxu0 %v6107
        %6708 = vmatpush.bf16.msra.mxu0 %v6102
        %6709 = vmatmul.bf16.gmra.mxu0 %v4842
        %v6710 = vpop.f32.mrf.mxu0
        %v6711 = vadd.f32 %v6697, %v6710
        %v6712 = vpop.f32.mrf.mxu0
        %v6713 = vadd.f32 %v6699, %v6712
        %6714 = vdwg.mxu0
        %6715 = vmatpush.bf16.msra.mxu0 %v5938
        %6716 = vmatpush.bf16.msra.mxu0 %v5933
        %6717 = vmatpush.bf16.msra.mxu0 %v5928
        %6718 = vmatpush.bf16.msra.mxu0 %v5923
        %6719 = vmatpush.bf16.msra.mxu0 %v5918
        %6720 = vmatpush.bf16.msra.mxu0 %v5913
        %6721 = vmatpush.bf16.msra.mxu0 %v5908
        %6722 = vmatpush.bf16.msra.mxu0 %v5903
        %6723 = vmatmul.bf16.gmra.mxu0 %v4837
        %v6724 = vpop.f32.mrf.mxu0
        %v6725 = vadd.f32 0.0, %v6724
        %v6726 = vpop.f32.mrf.mxu0
        %v6727 = vadd.f32 0.0, %v6726
        %6728 = vdwg.mxu0
        %6729 = vmatpush.bf16.msra.mxu0 %v5978
        %6730 = vmatpush.bf16.msra.mxu0 %v5973
        %6731 = vmatpush.bf16.msra.mxu0 %v5968
        %6732 = vmatpush.bf16.msra.mxu0 %v5963
        %6733 = vmatpush.bf16.msra.mxu0 %v5958
        %6734 = vmatpush.bf16.msra.mxu0 %v5953
        %6735 = vmatpush.bf16.msra.mxu0 %v5948
        %6736 = vmatpush.bf16.msra.mxu0 %v5943
        %6737 = vmatmul.bf16.gmra.mxu0 %v4838
        %v6738 = vpop.f32.mrf.mxu0
        %v6739 = vadd.f32 %v6725, %v6738
        %v6740 = vpop.f32.mrf.mxu0
        %v6741 = vadd.f32 %v6727, %v6740
        %6742 = vdwg.mxu0
        %6743 = vmatpush.bf16.msra.mxu0 %v6018
        %6744 = vmatpush.bf16.msra.mxu0 %v6013
        %6745 = vmatpush.bf16.msra.mxu0 %v6008
        %6746 = vmatpush.bf16.msra.mxu0 %v6003
        %6747 = vmatpush.bf16.msra.mxu0 %v5998
        %6748 = vmatpush.bf16.msra.mxu0 %v5993
        %6749 = vmatpush.bf16.msra.mxu0 %v5988
        %6750 = vmatpush.bf16.msra.mxu0 %v5983
        %6751 = vmatmul.bf16.gmra.mxu0 %v4839
        %v6752 = vpop.f32.mrf.mxu0
        %v6753 = vadd.f32 %v6739, %v6752
        %v6754 = vpop.f32.mrf.mxu0
        %v6755 = vadd.f32 %v6741, %v6754
        %6756 = vdwg.mxu0
        %6757 = vmatpush.bf16.msra.mxu0 %v6058
        %6758 = vmatpush.bf16.msra.mxu0 %v6053
        %6759 = vmatpush.bf16.msra.mxu0 %v6048
        %6760 = vmatpush.bf16.msra.mxu0 %v6043
        %6761 = vmatpush.bf16.msra.mxu0 %v6038
        %6762 = vmatpush.bf16.msra.mxu0 %v6033
        %6763 = vmatpush.bf16.msra.mxu0 %v6028
        %6764 = vmatpush.bf16.msra.mxu0 %v6023
        %6765 = vmatmul.bf16.gmra.mxu0 %v4840
        %v6766 = vpop.f32.mrf.mxu0
        %v6767 = vadd.f32 %v6753, %v6766
        %v6768 = vpop.f32.mrf.mxu0
        %v6769 = vadd.f32 %v6755, %v6768
        %6770 = vdwg.mxu0
        %6771 = vmatpush.bf16.msra.mxu0 %v6098
        %6772 = vmatpush.bf16.msra.mxu0 %v6093
        %6773 = vmatpush.bf16.msra.mxu0 %v6088
        %6774 = vmatpush.bf16.msra.mxu0 %v6083
        %6775 = vmatpush.bf16.msra.mxu0 %v6078
        %6776 = vmatpush.bf16.msra.mxu0 %v6073
        %6777 = vmatpush.bf16.msra.mxu0 %v6068
        %6778 = vmatpush.bf16.msra.mxu0 %v6063
        %6779 = vmatmul.bf16.gmra.mxu0 %v4841
        %v6780 = vpop.f32.mrf.mxu0
        %v6781 = vadd.f32 %v6767, %v6780
        %v6782 = vpop.f32.mrf.mxu0
        %v6783 = vadd.f32 %v6769, %v6782
        %6784 = vdwg.mxu0
        %6785 = vmatpush.bf16.msra.mxu0 %v6138
        %6786 = vmatpush.bf16.msra.mxu0 %v6133
        %6787 = vmatpush.bf16.msra.mxu0 %v6128
        %6788 = vmatpush.bf16.msra.mxu0 %v6123
        %6789 = vmatpush.bf16.msra.mxu0 %v6118
        %6790 = vmatpush.bf16.msra.mxu0 %v6113
        %6791 = vmatpush.bf16.msra.mxu0 %v6108
        %6792 = vmatpush.bf16.msra.mxu0 %v6103
        %6793 = vmatmul.bf16.gmra.mxu0 %v4842
        %v6794 = vpop.f32.mrf.mxu0
        %v6795 = vadd.f32 %v6781, %v6794
        %v6796 = vpop.f32.mrf.mxu0
        %v6797 = vadd.f32 %v6783, %v6796
        %6798 = vdwg.mxu0
        %v6799 = vadd.f32 %v4827, %v6459
        %v6800 = vadd.f32 %v4828, %v6543
        %v6801 = vadd.f32 %v4829, %v6627
        %v6802 = vadd.f32 %v4830, %v6711
        %v6803 = vadd.f32 %v4831, %v6795
        %v6804 = vadd.f32 %v4832, %v6461
        %v6805 = vadd.f32 %v4833, %v6545
        %v6806 = vadd.f32 %v4834, %v6629
        %v6807 = vadd.f32 %v4835, %v6713
        %v6808 = vadd.f32 %v4836, %v6797
        %6809 = vst [vmem:[#allocation3] sm:$0xff] %v6799
        %6810 = vst [vmem:[#allocation3 + $0x8] sm:$0xff] %v6800
        %6811 = vst [vmem:[#allocation3 + $0x10] sm:$0xff] %v6801
        %6812 = vst [vmem:[#allocation3 + $0x18] sm:$0xff] %v6802
        %6813 = vst.msk [vmem:[#allocation3 + $0x20] sm:$0xff] %vm3731, %v6803
        %6814 = vst [vmem:[#allocation3 + $0x28] sm:$0xff] %v6804
        %6815 = vst [vmem:[#allocation3 + $0x30] sm:$0xff] %v6805
        %6816 = vst [vmem:[#allocation3 + $0x38] sm:$0xff] %v6806
        %6817 = vst [vmem:[#allocation3 + $0x40] sm:$0xff] %v6807
        %6818 = vst.msk [vmem:[#allocation3 + $0x48] sm:$0xff] %vm3731, %v6808
        // Predicated region
        $region60: #{smollm2_mlp_packed.1} parent=50 // pred_check
          %p6819 = pneg %p123
        $region61: #{smollm2_mlp_packed.1} parent=50 // pred_check_branch
          %6821 = sbr.rel (%p6819) target = $region63
        $region62: #{smollm2_mlp_packed.1} parent=50 // pred_region
          %s6822 = smul.u32 2, %s19
          %6824 = vsyncadd [#allocation4], 0
          %s6825 = smul.addr %s6822, 5
          %s6826 = smul.addr %s6825, 8
          %s6827 = scalar_lea.hbm %s3, %s6826
          %s6828 = sshll.u32 [#allocation3], 4
          %s6829 = int_to_ptr.vmem [resolvable:$true] %s6828
          %s6830 = sshll.u32 %s6827, 4
          %s6831 = int_to_ptr.hbm [resolvable:$true] %s6830
          %6836 = dma.vmem_to_hbm [thread:$0]  %s6829, 1280, %s6831, [#allocation4], 640, 640, 40
        $region63: #{smollm2_mlp_packed.1} parent=50 // pred_fallthru
          _
        // Predicated region
        $region64: #{smollm2_mlp_packed.1} parent=50 // pred_check
          %p6837 = pneg %p123
        $region65: #{smollm2_mlp_packed.1} parent=50 // pred_check_branch
          %6839 = sbr.rel (%p6837) target = $region67
        $region66: #{smollm2_mlp_packed.1} parent=50 // pred_region
          %6841 = dma.done [#allocation4], 1280
        $region67: #{smollm2_mlp_packed.1} parent=50 // pred_fallthru
          _
      $region51: #{smollm2_mlp_packed.1} parent=5 // pred_fallthru
        _
      %p6842 = scmp.le.s32.totalorder 2, %s10
      // Predicated region
      $region68: #{smollm2_mlp_packed.1} parent=5 // pred_check
        %p6843 = pneg %p6842
      $region69: #{smollm2_mlp_packed.1} parent=5 // pred_check_branch
        %6845 = sbr.rel (%p6843) target = $region71
      $region70: #{smollm2_mlp_packed.1} parent=5 // pred_region
        %s6846 = ssub.s32 %s10, 2
      $region71: #{smollm2_mlp_packed.1} parent=5 // pred_fallthru
        _
    $region6: #{smollm2_mlp_packed.1} parent=1 // loop_footer
      %s14 = sadd.s32 1, %s10
    $region7: #{smollm2_mlp_packed.1} parent=1 // loop_footer_branch
      %9 = sbr.rel target = $region3
    $region8: #{smollm2_mlp_packed.1} parent=1 // loop_exit
      _
    %6847 = vsyncpa [#allocation4], 1
    %s6848 = scalar_lea.sflag [#allocation4], 1
    %6849 = vsyncpa %s6848, 1

</llo_original>
